<compile_context>
chip_gen: v6e
topology: v6e:2x2x1
jax: 0.10.0
libtpu: 0.0.40
codegen_flags: <defaults>
</compile_context>

<pallas_src>
import jax
import jax.numpy as jnp
from jax.experimental import pallas as pl
from jax.experimental.pallas import tpu as pltpu


def _round_up(x, m):
    return (x + m - 1) // m * m


# ----------------------------------------------------------------------------
# Fused kernel: conv1+ReLU -> conv2+ReLU -> permute+adaptive-pool
# One grid step processes one batch element entirely in VMEM.
# ----------------------------------------------------------------------------
def _make_fused_kernel(H, W, Cin_p, C1, C2, feature_index):
    HW = H * W
    offs = [(kh - 1, kw - 1) for kh in range(3) for kw in range(3)]

    def build_slab(src, Cp, slab_ref, mask_ref):
        # src: (Cp, HW).  Each tap = lane-roll of the flat spatial axis (XLU)
        # + border mask (VPU); stored as an 8-aligned dense row slab.
        for t, (dh, dw) in enumerate(offs):
            shift = dh * W + dw
            if shift == 0:
                piece = src
            else:
                piece = pltpu.roll(src, (-shift) % HW, axis=1)
                piece = piece * mask_ref[t]          # (1, HW) border mask
            slab_ref[t * Cp:(t + 1) * Cp, :] = piece

    def conv(w_ref, b_ref, slab_ref):
        # (C_out, K) @ (K, HW): one MXU dot per conv, f32 accumulation,
        # bias + ReLU on the VPU, result lane-dense over H*W.
        y = jnp.dot(w_ref[...], slab_ref[...],
                    preferred_element_type=jnp.float32)
        return jnp.maximum(y + b_ref[...], 0.0)

    def epilogue(feat, r_ref, pm_ref, o_ref):
        # permute(0,3,1,2) + AdaptiveAvgPool2d((S,1)) + squeeze(3):
        #   g[c, w] = sum_h feat[c, h*W + w]            (matmul with R)
        #   o[s, w] = sum_{c in bin(s)} g[c, w]/(bin*H) (matmul with Pm)
        g = jnp.dot(feat, r_ref[...], preferred_element_type=jnp.float32)
        o_ref[...] = jnp.dot(pm_ref[...], g,
                             preferred_element_type=jnp.float32
                             ).astype(o_ref.dtype)

    if feature_index == 0:
        def kernel(x_ref, w1_ref, b1_ref, mask_ref, pm_ref, r_ref,
                   o_ref, slab1_ref):
            build_slab(x_ref[...], Cin_p, slab1_ref, mask_ref)
            f1 = conv(w1_ref, b1_ref, slab1_ref)
            epilogue(f1, r_ref, pm_ref, o_ref)
    else:
        def kernel(x_ref, w1_ref, b1_ref, w2_ref, b2_ref, mask_ref, pm_ref,
                   r_ref, o_ref, slab1_ref, slab2_ref):
            build_slab(x_ref[...], Cin_p, slab1_ref, mask_ref)
            f1 = conv(w1_ref, b1_ref, slab1_ref)
            build_slab(f1, C1, slab2_ref, mask_ref)
            f2 = conv(w2_ref, b2_ref, slab2_ref)
            epilogue(f2, r_ref, pm_ref, o_ref)

    return kernel


# ----------------------------------------------------------------------------
# Module wrapper
# ----------------------------------------------------------------------------
class TextRecognitionBackbonePallas:
    def __init__(self, feature_index, output_size, key):
        self.feature_index = feature_index
        self.output_size = output_size
        k1, k2, k3, k4 = jax.random.split(key, 4)
        # synthetic backbone params (deterministic), HWIO layout, stride-1 convs
        self.w1 = jax.random.normal(k1, (3, 3, 3, 16), jnp.float32) * 0.1
        self.b1 = jax.random.normal(k2, (16,), jnp.float32) * 0.1
        self.w2 = jax.random.normal(k3, (3, 3, 16, 32), jnp.float32) * 0.1
        self.b2 = jax.random.normal(k4, (32,), jnp.float32) * 0.1

    def __call__(self, x_nchw):
        B, Cin, H, W = x_nchw.shape
        HW = H * W
        C1, C2 = self.w1.shape[-1], self.w2.shape[-1]
        S = self.output_size
        Cf = C1 if self.feature_index == 0 else C2
        # TODO(synk): PyTorch AdaptiveAvgPool2d supports uneven bins; only the
        # evenly-divisible case is implemented here.
        assert Cf % S == 0, "output_size must divide feature channel count"
        bin_sz = Cf // S

        # channel-on-sublane, flat-spatial-on-lane layout; pad Cin to mult of 8
        Cin_p = _round_up(Cin, 8)
        x_flat = jnp.pad(x_nchw.astype(jnp.float32),
                         ((0, 0), (0, Cin_p - Cin), (0, 0), (0, 0))
                         ).reshape(B, Cin_p, HW)

        # pre-transposed, 8-aligned weight slabs / column biases
        w1t = jnp.transpose(
            jnp.pad(self.w1, ((0, 0), (0, 0), (0, Cin_p - Cin), (0, 0))
                    ).reshape(9 * Cin_p, C1))                  # (C1, 9*Cin_p)
        b1c = self.b1.reshape(C1, 1)
        w2t = jnp.transpose(self.w2.reshape(9 * C1, C2))       # (C2, 9*C1)
        b2c = self.b2.reshape(C2, 1)

        # per-tap border masks: zero the lane-roll wrap-around, (9, 1, HW)
        p = jnp.arange(HW, dtype=jnp.int32)
        hh, ww = p // W, p % W
        rows = []
        for kh in range(3):
            for kw in range(3):
                dh, dw = kh - 1, kw - 1
                rows.append(((hh + dh >= 0) & (hh + dh < H) &
                             (ww + dw >= 0) & (ww + dw < W)
                             ).astype(jnp.float32))
        tapmask = jnp.stack(rows)[:, None, :]                  # (9, 1, HW)

        # pooling matrices: R sums over h, Pm averages channel bins (÷ bin*H)
        r_mat = jnp.tile(jnp.eye(W, dtype=jnp.float32), (H, 1))      # (HW, W)
        pm = jnp.repeat(jnp.eye(S, dtype=jnp.float32), bin_sz,
                        axis=1) / float(bin_sz * H)                  # (S, Cf)

        kernel = _make_fused_kernel(H, W, Cin_p, C1, C2, self.feature_index)

        in_specs = [
            pl.BlockSpec((None, Cin_p, HW), lambda b: (b, 0, 0)),    # x
            pl.BlockSpec((C1, 9 * Cin_p), lambda b: (0, 0)),         # w1t
            pl.BlockSpec((C1, 1), lambda b: (0, 0)),                 # b1
        ]
        inputs = [x_flat, w1t, b1c]
        scratch = [pltpu.VMEM((9 * Cin_p, HW), jnp.float32)]         # slab1
        if self.feature_index != 0:
            in_specs += [pl.BlockSpec((C2, 9 * C1), lambda b: (0, 0)),   # w2t
                         pl.BlockSpec((C2, 1), lambda b: (0, 0))]        # b2
            inputs += [w2t, b2c]
            scratch += [pltpu.VMEM((9 * C1, HW), jnp.float32)]       # slab2
        in_specs += [
            pl.BlockSpec((9, 1, HW), lambda b: (0, 0, 0)),           # tap masks
            pl.BlockSpec((S, Cf), lambda b: (0, 0)),                 # bin matrix
            pl.BlockSpec((HW, W), lambda b: (0, 0)),                 # h-sum matrix
        ]
        inputs += [tapmask, pm, r_mat]

        out_sw = pl.pallas_call(
            kernel,
            out_shape=jax.ShapeDtypeStruct((B, S, W), jnp.float32),
            grid_spec=pltpu.PrefetchScalarGridSpec(
                num_scalar_prefetch=0,
                grid=(B,),
                in_specs=in_specs,
                out_specs=pl.BlockSpec((None, S, W), lambda b: (b, 0, 0)),
                scratch_shapes=scratch,
            ),
            compiler_params=pltpu.CompilerParams(
                dimension_semantics=("parallel",),
                vmem_limit_bytes=32 * 1024 * 1024),
        )(*inputs)

        # kernel emits lane-dense (B, S, W); module contract is (B, W, S)
        return jnp.transpose(out_sw, (0, 2, 1))


# ----------------------------------------------------------------------------
# Pure-JAX reference mimicking the PyTorch forward (sanity check)
# ----------------------------------------------------------------------------
def reference_forward(model, x_nchw):
    x = jnp.transpose(x_nchw, (0, 2, 3, 1))

    def conv(xx, w, b):
        y = jax.lax.conv_general_dilated(
            xx, w, window_strides=(1, 1), padding=((1, 1), (1, 1)),
            dimension_numbers=("NHWC", "HWIO", "NHWC"))
        return jnp.maximum(y + b, 0.0)

    f1 = conv(x, model.w1, model.b1)
    f2 = conv(f1, model.w2, model.b2)
    f_nhwc = [f1, f2][model.feature_index]
    g = jnp.transpose(f_nhwc, (0, 2, 3, 1))                  # (B, W, C, H)
    B, W, C, H = g.shape
    S = model.output_size
    g = g.reshape(B, W, S, C // S, H)
    return g.mean(axis=(3, 4))                               # (B, W, S)


if __name__ == "__main__":
    key = jax.random.PRNGKey(0)
    kp, kx = jax.random.split(key)
    model = TextRecognitionBackbonePallas(feature_index=1, output_size=8,
                                          key=kp)

    x = jax.random.normal(kx, (2, 3, 32, 32), jnp.float32)   # NCHW input
    out = jax.block_until_ready(model(x))                    # (2, 32, 8)

    ref = jax.block_until_ready(reference_forward(model, x))
    assert out.shape == ref.shape == (2, 32, 8)
    assert jnp.allclose(out, ref, rtol=1e-2, atol=1e-2)
    print("KERNEL_OK")
</pallas_src>

<mosaic_0001>
module attributes {stable_mosaic.version = 11 : i64} {
  func.func @kernel(%arg0: i32, %arg1: memref<1x8x1024xf32, #tpu.memory_space<vmem>>, %arg2: memref<16x72xf32, #tpu.memory_space<vmem>>, %arg3: memref<16x1xf32, #tpu.memory_space<vmem>>, %arg4: memref<32x144xf32, #tpu.memory_space<vmem>>, %arg5: memref<32x1xf32, #tpu.memory_space<vmem>>, %arg6: memref<9x1x1024xf32, #tpu.memory_space<vmem>>, %arg7: memref<8x32xf32, #tpu.memory_space<vmem>>, %arg8: memref<1024x32xf32, #tpu.memory_space<vmem>>, %arg9: memref<1x8x32xf32, #tpu.memory_space<vmem>>, %arg10: memref<72x1024xf32, #tpu.memory_space<vmem>>, %arg11: memref<144x1024xf32, #tpu.memory_space<vmem>>) attributes {dimension_semantics = [#tpu.dimension_semantics<parallel>], iteration_bounds = array<i64: 2>, scalar_prefetch = 0 : i64, scratch_operands = 2 : i64, tpu.core_type = #tpu.core_type<tc>, window_params = [{transform_indices = @transform_0, window_bounds = array<i64: 1, 8, 1024>}, {pipeline_mode = #tpu.pipeline_mode<synchronous>, transform_indices = @transform_1, window_bounds = array<i64: 16, 72>}, {pipeline_mode = #tpu.pipeline_mode<synchronous>, transform_indices = @transform_2, window_bounds = array<i64: 16, 1>}, {pipeline_mode = #tpu.pipeline_mode<synchronous>, transform_indices = @transform_3, window_bounds = array<i64: 32, 144>}, {pipeline_mode = #tpu.pipeline_mode<synchronous>, transform_indices = @transform_4, window_bounds = array<i64: 32, 1>}, {pipeline_mode = #tpu.pipeline_mode<synchronous>, transform_indices = @transform_5, window_bounds = array<i64: 9, 1, 1024>}, {pipeline_mode = #tpu.pipeline_mode<synchronous>, transform_indices = @transform_6, window_bounds = array<i64: 8, 32>}, {pipeline_mode = #tpu.pipeline_mode<synchronous>, transform_indices = @transform_7, window_bounds = array<i64: 1024, 32>}, {transform_indices = @transform_8, window_bounds = array<i64: 1, 8, 32>}]} {
    %c0 = arith.constant 0 : index
    %c0_0 = arith.constant 0 : index
    %c0_1 = arith.constant 0 : index
    %0 = vector.load %arg1[%c0, %c0_0, %c0_1] : memref<1x8x1024xf32, #tpu.memory_space<vmem>>, vector<1x8x1024xf32>
    %1 = vector.shape_cast %0 : vector<1x8x1024xf32> to vector<8x1024xf32>
    %c33_i32 = arith.constant 33 : i32
    %2 = tpu.dynamic_rotate %1 by %c33_i32 dim 1 : vector<8x1024xf32>, i32 -> vector<8x1024xf32>
    %c0_2 = arith.constant 0 : index
    %c0_3 = arith.constant 0 : index
    %c0_4 = arith.constant 0 : index
    %3 = vector.load %arg6[%c0_2, %c0_3, %c0_4] : memref<9x1x1024xf32, #tpu.memory_space<vmem>>, vector<1x1x1024xf32>
    %4 = vector.shape_cast %3 : vector<1x1x1024xf32> to vector<1x1024xf32>
    %5 = vector.broadcast %4 : vector<1x1024xf32> to vector<8x1024xf32>
    %6 = arith.mulf %2, %5 : vector<8x1024xf32>
    %c0_5 = arith.constant 0 : index
    %c0_6 = arith.constant 0 : index
    %7 = vector.load %arg10[%c0_5, %c0_6] : memref<72x1024xf32, #tpu.memory_space<vmem>>, vector<8x1024xf32>
    tpu.vector_store %arg10[%c0_5, %c0_6], %6 {strides = array<i32>} : memref<72x1024xf32, #tpu.memory_space<vmem>>, vector<8x1024xf32>,
    %c32_i32 = arith.constant 32 : i32
    %8 = tpu.dynamic_rotate %1 by %c32_i32 dim 1 : vector<8x1024xf32>, i32 -> vector<8x1024xf32>
    %c1 = arith.constant 1 : index
    %c0_7 = arith.constant 0 : index
    %c0_8 = arith.constant 0 : index
    %9 = vector.load %arg6[%c1, %c0_7, %c0_8] : memref<9x1x1024xf32, #tpu.memory_space<vmem>>, vector<1x1x1024xf32>
    %10 = vector.shape_cast %9 : vector<1x1x1024xf32> to vector<1x1024xf32>
    %11 = vector.broadcast %10 : vector<1x1024xf32> to vector<8x1024xf32>
    %12 = arith.mulf %8, %11 : vector<8x1024xf32>
    %c8 = arith.constant 8 : index
    %c0_9 = arith.constant 0 : index
    %13 = vector.load %arg10[%c8, %c0_9] : memref<72x1024xf32, #tpu.memory_space<vmem>>, vector<8x1024xf32>
    tpu.vector_store %arg10[%c8, %c0_9], %12 {strides = array<i32>} : memref<72x1024xf32, #tpu.memory_space<vmem>>, vector<8x1024xf32>,
    %c31_i32 = arith.constant 31 : i32
    %14 = tpu.dynamic_rotate %1 by %c31_i32 dim 1 : vector<8x1024xf32>, i32 -> vector<8x1024xf32>
    %c2 = arith.constant 2 : index
    %c0_10 = arith.constant 0 : index
    %c0_11 = arith.constant 0 : index
    %15 = vector.load %arg6[%c2, %c0_10, %c0_11] : memref<9x1x1024xf32, #tpu.memory_space<vmem>>, vector<1x1x1024xf32>
    %16 = vector.shape_cast %15 : vector<1x1x1024xf32> to vector<1x1024xf32>
    %17 = vector.broadcast %16 : vector<1x1024xf32> to vector<8x1024xf32>
    %18 = arith.mulf %14, %17 : vector<8x1024xf32>
    %c16 = arith.constant 16 : index
    %c0_12 = arith.constant 0 : index
    %19 = vector.load %arg10[%c16, %c0_12] : memref<72x1024xf32, #tpu.memory_space<vmem>>, vector<8x1024xf32>
    tpu.vector_store %arg10[%c16, %c0_12], %18 {strides = array<i32>} : memref<72x1024xf32, #tpu.memory_space<vmem>>, vector<8x1024xf32>,
    %c1_i32 = arith.constant 1 : i32
    %20 = tpu.dynamic_rotate %1 by %c1_i32 dim 1 : vector<8x1024xf32>, i32 -> vector<8x1024xf32>
    %c3 = arith.constant 3 : index
    %c0_13 = arith.constant 0 : index
    %c0_14 = arith.constant 0 : index
    %21 = vector.load %arg6[%c3, %c0_13, %c0_14] : memref<9x1x1024xf32, #tpu.memory_space<vmem>>, vector<1x1x1024xf32>
    %22 = vector.shape_cast %21 : vector<1x1x1024xf32> to vector<1x1024xf32>
    %23 = vector.broadcast %22 : vector<1x1024xf32> to vector<8x1024xf32>
    %24 = arith.mulf %20, %23 : vector<8x1024xf32>
    %c24 = arith.constant 24 : index
    %c0_15 = arith.constant 0 : index
    %25 = vector.load %arg10[%c24, %c0_15] : memref<72x1024xf32, #tpu.memory_space<vmem>>, vector<8x1024xf32>
    tpu.vector_store %arg10[%c24, %c0_15], %24 {strides = array<i32>} : memref<72x1024xf32, #tpu.memory_space<vmem>>, vector<8x1024xf32>,
    %c32 = arith.constant 32 : index
    %c0_16 = arith.constant 0 : index
    %26 = vector.load %arg10[%c32, %c0_16] : memref<72x1024xf32, #tpu.memory_space<vmem>>, vector<8x1024xf32>
    tpu.vector_store %arg10[%c32, %c0_16], %1 {strides = array<i32>} : memref<72x1024xf32, #tpu.memory_space<vmem>>, vector<8x1024xf32>,
    %c1023_i32 = arith.constant 1023 : i32
    %27 = tpu.dynamic_rotate %1 by %c1023_i32 dim 1 : vector<8x1024xf32>, i32 -> vector<8x1024xf32>
    %c5 = arith.constant 5 : index
    %c0_17 = arith.constant 0 : index
    %c0_18 = arith.constant 0 : index
    %28 = vector.load %arg6[%c5, %c0_17, %c0_18] : memref<9x1x1024xf32, #tpu.memory_space<vmem>>, vector<1x1x1024xf32>
    %29 = vector.shape_cast %28 : vector<1x1x1024xf32> to vector<1x1024xf32>
    %30 = vector.broadcast %29 : vector<1x1024xf32> to vector<8x1024xf32>
    %31 = arith.mulf %27, %30 : vector<8x1024xf32>
    %c40 = arith.constant 40 : index
    %c0_19 = arith.constant 0 : index
    %32 = vector.load %arg10[%c40, %c0_19] : memref<72x1024xf32, #tpu.memory_space<vmem>>, vector<8x1024xf32>
    tpu.vector_store %arg10[%c40, %c0_19], %31 {strides = array<i32>} : memref<72x1024xf32, #tpu.memory_space<vmem>>, vector<8x1024xf32>,
    %c993_i32 = arith.constant 993 : i32
    %33 = tpu.dynamic_rotate %1 by %c993_i32 dim 1 : vector<8x1024xf32>, i32 -> vector<8x1024xf32>
    %c6 = arith.constant 6 : index
    %c0_20 = arith.constant 0 : index
    %c0_21 = arith.constant 0 : index
    %34 = vector.load %arg6[%c6, %c0_20, %c0_21] : memref<9x1x1024xf32, #tpu.memory_space<vmem>>, vector<1x1x1024xf32>
    %35 = vector.shape_cast %34 : vector<1x1x1024xf32> to vector<1x1024xf32>
    %36 = vector.broadcast %35 : vector<1x1024xf32> to vector<8x1024xf32>
    %37 = arith.mulf %33, %36 : vector<8x1024xf32>
    %c48 = arith.constant 48 : index
    %c0_22 = arith.constant 0 : index
    %38 = vector.load %arg10[%c48, %c0_22] : memref<72x1024xf32, #tpu.memory_space<vmem>>, vector<8x1024xf32>
    tpu.vector_store %arg10[%c48, %c0_22], %37 {strides = array<i32>} : memref<72x1024xf32, #tpu.memory_space<vmem>>, vector<8x1024xf32>,
    %c992_i32 = arith.constant 992 : i32
    %39 = tpu.dynamic_rotate %1 by %c992_i32 dim 1 : vector<8x1024xf32>, i32 -> vector<8x1024xf32>
    %c7 = arith.constant 7 : index
    %c0_23 = arith.constant 0 : index
    %c0_24 = arith.constant 0 : index
    %40 = vector.load %arg6[%c7, %c0_23, %c0_24] : memref<9x1x1024xf32, #tpu.memory_space<vmem>>, vector<1x1x1024xf32>
    %41 = vector.shape_cast %40 : vector<1x1x1024xf32> to vector<1x1024xf32>
    %42 = vector.broadcast %41 : vector<1x1024xf32> to vector<8x1024xf32>
    %43 = arith.mulf %39, %42 : vector<8x1024xf32>
    %c56 = arith.constant 56 : index
    %c0_25 = arith.constant 0 : index
    %44 = vector.load %arg10[%c56, %c0_25] : memref<72x1024xf32, #tpu.memory_space<vmem>>, vector<8x1024xf32>
    tpu.vector_store %arg10[%c56, %c0_25], %43 {strides = array<i32>} : memref<72x1024xf32, #tpu.memory_space<vmem>>, vector<8x1024xf32>,
    %c991_i32 = arith.constant 991 : i32
    %45 = tpu.dynamic_rotate %1 by %c991_i32 dim 1 : vector<8x1024xf32>, i32 -> vector<8x1024xf32>
    %c8_26 = arith.constant 8 : index
    %c0_27 = arith.constant 0 : index
    %c0_28 = arith.constant 0 : index
    %46 = vector.load %arg6[%c8_26, %c0_27, %c0_28] : memref<9x1x1024xf32, #tpu.memory_space<vmem>>, vector<1x1x1024xf32>
    %47 = vector.shape_cast %46 : vector<1x1x1024xf32> to vector<1x1024xf32>
    %48 = vector.broadcast %47 : vector<1x1024xf32> to vector<8x1024xf32>
    %49 = arith.mulf %45, %48 : vector<8x1024xf32>
    %c64 = arith.constant 64 : index
    %c0_29 = arith.constant 0 : index
    %50 = vector.load %arg10[%c64, %c0_29] : memref<72x1024xf32, #tpu.memory_space<vmem>>, vector<8x1024xf32>
    tpu.vector_store %arg10[%c64, %c0_29], %49 {strides = array<i32>} : memref<72x1024xf32, #tpu.memory_space<vmem>>, vector<8x1024xf32>,
    %c0_30 = arith.constant 0 : index
    %c0_31 = arith.constant 0 : index
    %51 = vector.load %arg2[%c0_30, %c0_31] : memref<16x72xf32, #tpu.memory_space<vmem>>, vector<16x72xf32>
    %c0_32 = arith.constant 0 : index
    %c0_33 = arith.constant 0 : index
    %52 = vector.load %arg10[%c0_32, %c0_33] : memref<72x1024xf32, #tpu.memory_space<vmem>>, vector<72x1024xf32>
    %cst = arith.constant dense<0.000000e+00> : vector<16x1024xf32>
    %53 = tpu.matmul %51, %52, %cst {dimension_numbers = #tpu.dot_dimension_numbers<[1], [0], [0], [1], [0, 0, 1, 1], [], []>} : vector<16x72xf32>, vector<72x1024xf32>, vector<16x1024xf32> -> vector<16x1024xf32>
    %c0_34 = arith.constant 0 : index
    %c0_35 = arith.constant 0 : index
    %54 = vector.load %arg3[%c0_34, %c0_35] : memref<16x1xf32, #tpu.memory_space<vmem>>, vector<16x1xf32>
    %55 = vector.broadcast %54 : vector<16x1xf32> to vector<16x1024xf32>
    %56 = arith.addf %53, %55 : vector<16x1024xf32>
    %cst_36 = arith.constant 0.000000e+00 : f32
    %57 = vector.broadcast %cst_36 : f32 to vector<16x1024xf32>
    %58 = arith.maximumf %56, %57 : vector<16x1024xf32>
    %c33_i32_37 = arith.constant 33 : i32
    %59 = tpu.dynamic_rotate %58 by %c33_i32_37 dim 1 : vector<16x1024xf32>, i32 -> vector<16x1024xf32>
    %c0_38 = arith.constant 0 : index
    %c0_39 = arith.constant 0 : index
    %c0_40 = arith.constant 0 : index
    %60 = vector.load %arg6[%c0_38, %c0_39, %c0_40] : memref<9x1x1024xf32, #tpu.memory_space<vmem>>, vector<1x1x1024xf32>
    %61 = vector.shape_cast %60 : vector<1x1x1024xf32> to vector<1x1024xf32>
    %62 = vector.broadcast %61 : vector<1x1024xf32> to vector<16x1024xf32>
    %63 = arith.mulf %59, %62 : vector<16x1024xf32>
    %c0_41 = arith.constant 0 : index
    %c0_42 = arith.constant 0 : index
    %64 = vector.load %arg11[%c0_41, %c0_42] : memref<144x1024xf32, #tpu.memory_space<vmem>>, vector<16x1024xf32>
    tpu.vector_store %arg11[%c0_41, %c0_42], %63 {strides = array<i32>} : memref<144x1024xf32, #tpu.memory_space<vmem>>, vector<16x1024xf32>,
    %c32_i32_43 = arith.constant 32 : i32
    %65 = tpu.dynamic_rotate %58 by %c32_i32_43 dim 1 : vector<16x1024xf32>, i32 -> vector<16x1024xf32>
    %c1_44 = arith.constant 1 : index
    %c0_45 = arith.constant 0 : index
    %c0_46 = arith.constant 0 : index
    %66 = vector.load %arg6[%c1_44, %c0_45, %c0_46] : memref<9x1x1024xf32, #tpu.memory_space<vmem>>, vector<1x1x1024xf32>
    %67 = vector.shape_cast %66 : vector<1x1x1024xf32> to vector<1x1024xf32>
    %68 = vector.broadcast %67 : vector<1x1024xf32> to vector<16x1024xf32>
    %69 = arith.mulf %65, %68 : vector<16x1024xf32>
    %c16_47 = arith.constant 16 : index
    %c0_48 = arith.constant 0 : index
    %70 = vector.load %arg11[%c16_47, %c0_48] : memref<144x1024xf32, #tpu.memory_space<vmem>>, vector<16x1024xf32>
    tpu.vector_store %arg11[%c16_47, %c0_48], %69 {strides = array<i32>} : memref<144x1024xf32, #tpu.memory_space<vmem>>, vector<16x1024xf32>,
    %c31_i32_49 = arith.constant 31 : i32
    %71 = tpu.dynamic_rotate %58 by %c31_i32_49 dim 1 : vector<16x1024xf32>, i32 -> vector<16x1024xf32>
    %c2_50 = arith.constant 2 : index
    %c0_51 = arith.constant 0 : index
    %c0_52 = arith.constant 0 : index
    %72 = vector.load %arg6[%c2_50, %c0_51, %c0_52] : memref<9x1x1024xf32, #tpu.memory_space<vmem>>, vector<1x1x1024xf32>
    %73 = vector.shape_cast %72 : vector<1x1x1024xf32> to vector<1x1024xf32>
    %74 = vector.broadcast %73 : vector<1x1024xf32> to vector<16x1024xf32>
    %75 = arith.mulf %71, %74 : vector<16x1024xf32>
    %c32_53 = arith.constant 32 : index
    %c0_54 = arith.constant 0 : index
    %76 = vector.load %arg11[%c32_53, %c0_54] : memref<144x1024xf32, #tpu.memory_space<vmem>>, vector<16x1024xf32>
    tpu.vector_store %arg11[%c32_53, %c0_54], %75 {strides = array<i32>} : memref<144x1024xf32, #tpu.memory_space<vmem>>, vector<16x1024xf32>,
    %c1_i32_55 = arith.constant 1 : i32
    %77 = tpu.dynamic_rotate %58 by %c1_i32_55 dim 1 : vector<16x1024xf32>, i32 -> vector<16x1024xf32>
    %c3_56 = arith.constant 3 : index
    %c0_57 = arith.constant 0 : index
    %c0_58 = arith.constant 0 : index
    %78 = vector.load %arg6[%c3_56, %c0_57, %c0_58] : memref<9x1x1024xf32, #tpu.memory_space<vmem>>, vector<1x1x1024xf32>
    %79 = vector.shape_cast %78 : vector<1x1x1024xf32> to vector<1x1024xf32>
    %80 = vector.broadcast %79 : vector<1x1024xf32> to vector<16x1024xf32>
    %81 = arith.mulf %77, %80 : vector<16x1024xf32>
    %c48_59 = arith.constant 48 : index
    %c0_60 = arith.constant 0 : index
    %82 = vector.load %arg11[%c48_59, %c0_60] : memref<144x1024xf32, #tpu.memory_space<vmem>>, vector<16x1024xf32>
    tpu.vector_store %arg11[%c48_59, %c0_60], %81 {strides = array<i32>} : memref<144x1024xf32, #tpu.memory_space<vmem>>, vector<16x1024xf32>,
    %c64_61 = arith.constant 64 : index
    %c0_62 = arith.constant 0 : index
    %83 = vector.load %arg11[%c64_61, %c0_62] : memref<144x1024xf32, #tpu.memory_space<vmem>>, vector<16x1024xf32>
    tpu.vector_store %arg11[%c64_61, %c0_62], %58 {strides = array<i32>} : memref<144x1024xf32, #tpu.memory_space<vmem>>, vector<16x1024xf32>,
    %c1023_i32_63 = arith.constant 1023 : i32
    %84 = tpu.dynamic_rotate %58 by %c1023_i32_63 dim 1 : vector<16x1024xf32>, i32 -> vector<16x1024xf32>
    %c5_64 = arith.constant 5 : index
    %c0_65 = arith.constant 0 : index
    %c0_66 = arith.constant 0 : index
    %85 = vector.load %arg6[%c5_64, %c0_65, %c0_66] : memref<9x1x1024xf32, #tpu.memory_space<vmem>>, vector<1x1x1024xf32>
    %86 = vector.shape_cast %85 : vector<1x1x1024xf32> to vector<1x1024xf32>
    %87 = vector.broadcast %86 : vector<1x1024xf32> to vector<16x1024xf32>
    %88 = arith.mulf %84, %87 : vector<16x1024xf32>
    %c80 = arith.constant 80 : index
    %c0_67 = arith.constant 0 : index
    %89 = vector.load %arg11[%c80, %c0_67] : memref<144x1024xf32, #tpu.memory_space<vmem>>, vector<16x1024xf32>
    tpu.vector_store %arg11[%c80, %c0_67], %88 {strides = array<i32>} : memref<144x1024xf32, #tpu.memory_space<vmem>>, vector<16x1024xf32>,
    %c993_i32_68 = arith.constant 993 : i32
    %90 = tpu.dynamic_rotate %58 by %c993_i32_68 dim 1 : vector<16x1024xf32>, i32 -> vector<16x1024xf32>
    %c6_69 = arith.constant 6 : index
    %c0_70 = arith.constant 0 : index
    %c0_71 = arith.constant 0 : index
    %91 = vector.load %arg6[%c6_69, %c0_70, %c0_71] : memref<9x1x1024xf32, #tpu.memory_space<vmem>>, vector<1x1x1024xf32>
    %92 = vector.shape_cast %91 : vector<1x1x1024xf32> to vector<1x1024xf32>
    %93 = vector.broadcast %92 : vector<1x1024xf32> to vector<16x1024xf32>
    %94 = arith.mulf %90, %93 : vector<16x1024xf32>
    %c96 = arith.constant 96 : index
    %c0_72 = arith.constant 0 : index
    %95 = vector.load %arg11[%c96, %c0_72] : memref<144x1024xf32, #tpu.memory_space<vmem>>, vector<16x1024xf32>
    tpu.vector_store %arg11[%c96, %c0_72], %94 {strides = array<i32>} : memref<144x1024xf32, #tpu.memory_space<vmem>>, vector<16x1024xf32>,
    %c992_i32_73 = arith.constant 992 : i32
    %96 = tpu.dynamic_rotate %58 by %c992_i32_73 dim 1 : vector<16x1024xf32>, i32 -> vector<16x1024xf32>
    %c7_74 = arith.constant 7 : index
    %c0_75 = arith.constant 0 : index
    %c0_76 = arith.constant 0 : index
    %97 = vector.load %arg6[%c7_74, %c0_75, %c0_76] : memref<9x1x1024xf32, #tpu.memory_space<vmem>>, vector<1x1x1024xf32>
    %98 = vector.shape_cast %97 : vector<1x1x1024xf32> to vector<1x1024xf32>
    %99 = vector.broadcast %98 : vector<1x1024xf32> to vector<16x1024xf32>
    %100 = arith.mulf %96, %99 : vector<16x1024xf32>
    %c112 = arith.constant 112 : index
    %c0_77 = arith.constant 0 : index
    %101 = vector.load %arg11[%c112, %c0_77] : memref<144x1024xf32, #tpu.memory_space<vmem>>, vector<16x1024xf32>
    tpu.vector_store %arg11[%c112, %c0_77], %100 {strides = array<i32>} : memref<144x1024xf32, #tpu.memory_space<vmem>>, vector<16x1024xf32>,
    %c991_i32_78 = arith.constant 991 : i32
    %102 = tpu.dynamic_rotate %58 by %c991_i32_78 dim 1 : vector<16x1024xf32>, i32 -> vector<16x1024xf32>
    %c8_79 = arith.constant 8 : index
    %c0_80 = arith.constant 0 : index
    %c0_81 = arith.constant 0 : index
    %103 = vector.load %arg6[%c8_79, %c0_80, %c0_81] : memref<9x1x1024xf32, #tpu.memory_space<vmem>>, vector<1x1x1024xf32>
    %104 = vector.shape_cast %103 : vector<1x1x1024xf32> to vector<1x1024xf32>
    %105 = vector.broadcast %104 : vector<1x1024xf32> to vector<16x1024xf32>
    %106 = arith.mulf %102, %105 : vector<16x1024xf32>
    %c128 = arith.constant 128 : index
    %c0_82 = arith.constant 0 : index
    %107 = vector.load %arg11[%c128, %c0_82] : memref<144x1024xf32, #tpu.memory_space<vmem>>, vector<16x1024xf32>
    tpu.vector_store %arg11[%c128, %c0_82], %106 {strides = array<i32>} : memref<144x1024xf32, #tpu.memory_space<vmem>>, vector<16x1024xf32>,
    %c0_83 = arith.constant 0 : index
    %c0_84 = arith.constant 0 : index
    %108 = vector.load %arg4[%c0_83, %c0_84] : memref<32x144xf32, #tpu.memory_space<vmem>>, vector<32x144xf32>
    %c0_85 = arith.constant 0 : index
    %c0_86 = arith.constant 0 : index
    %109 = vector.load %arg11[%c0_85, %c0_86] : memref<144x1024xf32, #tpu.memory_space<vmem>>, vector<144x1024xf32>
    %cst_87 = arith.constant dense<0.000000e+00> : vector<32x1024xf32>
    %110 = tpu.matmul %108, %109, %cst_87 {dimension_numbers = #tpu.dot_dimension_numbers<[1], [0], [0], [1], [0, 0, 1, 1], [], []>} : vector<32x144xf32>, vector<144x1024xf32>, vector<32x1024xf32> -> vector<32x1024xf32>
    %c0_88 = arith.constant 0 : index
    %c0_89 = arith.constant 0 : index
    %111 = vector.load %arg5[%c0_88, %c0_89] : memref<32x1xf32, #tpu.memory_space<vmem>>, vector<32x1xf32>
    %112 = vector.broadcast %111 : vector<32x1xf32> to vector<32x1024xf32>
    %113 = arith.addf %110, %112 : vector<32x1024xf32>
    %cst_90 = arith.constant 0.000000e+00 : f32
    %114 = vector.broadcast %cst_90 : f32 to vector<32x1024xf32>
    %115 = arith.maximumf %113, %114 : vector<32x1024xf32>
    %c0_91 = arith.constant 0 : index
    %c0_92 = arith.constant 0 : index
    %116 = vector.load %arg8[%c0_91, %c0_92] : memref<1024x32xf32, #tpu.memory_space<vmem>>, vector<1024x32xf32>
    %cst_93 = arith.constant dense<0.000000e+00> : vector<32x32xf32>
    %117 = tpu.matmul %115, %116, %cst_93 {dimension_numbers = #tpu.dot_dimension_numbers<[1], [0], [0], [1], [0, 0, 1, 1], [], []>} : vector<32x1024xf32>, vector<1024x32xf32>, vector<32x32xf32> -> vector<32x32xf32>
    %c0_94 = arith.constant 0 : index
    %c0_95 = arith.constant 0 : index
    %118 = vector.load %arg7[%c0_94, %c0_95] : memref<8x32xf32, #tpu.memory_space<vmem>>, vector<8x32xf32>
    %cst_96 = arith.constant dense<0.000000e+00> : vector<8x32xf32>
    %119 = tpu.matmul %118, %117, %cst_96 {dimension_numbers = #tpu.dot_dimension_numbers<[1], [0], [0], [1], [0, 0, 1, 1], [], []>} : vector<8x32xf32>, vector<32x32xf32>, vector<8x32xf32> -> vector<8x32xf32>
    %c0_97 = arith.constant 0 : index
    %c0_98 = arith.constant 0 : index
    %c0_99 = arith.constant 0 : index
    %120 = vector.load %arg9[%c0_97, %c0_98, %c0_99] : memref<1x8x32xf32, #tpu.memory_space<vmem>>, vector<1x8x32xf32>
    %121 = vector.shape_cast %120 : vector<1x8x32xf32> to vector<8x32xf32>
    %122 = vector.shape_cast %119 : vector<8x32xf32> to vector<1x8x32xf32>
    tpu.vector_store %arg9[%c0_97, %c0_98, %c0_99], %122 {strides = array<i32>} : memref<1x8x32xf32, #tpu.memory_space<vmem>>, vector<1x8x32xf32>,
    return
  }
  func.func @transform_0(%arg0: i32) -> (i32, i32, i32) {
    %c0_i32 = arith.constant 0 : i32
    %c0_i32_0 = arith.constant 0 : i32
    %c0_i32_1 = arith.constant 0 : i32
    return %arg0, %c0_i32, %c0_i32_0 : i32, i32, i32
  }
  func.func @transform_1(%arg0: i32) -> (i32, i32) {
    %c0_i32 = arith.constant 0 : i32
    %c0_i32_0 = arith.constant 0 : i32
    %c0_i32_1 = arith.constant 0 : i32
    return %c0_i32, %c0_i32_0 : i32, i32
  }
  func.func @transform_2(%arg0: i32) -> (i32, i32) {
    %c0_i32 = arith.constant 0 : i32
    %c0_i32_0 = arith.constant 0 : i32
    %c0_i32_1 = arith.constant 0 : i32
    return %c0_i32, %c0_i32_0 : i32, i32
  }
  func.func @transform_3(%arg0: i32) -> (i32, i32) {
    %c0_i32 = arith.constant 0 : i32
    %c0_i32_0 = arith.constant 0 : i32
    %c0_i32_1 = arith.constant 0 : i32
    return %c0_i32, %c0_i32_0 : i32, i32
  }
  func.func @transform_4(%arg0: i32) -> (i32, i32) {
    %c0_i32 = arith.constant 0 : i32
    %c0_i32_0 = arith.constant 0 : i32
    %c0_i32_1 = arith.constant 0 : i32
    return %c0_i32, %c0_i32_0 : i32, i32
  }
  func.func @transform_5(%arg0: i32) -> (i32, i32, i32) {
    %c0_i32 = arith.constant 0 : i32
    %c0_i32_0 = arith.constant 0 : i32
    %c0_i32_1 = arith.constant 0 : i32
    %c0_i32_2 = arith.constant 0 : i32
    return %c0_i32, %c0_i32_0, %c0_i32_1 : i32, i32, i32
  }
  func.func @transform_6(%arg0: i32) -> (i32, i32) {
    %c0_i32 = arith.constant 0 : i32
    %c0_i32_0 = arith.constant 0 : i32
    %c0_i32_1 = arith.constant 0 : i32
    return %c0_i32, %c0_i32_0 : i32, i32
  }
  func.func @transform_7(%arg0: i32) -> (i32, i32) {
    %c0_i32 = arith.constant 0 : i32
    %c0_i32_0 = arith.constant 0 : i32
    %c0_i32_1 = arith.constant 0 : i32
    return %c0_i32, %c0_i32_0 : i32, i32
  }
  func.func @transform_8(%arg0: i32) -> (i32, i32, i32) {
    %c0_i32 = arith.constant 0 : i32
    %c0_i32_0 = arith.constant 0 : i32
    %c0_i32_1 = arith.constant 0 : i32
    return %arg0, %c0_i32, %c0_i32_0 : i32, i32, i32
  }
}

</mosaic_0001>

<llo_original>
// kernel: tpu_custom_call.1
$region0: #{tpu_custom_call.1}
  #allocation0 [shape = 'u32[]', space=smem, size = 0x4, offset = 0x4, fixed_abs, tag = 'smem constant byte address 0x4 - core index']
  #allocation1 [shape = 'u32[144,128]{1,0:T(1,128)}', space=vmem, size = 0x12000, scoped, tag = 'internal scratch']
  #allocation2 [shape = 'f32[72,1024]{1,0:T(8,128)}', space=vmem, size = 0x48000, scoped, tag = 'scratch operand']
  #allocation3 [shape = 'f32[144,1024]{1,0:T(8,128)}', space=vmem, size = 0x90000, scoped, tag = 'scratch operand']
  %s0 = inlined_call_operand.vmem [shape: f32[2,8,1024], index: 0, kind: input, shape index: {}]
  %s1 = inlined_call_operand.vmem [shape: f32[16,72], index: 1, kind: input, shape index: {}]
  %s2 = inlined_call_operand.vmem [shape: f32[16,1], index: 2, kind: input, shape index: {}]
  %s3 = inlined_call_operand.vmem [shape: f32[32,144], index: 3, kind: input, shape index: {}]
  %s4 = inlined_call_operand.vmem [shape: f32[32,1], index: 4, kind: input, shape index: {}]
  %s5 = inlined_call_operand.vmem [shape: f32[9,1,1024], index: 5, kind: input, shape index: {}]
  %s6 = inlined_call_operand.vmem [shape: f32[8,32], index: 6, kind: input, shape index: {}]
  %s7 = inlined_call_operand.vmem [shape: f32[1024,32], index: 7, kind: input, shape index: {}]
  %s8 = inlined_call_operand.hbm [shape: f32[2,8,32], index: 8, kind: output, shape index: {}]
  %s9 = sld [smem:[#allocation0]]
  $region65: #{tpu_custom_call.1} parent=0
    _
  %s11 = ssub.s32 1, %s9
  %s12 = scalar_select 0, %s11, %s9
  $region1: #{tpu_custom_call.1} parent=0
    #allocation4 [shape = 'u8[8192]{0}', space=vmem, size = 0x2000, scoped, tag = 'output window, operand 0']
    #allocation5 [shape = 's32[2]{0}', space=sflag, size = 0x8, scoped, tag = 'scoped memory for tpu_custom_call.1']
    %13 = vsyncpa [#allocation5], 0
    %s14 = scalar_lea.sflag [#allocation5], 1
    %15 = vsyncpa %s14, 0
    loop: start=0, step=1, limit=4
    $region2: #{tpu_custom_call.1} parent=1 // loop_pre_header
      _
    $region3: #{tpu_custom_call.1} parent=1 // loop_header
      %s17 = sphi 0, %s21
      %p18 = scmp.ge.s32.totalorder %s17, 4
      %s27 = sphi 0, %s29
      %s30 = sphi 0, %s27
      %s31 = sphi 0, %s30
      %s47 = sphi 0, %s31
      %s51 = sphi 0, %s51
      %s53 = sphi 0, %s51
      %s54 = sphi 0, %s53
      %s68 = sphi 0, %s54
      %s72 = sphi 0, %s72
      %s74 = sphi 0, %s72
      %s75 = sphi 0, %s74
      %s89 = sphi 0, %s75
      %s93 = sphi 0, %s93
      %s95 = sphi 0, %s93
      %s96 = sphi 0, %s95
      %s110 = sphi 0, %s96
      %s114 = sphi 0, %s114
      %s116 = sphi 0, %s114
      %s117 = sphi 0, %s116
      %s131 = sphi 0, %s117
      %s135 = sphi 0, %s135
      %s137 = sphi 0, %s135
      %s138 = sphi 0, %s137
      %s152 = sphi 0, %s138
      %s156 = sphi 0, %s156
      %s158 = sphi 0, %s156
      %s159 = sphi 0, %s158
      %s173 = sphi 0, %s159
      %s177 = sphi 0, %s177
      %s179 = sphi 0, %s177
      %s180 = sphi 0, %s179
      %s194 = sphi 0, %s180
      %s200 = sphi 0, %s202
      %s203 = sphi 0, %s200
      %s204 = sphi 0, %s203
      %s220 = sphi 0, %s204
    $region4: #{tpu_custom_call.1} parent=1 // loop_header_branch
      %20 = sbr.rel (%p18) target = $region8
    $region5: #{tpu_custom_call.1} parent=1 // loop_body
      %s22 = ssub.s32 %s17, 1
      %s23 = ssub.s32 %s17, 2
      %s24 = sadd.s32 %s17, 1
      %s25 = ssub.s32 %s17, %s24
      %p26 = scmp.eq.s32.totalorder %s25, 0
      %s28 = sadd.s32 %s27, 1
      %s29 = scalar_select %p26, %s27, %s28
      %p32 = pneg %p26
      %p33 = scmp.eq.s32.totalorder %s17, 1
      %p34 = por %p32, %p33
      %p35 = scmp.ne.s32.totalorder %s27, %s30
      %p36 = scmp.eq.s32.totalorder %s17, 0
      %p37 = por %p35, %p36
      %p38 = scmp.ne.s32.totalorder %s27, %s30
      %p39 = scmp.eq.s32.totalorder %s22, 1
      %p40 = por %p38, %p39
      %p41 = scmp.ne.s32.totalorder %s30, %s31
      %p42 = scmp.eq.s32.totalorder %s22, 0
      %p43 = por %p41, %p42
      %p44 = scmp.ne.s32.totalorder %s30, %s31
      %p45 = scmp.eq.s32.totalorder %s23, 1
      %p46 = por %p44, %p45
      %p48 = scmp.ne.s32.totalorder %s31, %s47
      %p49 = scmp.eq.s32.totalorder %s23, 0
      %p50 = por %p48, %p49
      %s52 = sadd.s32 %s51, 1
      %p55 = scmp.eq.s32.totalorder %s17, 1
      %p56 = scmp.ne.s32.totalorder %s51, %s53
      %p57 = scmp.eq.s32.totalorder %s17, 0
      %p58 = por %p56, %p57
      %p59 = scmp.ne.s32.totalorder %s51, %s53
      %p60 = scmp.eq.s32.totalorder %s22, 1
      %p61 = por %p59, %p60
      %p62 = scmp.ne.s32.totalorder %s53, %s54
      %p63 = scmp.eq.s32.totalorder %s22, 0
      %p64 = por %p62, %p63
      %p65 = scmp.ne.s32.totalorder %s53, %s54
      %p66 = scmp.eq.s32.totalorder %s23, 1
      %p67 = por %p65, %p66
      %p69 = scmp.ne.s32.totalorder %s54, %s68
      %p70 = scmp.eq.s32.totalorder %s23, 0
      %p71 = por %p69, %p70
      %s73 = sadd.s32 %s72, 1
      %p76 = scmp.eq.s32.totalorder %s17, 1
      %p77 = scmp.ne.s32.totalorder %s72, %s74
      %p78 = scmp.eq.s32.totalorder %s17, 0
      %p79 = por %p77, %p78
      %p80 = scmp.ne.s32.totalorder %s72, %s74
      %p81 = scmp.eq.s32.totalorder %s22, 1
      %p82 = por %p80, %p81
      %p83 = scmp.ne.s32.totalorder %s74, %s75
      %p84 = scmp.eq.s32.totalorder %s22, 0
      %p85 = por %p83, %p84
      %p86 = scmp.ne.s32.totalorder %s74, %s75
      %p87 = scmp.eq.s32.totalorder %s23, 1
      %p88 = por %p86, %p87
      %p90 = scmp.ne.s32.totalorder %s75, %s89
      %p91 = scmp.eq.s32.totalorder %s23, 0
      %p92 = por %p90, %p91
      %s94 = sadd.s32 %s93, 1
      %p97 = scmp.eq.s32.totalorder %s17, 1
      %p98 = scmp.ne.s32.totalorder %s93, %s95
      %p99 = scmp.eq.s32.totalorder %s17, 0
      %p100 = por %p98, %p99
      %p101 = scmp.ne.s32.totalorder %s93, %s95
      %p102 = scmp.eq.s32.totalorder %s22, 1
      %p103 = por %p101, %p102
      %p104 = scmp.ne.s32.totalorder %s95, %s96
      %p105 = scmp.eq.s32.totalorder %s22, 0
      %p106 = por %p104, %p105
      %p107 = scmp.ne.s32.totalorder %s95, %s96
      %p108 = scmp.eq.s32.totalorder %s23, 1
      %p109 = por %p107, %p108
      %p111 = scmp.ne.s32.totalorder %s96, %s110
      %p112 = scmp.eq.s32.totalorder %s23, 0
      %p113 = por %p111, %p112
      %s115 = sadd.s32 %s114, 1
      %p118 = scmp.eq.s32.totalorder %s17, 1
      %p119 = scmp.ne.s32.totalorder %s114, %s116
      %p120 = scmp.eq.s32.totalorder %s17, 0
      %p121 = por %p119, %p120
      %p122 = scmp.ne.s32.totalorder %s114, %s116
      %p123 = scmp.eq.s32.totalorder %s22, 1
      %p124 = por %p122, %p123
      %p125 = scmp.ne.s32.totalorder %s116, %s117
      %p126 = scmp.eq.s32.totalorder %s22, 0
      %p127 = por %p125, %p126
      %p128 = scmp.ne.s32.totalorder %s116, %s117
      %p129 = scmp.eq.s32.totalorder %s23, 1
      %p130 = por %p128, %p129
      %p132 = scmp.ne.s32.totalorder %s117, %s131
      %p133 = scmp.eq.s32.totalorder %s23, 0
      %p134 = por %p132, %p133
      %s136 = sadd.s32 %s135, 1
      %p139 = scmp.eq.s32.totalorder %s17, 1
      %p140 = scmp.ne.s32.totalorder %s135, %s137
      %p141 = scmp.eq.s32.totalorder %s17, 0
      %p142 = por %p140, %p141
      %p143 = scmp.ne.s32.totalorder %s135, %s137
      %p144 = scmp.eq.s32.totalorder %s22, 1
      %p145 = por %p143, %p144
      %p146 = scmp.ne.s32.totalorder %s137, %s138
      %p147 = scmp.eq.s32.totalorder %s22, 0
      %p148 = por %p146, %p147
      %p149 = scmp.ne.s32.totalorder %s137, %s138
      %p150 = scmp.eq.s32.totalorder %s23, 1
      %p151 = por %p149, %p150
      %p153 = scmp.ne.s32.totalorder %s138, %s152
      %p154 = scmp.eq.s32.totalorder %s23, 0
      %p155 = por %p153, %p154
      %s157 = sadd.s32 %s156, 1
      %p160 = scmp.eq.s32.totalorder %s17, 1
      %p161 = scmp.ne.s32.totalorder %s156, %s158
      %p162 = scmp.eq.s32.totalorder %s17, 0
      %p163 = por %p161, %p162
      %p164 = scmp.ne.s32.totalorder %s156, %s158
      %p165 = scmp.eq.s32.totalorder %s22, 1
      %p166 = por %p164, %p165
      %p167 = scmp.ne.s32.totalorder %s158, %s159
      %p168 = scmp.eq.s32.totalorder %s22, 0
      %p169 = por %p167, %p168
      %p170 = scmp.ne.s32.totalorder %s158, %s159
      %p171 = scmp.eq.s32.totalorder %s23, 1
      %p172 = por %p170, %p171
      %p174 = scmp.ne.s32.totalorder %s159, %s173
      %p175 = scmp.eq.s32.totalorder %s23, 0
      %p176 = por %p174, %p175
      %s178 = sadd.s32 %s177, 1
      %p181 = scmp.eq.s32.totalorder %s17, 1
      %p182 = scmp.ne.s32.totalorder %s177, %s179
      %p183 = scmp.eq.s32.totalorder %s17, 0
      %p184 = por %p182, %p183
      %p185 = scmp.ne.s32.totalorder %s177, %s179
      %p186 = scmp.eq.s32.totalorder %s22, 1
      %p187 = por %p185, %p186
      %p188 = scmp.ne.s32.totalorder %s179, %s180
      %p189 = scmp.eq.s32.totalorder %s22, 0
      %p190 = por %p188, %p189
      %p191 = scmp.ne.s32.totalorder %s179, %s180
      %p192 = scmp.eq.s32.totalorder %s23, 1
      %p193 = por %p191, %p192
      %p195 = scmp.ne.s32.totalorder %s180, %s194
      %p196 = scmp.eq.s32.totalorder %s23, 0
      %p197 = por %p195, %p196
      %s198 = ssub.s32 %s17, %s24
      %p199 = scmp.eq.s32.totalorder %s198, 0
      %s201 = sadd.s32 %s200, 1
      %s202 = scalar_select %p199, %s200, %s201
      %p205 = pneg %p199
      %p206 = scmp.eq.s32.totalorder %s17, 1
      %p207 = por %p205, %p206
      %p208 = scmp.ne.s32.totalorder %s200, %s203
      %p209 = scmp.eq.s32.totalorder %s17, 0
      %p210 = por %p208, %p209
      %p211 = scmp.ne.s32.totalorder %s200, %s203
      %p212 = scmp.eq.s32.totalorder %s22, 1
      %p213 = por %p211, %p212
      %p214 = scmp.ne.s32.totalorder %s203, %s204
      %p215 = scmp.eq.s32.totalorder %s22, 0
      %p216 = por %p214, %p215
      %p217 = scmp.ne.s32.totalorder %s203, %s204
      %p218 = scmp.eq.s32.totalorder %s23, 1
      %p219 = por %p217, %p218
      %p221 = scmp.ne.s32.totalorder %s204, %s220
      %p222 = scmp.eq.s32.totalorder %s23, 0
      %p223 = por %p221, %p222
      %p224 = scmp.le.s32.totalorder 1, %s17
      %p225 = scmp.lt.s32.totalorder %s17, 3
      %p226 = pnand %p224, %p225
      %p227 = pneg %p226
      // Predicated region
      $region9: #{tpu_custom_call.1} parent=5 // pred_check
        _
      $region10: #{tpu_custom_call.1} parent=5 // pred_check_branch
        %229 = sbr.rel (%p226) target = $region12
      $region11: #{tpu_custom_call.1} parent=5 // pred_region
        %s230 = ssub.s32 %s17, 1
        // Predicated region
        $region13: #{tpu_custom_call.1} parent=11 // pred_check
          %p231 = pneg %p64
        $region14: #{tpu_custom_call.1} parent=11 // pred_check_branch
          %233 = sbr.rel (%p231) target = $region16
        $region15: #{tpu_custom_call.1} parent=11 // pred_region
          _
        $region16: #{tpu_custom_call.1} parent=11 // pred_fallthru
          _
        // Predicated region
        $region17: #{tpu_custom_call.1} parent=11 // pred_check
          %p234 = pneg %p85
        $region18: #{tpu_custom_call.1} parent=11 // pred_check_branch
          %236 = sbr.rel (%p234) target = $region20
        $region19: #{tpu_custom_call.1} parent=11 // pred_region
          _
        $region20: #{tpu_custom_call.1} parent=11 // pred_fallthru
          _
        // Predicated region
        $region21: #{tpu_custom_call.1} parent=11 // pred_check
          %p237 = pneg %p106
        $region22: #{tpu_custom_call.1} parent=11 // pred_check_branch
          %239 = sbr.rel (%p237) target = $region24
        $region23: #{tpu_custom_call.1} parent=11 // pred_region
          _
        $region24: #{tpu_custom_call.1} parent=11 // pred_fallthru
          _
        // Predicated region
        $region25: #{tpu_custom_call.1} parent=11 // pred_check
          %p240 = pneg %p127
        $region26: #{tpu_custom_call.1} parent=11 // pred_check_branch
          %242 = sbr.rel (%p240) target = $region28
        $region27: #{tpu_custom_call.1} parent=11 // pred_region
          _
        $region28: #{tpu_custom_call.1} parent=11 // pred_fallthru
          _
        // Predicated region
        $region29: #{tpu_custom_call.1} parent=11 // pred_check
          %p243 = pneg %p148
        $region30: #{tpu_custom_call.1} parent=11 // pred_check_branch
          %245 = sbr.rel (%p243) target = $region32
        $region31: #{tpu_custom_call.1} parent=11 // pred_region
          _
        $region32: #{tpu_custom_call.1} parent=11 // pred_fallthru
          _
        // Predicated region
        $region33: #{tpu_custom_call.1} parent=11 // pred_check
          %p246 = pneg %p169
        $region34: #{tpu_custom_call.1} parent=11 // pred_check_branch
          %248 = sbr.rel (%p246) target = $region36
        $region35: #{tpu_custom_call.1} parent=11 // pred_region
          _
        $region36: #{tpu_custom_call.1} parent=11 // pred_fallthru
          _
        // Predicated region
        $region37: #{tpu_custom_call.1} parent=11 // pred_check
          %p249 = pneg %p190
        $region38: #{tpu_custom_call.1} parent=11 // pred_check_branch
          %251 = sbr.rel (%p249) target = $region40
        $region39: #{tpu_custom_call.1} parent=11 // pred_region
          _
        $region40: #{tpu_custom_call.1} parent=11 // pred_fallthru
          _
      $region12: #{tpu_custom_call.1} parent=5 // pred_fallthru
        _
      %p252 = scmp.lt.s32.totalorder %s17, 2
      // Predicated region
      $region41: #{tpu_custom_call.1} parent=5 // pred_check
        %p253 = pneg %p252
      $region42: #{tpu_custom_call.1} parent=5 // pred_check_branch
        %255 = sbr.rel (%p253) target = $region44
      $region43: #{tpu_custom_call.1} parent=5 // pred_region
        // Predicated region
        $region45: #{tpu_custom_call.1} parent=43 // pred_check
          %p256 = pneg %p37
        $region46: #{tpu_custom_call.1} parent=43 // pred_check_branch
          %258 = sbr.rel (%p256) target = $region48
        $region47: #{tpu_custom_call.1} parent=43 // pred_region
          %p259 = scmp.lt.s32.totalorder %s17, 1
          %s260 = scalar_select %p259, %s17, 1
          %s261 = smul.addr %s260, 8
          %s262 = smul.addr %s261, 8
          %s263 = scalar_lea.vmem %s0, %s262
        $region48: #{tpu_custom_call.1} parent=43 // pred_fallthru
          _
      $region44: #{tpu_custom_call.1} parent=5 // pred_fallthru
        _
      %p264 = scmp.le.s32.totalorder 1, %s17
      %p265 = scmp.lt.s32.totalorder %s17, 3
      %p266 = pnand %p264, %p265
      %p267 = pneg %p266
      // Predicated region
      $region49: #{tpu_custom_call.1} parent=5 // pred_check
        _
      $region50: #{tpu_custom_call.1} parent=5 // pred_check_branch
        %269 = sbr.rel (%p266) target = $region52
      $region51: #{tpu_custom_call.1} parent=5 // pred_region
        %s270 = ssub.s32 %s17, 1
        %p271 = scmp.lt.s32.totalorder %s22, 1
        %s272 = scalar_select %p271, %s22, 1
        %s273 = smul.addr %s272, 8
        %s274 = smul.addr %s273, 8
        %s275 = scalar_lea.vmem %s0, %s274
        %p276 = pneg %p43
        %p277 = pneg %p40
        %p278 = pneg %p64
        %p279 = pneg %p61
        %p280 = pneg %p85
        %p281 = pneg %p82
        %p282 = pneg %p106
        %p283 = pneg %p103
        %p284 = pneg %p127
        %p285 = pneg %p124
        %p286 = pneg %p148
        %p287 = pneg %p145
        %p288 = pneg %p169
        %p289 = pneg %p166
        %p290 = pneg %p190
        %p291 = pneg %p187
        %p292 = pneg %p216
        %p293 = pneg %p213
        %s294 = sand.u32 %s203, 1
        %s295 = scalar_lea.sflag [#allocation5], %s294
        %s296 = sand.u32 %s203, 1
        %s297 = smul.addr %s296, 8
        %s298 = scalar_lea.vmem [#allocation4], %s297
        %p299 = scmp.lt.s32.totalorder %s22, 1
        %s300 = scalar_select %p299, %s22, 1
        %s301 = smul.addr %s300, 8
        %s302 = smul.addr %s301, 8
        %s303 = scalar_lea.vmem %s0, %s302
        %v304 = vld [vmem:[%s303] sm:$0xff]
        %v305 = vld [vmem:[%s303 + $0x8] sm:$0xff]
        %v306 = vld [vmem:[%s303 + $0x10] sm:$0xff]
        %v307 = vld [vmem:[%s303 + $0x18] sm:$0xff]
        %v308 = vld [vmem:[%s303 + $0x20] sm:$0xff]
        %v309 = vld [vmem:[%s303 + $0x28] sm:$0xff]
        %v310 = vld [vmem:[%s303 + $0x30] sm:$0xff]
        %v311 = vld [vmem:[%s303 + $0x38] sm:$0xff]
        %312 = vrot.lane.b32.xlu0 %v304, 33
        %v313 = vpop.permute.xlu0 %312
        %314 = vrot.lane.b32.xlu0 %v305, 33
        %v315 = vpop.permute.xlu0 %314
        %316 = vrot.lane.b32.xlu0 %v306, 33
        %v317 = vpop.permute.xlu0 %316
        %318 = vrot.lane.b32.xlu0 %v307, 33
        %v319 = vpop.permute.xlu0 %318
        %320 = vrot.lane.b32.xlu0 %v308, 33
        %v321 = vpop.permute.xlu0 %320
        %322 = vrot.lane.b32.xlu0 %v309, 33
        %v323 = vpop.permute.xlu0 %322
        %324 = vrot.lane.b32.xlu0 %v310, 33
        %v325 = vpop.permute.xlu0 %324
        %326 = vrot.lane.b32.xlu0 %v311, 33
        %v327 = vpop.permute.xlu0 %326
        %v328 = vlaneseq
        %v329 = vand.u32 %v328, 127
        %vm330 = vcmp.lt.s32.totalorder %v329, 33
        %v331 = vsel %vm330, %v325, %v327
        %v332 = vsel %vm330, %v323, %v325
        %v333 = vsel %vm330, %v321, %v323
        %v334 = vsel %vm330, %v319, %v321
        %v335 = vsel %vm330, %v317, %v319
        %v336 = vsel %vm330, %v315, %v317
        %v337 = vsel %vm330, %v313, %v315
        %v338 = vsel %vm330, %v327, %v313
        %v339 = vld [vmem:[%s5] sm:$0xff]
        %v341 = vlaneseq
        %v342 = vshrl.u32 %v341, 7
        %v343 = vsub.s32 0, %v342
        %v344 = vrot.slane %v339, %v343
        %v345 = vlaneseq
        %v346 = vshrl.u32 %v345, 7
        %v347 = vsub.s32 1, %v346
        %v348 = vrot.slane %v339, %v347
        %v349 = vlaneseq
        %v350 = vshrl.u32 %v349, 7
        %v351 = vsub.s32 2, %v350
        %v352 = vrot.slane %v339, %v351
        %v353 = vlaneseq
        %v354 = vshrl.u32 %v353, 7
        %v355 = vsub.s32 3, %v354
        %v356 = vrot.slane %v339, %v355
        %v357 = vlaneseq
        %v358 = vshrl.u32 %v357, 7
        %v359 = vsub.s32 4, %v358
        %v360 = vrot.slane %v339, %v359
        %v361 = vlaneseq
        %v362 = vshrl.u32 %v361, 7
        %v363 = vsub.s32 5, %v362
        %v364 = vrot.slane %v339, %v363
        %v365 = vlaneseq
        %v366 = vshrl.u32 %v365, 7
        %v367 = vsub.s32 6, %v366
        %v368 = vrot.slane %v339, %v367
        %v369 = vlaneseq
        %v370 = vshrl.u32 %v369, 7
        %v371 = vsub.s32 7, %v370
        %v372 = vrot.slane %v339, %v371
        %v381 = vmul.f32 %v338, %v344
        %v382 = vmul.f32 %v337, %v348
        %v383 = vmul.f32 %v336, %v352
        %v384 = vmul.f32 %v335, %v356
        %v385 = vmul.f32 %v334, %v360
        %v386 = vmul.f32 %v333, %v364
        %v387 = vmul.f32 %v332, %v368
        %v388 = vmul.f32 %v331, %v372
        %389 = vst [vmem:[#allocation2] sm:$0xff] %v381
        %390 = vst [vmem:[#allocation2 + $0x8] sm:$0xff] %v382
        %391 = vst [vmem:[#allocation2 + $0x10] sm:$0xff] %v383
        %392 = vst [vmem:[#allocation2 + $0x18] sm:$0xff] %v384
        %393 = vst [vmem:[#allocation2 + $0x20] sm:$0xff] %v385
        %394 = vst [vmem:[#allocation2 + $0x28] sm:$0xff] %v386
        %395 = vst [vmem:[#allocation2 + $0x30] sm:$0xff] %v387
        %396 = vst [vmem:[#allocation2 + $0x38] sm:$0xff] %v388
        %397 = vrot.lane.b32.xlu0 %v304, 32
        %v398 = vpop.permute.xlu0 %397
        %399 = vrot.lane.b32.xlu0 %v305, 32
        %v400 = vpop.permute.xlu0 %399
        %401 = vrot.lane.b32.xlu0 %v306, 32
        %v402 = vpop.permute.xlu0 %401
        %403 = vrot.lane.b32.xlu0 %v307, 32
        %v404 = vpop.permute.xlu0 %403
        %405 = vrot.lane.b32.xlu0 %v308, 32
        %v406 = vpop.permute.xlu0 %405
        %407 = vrot.lane.b32.xlu0 %v309, 32
        %v408 = vpop.permute.xlu0 %407
        %409 = vrot.lane.b32.xlu0 %v310, 32
        %v410 = vpop.permute.xlu0 %409
        %411 = vrot.lane.b32.xlu0 %v311, 32
        %v412 = vpop.permute.xlu0 %411
        %vm413 = vcmp.lt.s32.totalorder %v329, 32
        %v414 = vsel %vm413, %v410, %v412
        %v415 = vsel %vm413, %v408, %v410
        %v416 = vsel %vm413, %v406, %v408
        %v417 = vsel %vm413, %v404, %v406
        %v418 = vsel %vm413, %v402, %v404
        %v419 = vsel %vm413, %v400, %v402
        %v420 = vsel %vm413, %v398, %v400
        %v421 = vsel %vm413, %v412, %v398
        %s422 = scalar_lea.vmem %s5, 8
        %v423 = vld [vmem:[%s422] sm:$0xff]
        %v425 = vlaneseq
        %v426 = vshrl.u32 %v425, 7
        %v427 = vsub.s32 0, %v426
        %v428 = vrot.slane %v423, %v427
        %v429 = vlaneseq
        %v430 = vshrl.u32 %v429, 7
        %v431 = vsub.s32 1, %v430
        %v432 = vrot.slane %v423, %v431
        %v433 = vlaneseq
        %v434 = vshrl.u32 %v433, 7
        %v435 = vsub.s32 2, %v434
        %v436 = vrot.slane %v423, %v435
        %v437 = vlaneseq
        %v438 = vshrl.u32 %v437, 7
        %v439 = vsub.s32 3, %v438
        %v440 = vrot.slane %v423, %v439
        %v441 = vlaneseq
        %v442 = vshrl.u32 %v441, 7
        %v443 = vsub.s32 4, %v442
        %v444 = vrot.slane %v423, %v443
        %v445 = vlaneseq
        %v446 = vshrl.u32 %v445, 7
        %v447 = vsub.s32 5, %v446
        %v448 = vrot.slane %v423, %v447
        %v449 = vlaneseq
        %v450 = vshrl.u32 %v449, 7
        %v451 = vsub.s32 6, %v450
        %v452 = vrot.slane %v423, %v451
        %v453 = vlaneseq
        %v454 = vshrl.u32 %v453, 7
        %v455 = vsub.s32 7, %v454
        %v456 = vrot.slane %v423, %v455
        %v465 = vmul.f32 %v421, %v428
        %v466 = vmul.f32 %v420, %v432
        %v467 = vmul.f32 %v419, %v436
        %v468 = vmul.f32 %v418, %v440
        %v469 = vmul.f32 %v417, %v444
        %v470 = vmul.f32 %v416, %v448
        %v471 = vmul.f32 %v415, %v452
        %v472 = vmul.f32 %v414, %v456
        %473 = vst [vmem:[#allocation2 + $0x40] sm:$0xff] %v465
        %474 = vst [vmem:[#allocation2 + $0x48] sm:$0xff] %v466
        %475 = vst [vmem:[#allocation2 + $0x50] sm:$0xff] %v467
        %476 = vst [vmem:[#allocation2 + $0x58] sm:$0xff] %v468
        %477 = vst [vmem:[#allocation2 + $0x60] sm:$0xff] %v469
        %478 = vst [vmem:[#allocation2 + $0x68] sm:$0xff] %v470
        %479 = vst [vmem:[#allocation2 + $0x70] sm:$0xff] %v471
        %480 = vst [vmem:[#allocation2 + $0x78] sm:$0xff] %v472
        %481 = vrot.lane.b32.xlu0 %v304, 31
        %v482 = vpop.permute.xlu0 %481
        %483 = vrot.lane.b32.xlu0 %v305, 31
        %v484 = vpop.permute.xlu0 %483
        %485 = vrot.lane.b32.xlu0 %v306, 31
        %v486 = vpop.permute.xlu0 %485
        %487 = vrot.lane.b32.xlu0 %v307, 31
        %v488 = vpop.permute.xlu0 %487
        %489 = vrot.lane.b32.xlu0 %v308, 31
        %v490 = vpop.permute.xlu0 %489
        %491 = vrot.lane.b32.xlu0 %v309, 31
        %v492 = vpop.permute.xlu0 %491
        %493 = vrot.lane.b32.xlu0 %v310, 31
        %v494 = vpop.permute.xlu0 %493
        %495 = vrot.lane.b32.xlu0 %v311, 31
        %v496 = vpop.permute.xlu0 %495
        %vm497 = vcmp.lt.s32.totalorder %v329, 31
        %v498 = vsel %vm497, %v494, %v496
        %v499 = vsel %vm497, %v492, %v494
        %v500 = vsel %vm497, %v490, %v492
        %v501 = vsel %vm497, %v488, %v490
        %v502 = vsel %vm497, %v486, %v488
        %v503 = vsel %vm497, %v484, %v486
        %v504 = vsel %vm497, %v482, %v484
        %v505 = vsel %vm497, %v496, %v482
        %s506 = scalar_lea.vmem %s5, 16
        %v507 = vld [vmem:[%s506] sm:$0xff]
        %v509 = vlaneseq
        %v510 = vshrl.u32 %v509, 7
        %v511 = vsub.s32 0, %v510
        %v512 = vrot.slane %v507, %v511
        %v513 = vlaneseq
        %v514 = vshrl.u32 %v513, 7
        %v515 = vsub.s32 1, %v514
        %v516 = vrot.slane %v507, %v515
        %v517 = vlaneseq
        %v518 = vshrl.u32 %v517, 7
        %v519 = vsub.s32 2, %v518
        %v520 = vrot.slane %v507, %v519
        %v521 = vlaneseq
        %v522 = vshrl.u32 %v521, 7
        %v523 = vsub.s32 3, %v522
        %v524 = vrot.slane %v507, %v523
        %v525 = vlaneseq
        %v526 = vshrl.u32 %v525, 7
        %v527 = vsub.s32 4, %v526
        %v528 = vrot.slane %v507, %v527
        %v529 = vlaneseq
        %v530 = vshrl.u32 %v529, 7
        %v531 = vsub.s32 5, %v530
        %v532 = vrot.slane %v507, %v531
        %v533 = vlaneseq
        %v534 = vshrl.u32 %v533, 7
        %v535 = vsub.s32 6, %v534
        %v536 = vrot.slane %v507, %v535
        %v537 = vlaneseq
        %v538 = vshrl.u32 %v537, 7
        %v539 = vsub.s32 7, %v538
        %v540 = vrot.slane %v507, %v539
        %v549 = vmul.f32 %v505, %v512
        %v550 = vmul.f32 %v504, %v516
        %v551 = vmul.f32 %v503, %v520
        %v552 = vmul.f32 %v502, %v524
        %v553 = vmul.f32 %v501, %v528
        %v554 = vmul.f32 %v500, %v532
        %v555 = vmul.f32 %v499, %v536
        %v556 = vmul.f32 %v498, %v540
        %557 = vst [vmem:[#allocation2 + $0x80] sm:$0xff] %v549
        %558 = vst [vmem:[#allocation2 + $0x88] sm:$0xff] %v550
        %559 = vst [vmem:[#allocation2 + $0x90] sm:$0xff] %v551
        %560 = vst [vmem:[#allocation2 + $0x98] sm:$0xff] %v552
        %561 = vst [vmem:[#allocation2 + $0xa0] sm:$0xff] %v553
        %562 = vst [vmem:[#allocation2 + $0xa8] sm:$0xff] %v554
        %563 = vst [vmem:[#allocation2 + $0xb0] sm:$0xff] %v555
        %564 = vst [vmem:[#allocation2 + $0xb8] sm:$0xff] %v556
        %565 = vrot.lane.b32.xlu0 %v304, 1
        %v566 = vpop.permute.xlu0 %565
        %567 = vrot.lane.b32.xlu0 %v305, 1
        %v568 = vpop.permute.xlu0 %567
        %569 = vrot.lane.b32.xlu0 %v306, 1
        %v570 = vpop.permute.xlu0 %569
        %571 = vrot.lane.b32.xlu0 %v307, 1
        %v572 = vpop.permute.xlu0 %571
        %573 = vrot.lane.b32.xlu0 %v308, 1
        %v574 = vpop.permute.xlu0 %573
        %575 = vrot.lane.b32.xlu0 %v309, 1
        %v576 = vpop.permute.xlu0 %575
        %577 = vrot.lane.b32.xlu0 %v310, 1
        %v578 = vpop.permute.xlu0 %577
        %579 = vrot.lane.b32.xlu0 %v311, 1
        %v580 = vpop.permute.xlu0 %579
        %vm581 = vcmp.lt.s32.totalorder %v329, 1
        %v582 = vsel %vm581, %v578, %v580
        %v583 = vsel %vm581, %v576, %v578
        %v584 = vsel %vm581, %v574, %v576
        %v585 = vsel %vm581, %v572, %v574
        %v586 = vsel %vm581, %v570, %v572
        %v587 = vsel %vm581, %v568, %v570
        %v588 = vsel %vm581, %v566, %v568
        %v589 = vsel %vm581, %v580, %v566
        %s590 = scalar_lea.vmem %s5, 24
        %v591 = vld [vmem:[%s590] sm:$0xff]
        %v593 = vlaneseq
        %v594 = vshrl.u32 %v593, 7
        %v595 = vsub.s32 0, %v594
        %v596 = vrot.slane %v591, %v595
        %v597 = vlaneseq
        %v598 = vshrl.u32 %v597, 7
        %v599 = vsub.s32 1, %v598
        %v600 = vrot.slane %v591, %v599
        %v601 = vlaneseq
        %v602 = vshrl.u32 %v601, 7
        %v603 = vsub.s32 2, %v602
        %v604 = vrot.slane %v591, %v603
        %v605 = vlaneseq
        %v606 = vshrl.u32 %v605, 7
        %v607 = vsub.s32 3, %v606
        %v608 = vrot.slane %v591, %v607
        %v609 = vlaneseq
        %v610 = vshrl.u32 %v609, 7
        %v611 = vsub.s32 4, %v610
        %v612 = vrot.slane %v591, %v611
        %v613 = vlaneseq
        %v614 = vshrl.u32 %v613, 7
        %v615 = vsub.s32 5, %v614
        %v616 = vrot.slane %v591, %v615
        %v617 = vlaneseq
        %v618 = vshrl.u32 %v617, 7
        %v619 = vsub.s32 6, %v618
        %v620 = vrot.slane %v591, %v619
        %v621 = vlaneseq
        %v622 = vshrl.u32 %v621, 7
        %v623 = vsub.s32 7, %v622
        %v624 = vrot.slane %v591, %v623
        %v633 = vmul.f32 %v589, %v596
        %v634 = vmul.f32 %v588, %v600
        %v635 = vmul.f32 %v587, %v604
        %v636 = vmul.f32 %v586, %v608
        %v637 = vmul.f32 %v585, %v612
        %v638 = vmul.f32 %v584, %v616
        %v639 = vmul.f32 %v583, %v620
        %v640 = vmul.f32 %v582, %v624
        %641 = vst [vmem:[#allocation2 + $0xc0] sm:$0xff] %v633
        %642 = vst [vmem:[#allocation2 + $0xc8] sm:$0xff] %v634
        %643 = vst [vmem:[#allocation2 + $0xd0] sm:$0xff] %v635
        %644 = vst [vmem:[#allocation2 + $0xd8] sm:$0xff] %v636
        %645 = vst [vmem:[#allocation2 + $0xe0] sm:$0xff] %v637
        %646 = vst [vmem:[#allocation2 + $0xe8] sm:$0xff] %v638
        %647 = vst [vmem:[#allocation2 + $0xf0] sm:$0xff] %v639
        %648 = vst [vmem:[#allocation2 + $0xf8] sm:$0xff] %v640
        %649 = vst [vmem:[#allocation2 + $0x100] sm:$0xff] %v304
        %650 = vst [vmem:[#allocation2 + $0x108] sm:$0xff] %v305
        %651 = vst [vmem:[#allocation2 + $0x110] sm:$0xff] %v306
        %652 = vst [vmem:[#allocation2 + $0x118] sm:$0xff] %v307
        %653 = vst [vmem:[#allocation2 + $0x120] sm:$0xff] %v308
        %654 = vst [vmem:[#allocation2 + $0x128] sm:$0xff] %v309
        %655 = vst [vmem:[#allocation2 + $0x130] sm:$0xff] %v310
        %656 = vst [vmem:[#allocation2 + $0x138] sm:$0xff] %v311
        %657 = vrot.lane.b32.xlu0 %v304, 127
        %v658 = vpop.permute.xlu0 %657
        %659 = vrot.lane.b32.xlu0 %v305, 127
        %v660 = vpop.permute.xlu0 %659
        %661 = vrot.lane.b32.xlu0 %v306, 127
        %v662 = vpop.permute.xlu0 %661
        %663 = vrot.lane.b32.xlu0 %v307, 127
        %v664 = vpop.permute.xlu0 %663
        %665 = vrot.lane.b32.xlu0 %v308, 127
        %v666 = vpop.permute.xlu0 %665
        %667 = vrot.lane.b32.xlu0 %v309, 127
        %v668 = vpop.permute.xlu0 %667
        %669 = vrot.lane.b32.xlu0 %v310, 127
        %v670 = vpop.permute.xlu0 %669
        %671 = vrot.lane.b32.xlu0 %v311, 127
        %v672 = vpop.permute.xlu0 %671
        %vm673 = vcmp.lt.s32.totalorder %v329, 127
        %v674 = vsel %vm673, %v670, %v672
        %v675 = vsel %vm673, %v668, %v670
        %v676 = vsel %vm673, %v666, %v668
        %v677 = vsel %vm673, %v664, %v666
        %v678 = vsel %vm673, %v662, %v664
        %v679 = vsel %vm673, %v660, %v662
        %v680 = vsel %vm673, %v658, %v660
        %v681 = vsel %vm673, %v672, %v658
        %s682 = scalar_lea.vmem %s5, 40
        %v683 = vld [vmem:[%s682] sm:$0xff]
        %v685 = vlaneseq
        %v686 = vshrl.u32 %v685, 7
        %v687 = vsub.s32 0, %v686
        %v688 = vrot.slane %v683, %v687
        %v689 = vlaneseq
        %v690 = vshrl.u32 %v689, 7
        %v691 = vsub.s32 1, %v690
        %v692 = vrot.slane %v683, %v691
        %v693 = vlaneseq
        %v694 = vshrl.u32 %v693, 7
        %v695 = vsub.s32 2, %v694
        %v696 = vrot.slane %v683, %v695
        %v697 = vlaneseq
        %v698 = vshrl.u32 %v697, 7
        %v699 = vsub.s32 3, %v698
        %v700 = vrot.slane %v683, %v699
        %v701 = vlaneseq
        %v702 = vshrl.u32 %v701, 7
        %v703 = vsub.s32 4, %v702
        %v704 = vrot.slane %v683, %v703
        %v705 = vlaneseq
        %v706 = vshrl.u32 %v705, 7
        %v707 = vsub.s32 5, %v706
        %v708 = vrot.slane %v683, %v707
        %v709 = vlaneseq
        %v710 = vshrl.u32 %v709, 7
        %v711 = vsub.s32 6, %v710
        %v712 = vrot.slane %v683, %v711
        %v713 = vlaneseq
        %v714 = vshrl.u32 %v713, 7
        %v715 = vsub.s32 7, %v714
        %v716 = vrot.slane %v683, %v715
        %v725 = vmul.f32 %v680, %v688
        %v726 = vmul.f32 %v679, %v692
        %v727 = vmul.f32 %v678, %v696
        %v728 = vmul.f32 %v677, %v700
        %v729 = vmul.f32 %v676, %v704
        %v730 = vmul.f32 %v675, %v708
        %v731 = vmul.f32 %v674, %v712
        %v732 = vmul.f32 %v681, %v716
        %733 = vst [vmem:[#allocation2 + $0x140] sm:$0xff] %v725
        %734 = vst [vmem:[#allocation2 + $0x148] sm:$0xff] %v726
        %735 = vst [vmem:[#allocation2 + $0x150] sm:$0xff] %v727
        %736 = vst [vmem:[#allocation2 + $0x158] sm:$0xff] %v728
        %737 = vst [vmem:[#allocation2 + $0x160] sm:$0xff] %v729
        %738 = vst [vmem:[#allocation2 + $0x168] sm:$0xff] %v730
        %739 = vst [vmem:[#allocation2 + $0x170] sm:$0xff] %v731
        %740 = vst [vmem:[#allocation2 + $0x178] sm:$0xff] %v732
        %741 = vrot.lane.b32.xlu0 %v304, 97
        %v742 = vpop.permute.xlu0 %741
        %743 = vrot.lane.b32.xlu0 %v305, 97
        %v744 = vpop.permute.xlu0 %743
        %745 = vrot.lane.b32.xlu0 %v306, 97
        %v746 = vpop.permute.xlu0 %745
        %747 = vrot.lane.b32.xlu0 %v307, 97
        %v748 = vpop.permute.xlu0 %747
        %749 = vrot.lane.b32.xlu0 %v308, 97
        %v750 = vpop.permute.xlu0 %749
        %751 = vrot.lane.b32.xlu0 %v309, 97
        %v752 = vpop.permute.xlu0 %751
        %753 = vrot.lane.b32.xlu0 %v310, 97
        %v754 = vpop.permute.xlu0 %753
        %755 = vrot.lane.b32.xlu0 %v311, 97
        %v756 = vpop.permute.xlu0 %755
        %vm757 = vcmp.lt.s32.totalorder %v329, 97
        %v758 = vsel %vm757, %v754, %v756
        %v759 = vsel %vm757, %v752, %v754
        %v760 = vsel %vm757, %v750, %v752
        %v761 = vsel %vm757, %v748, %v750
        %v762 = vsel %vm757, %v746, %v748
        %v763 = vsel %vm757, %v744, %v746
        %v764 = vsel %vm757, %v742, %v744
        %v765 = vsel %vm757, %v756, %v742
        %s766 = scalar_lea.vmem %s5, 48
        %v767 = vld [vmem:[%s766] sm:$0xff]
        %v769 = vlaneseq
        %v770 = vshrl.u32 %v769, 7
        %v771 = vsub.s32 0, %v770
        %v772 = vrot.slane %v767, %v771
        %v773 = vlaneseq
        %v774 = vshrl.u32 %v773, 7
        %v775 = vsub.s32 1, %v774
        %v776 = vrot.slane %v767, %v775
        %v777 = vlaneseq
        %v778 = vshrl.u32 %v777, 7
        %v779 = vsub.s32 2, %v778
        %v780 = vrot.slane %v767, %v779
        %v781 = vlaneseq
        %v782 = vshrl.u32 %v781, 7
        %v783 = vsub.s32 3, %v782
        %v784 = vrot.slane %v767, %v783
        %v785 = vlaneseq
        %v786 = vshrl.u32 %v785, 7
        %v787 = vsub.s32 4, %v786
        %v788 = vrot.slane %v767, %v787
        %v789 = vlaneseq
        %v790 = vshrl.u32 %v789, 7
        %v791 = vsub.s32 5, %v790
        %v792 = vrot.slane %v767, %v791
        %v793 = vlaneseq
        %v794 = vshrl.u32 %v793, 7
        %v795 = vsub.s32 6, %v794
        %v796 = vrot.slane %v767, %v795
        %v797 = vlaneseq
        %v798 = vshrl.u32 %v797, 7
        %v799 = vsub.s32 7, %v798
        %v800 = vrot.slane %v767, %v799
        %v809 = vmul.f32 %v764, %v772
        %v810 = vmul.f32 %v763, %v776
        %v811 = vmul.f32 %v762, %v780
        %v812 = vmul.f32 %v761, %v784
        %v813 = vmul.f32 %v760, %v788
        %v814 = vmul.f32 %v759, %v792
        %v815 = vmul.f32 %v758, %v796
        %v816 = vmul.f32 %v765, %v800
        %817 = vst [vmem:[#allocation2 + $0x180] sm:$0xff] %v809
        %818 = vst [vmem:[#allocation2 + $0x188] sm:$0xff] %v810
        %819 = vst [vmem:[#allocation2 + $0x190] sm:$0xff] %v811
        %820 = vst [vmem:[#allocation2 + $0x198] sm:$0xff] %v812
        %821 = vst [vmem:[#allocation2 + $0x1a0] sm:$0xff] %v813
        %822 = vst [vmem:[#allocation2 + $0x1a8] sm:$0xff] %v814
        %823 = vst [vmem:[#allocation2 + $0x1b0] sm:$0xff] %v815
        %824 = vst [vmem:[#allocation2 + $0x1b8] sm:$0xff] %v816
        %825 = vrot.lane.b32.xlu0 %v304, 96
        %v826 = vpop.permute.xlu0 %825
        %827 = vrot.lane.b32.xlu0 %v305, 96
        %v828 = vpop.permute.xlu0 %827
        %829 = vrot.lane.b32.xlu0 %v306, 96
        %v830 = vpop.permute.xlu0 %829
        %831 = vrot.lane.b32.xlu0 %v307, 96
        %v832 = vpop.permute.xlu0 %831
        %833 = vrot.lane.b32.xlu0 %v308, 96
        %v834 = vpop.permute.xlu0 %833
        %835 = vrot.lane.b32.xlu0 %v309, 96
        %v836 = vpop.permute.xlu0 %835
        %837 = vrot.lane.b32.xlu0 %v310, 96
        %v838 = vpop.permute.xlu0 %837
        %839 = vrot.lane.b32.xlu0 %v311, 96
        %v840 = vpop.permute.xlu0 %839
        %vm841 = vcmp.lt.s32.totalorder %v329, 96
        %v842 = vsel %vm841, %v838, %v840
        %v843 = vsel %vm841, %v836, %v838
        %v844 = vsel %vm841, %v834, %v836
        %v845 = vsel %vm841, %v832, %v834
        %v846 = vsel %vm841, %v830, %v832
        %v847 = vsel %vm841, %v828, %v830
        %v848 = vsel %vm841, %v826, %v828
        %v849 = vsel %vm841, %v840, %v826
        %s850 = scalar_lea.vmem %s5, 56
        %v851 = vld [vmem:[%s850] sm:$0xff]
        %v853 = vlaneseq
        %v854 = vshrl.u32 %v853, 7
        %v855 = vsub.s32 0, %v854
        %v856 = vrot.slane %v851, %v855
        %v857 = vlaneseq
        %v858 = vshrl.u32 %v857, 7
        %v859 = vsub.s32 1, %v858
        %v860 = vrot.slane %v851, %v859
        %v861 = vlaneseq
        %v862 = vshrl.u32 %v861, 7
        %v863 = vsub.s32 2, %v862
        %v864 = vrot.slane %v851, %v863
        %v865 = vlaneseq
        %v866 = vshrl.u32 %v865, 7
        %v867 = vsub.s32 3, %v866
        %v868 = vrot.slane %v851, %v867
        %v869 = vlaneseq
        %v870 = vshrl.u32 %v869, 7
        %v871 = vsub.s32 4, %v870
        %v872 = vrot.slane %v851, %v871
        %v873 = vlaneseq
        %v874 = vshrl.u32 %v873, 7
        %v875 = vsub.s32 5, %v874
        %v876 = vrot.slane %v851, %v875
        %v877 = vlaneseq
        %v878 = vshrl.u32 %v877, 7
        %v879 = vsub.s32 6, %v878
        %v880 = vrot.slane %v851, %v879
        %v881 = vlaneseq
        %v882 = vshrl.u32 %v881, 7
        %v883 = vsub.s32 7, %v882
        %v884 = vrot.slane %v851, %v883
        %v893 = vmul.f32 %v848, %v856
        %v894 = vmul.f32 %v847, %v860
        %v895 = vmul.f32 %v846, %v864
        %v896 = vmul.f32 %v845, %v868
        %v897 = vmul.f32 %v844, %v872
        %v898 = vmul.f32 %v843, %v876
        %v899 = vmul.f32 %v842, %v880
        %v900 = vmul.f32 %v849, %v884
        %901 = vst [vmem:[#allocation2 + $0x1c0] sm:$0xff] %v893
        %902 = vst [vmem:[#allocation2 + $0x1c8] sm:$0xff] %v894
        %903 = vst [vmem:[#allocation2 + $0x1d0] sm:$0xff] %v895
        %904 = vst [vmem:[#allocation2 + $0x1d8] sm:$0xff] %v896
        %905 = vst [vmem:[#allocation2 + $0x1e0] sm:$0xff] %v897
        %906 = vst [vmem:[#allocation2 + $0x1e8] sm:$0xff] %v898
        %907 = vst [vmem:[#allocation2 + $0x1f0] sm:$0xff] %v899
        %908 = vst [vmem:[#allocation2 + $0x1f8] sm:$0xff] %v900
        %909 = vrot.lane.b32.xlu0 %v304, 95
        %v910 = vpop.permute.xlu0 %909
        %911 = vrot.lane.b32.xlu0 %v305, 95
        %v912 = vpop.permute.xlu0 %911
        %913 = vrot.lane.b32.xlu0 %v306, 95
        %v914 = vpop.permute.xlu0 %913
        %915 = vrot.lane.b32.xlu0 %v307, 95
        %v916 = vpop.permute.xlu0 %915
        %917 = vrot.lane.b32.xlu0 %v308, 95
        %v918 = vpop.permute.xlu0 %917
        %919 = vrot.lane.b32.xlu0 %v309, 95
        %v920 = vpop.permute.xlu0 %919
        %921 = vrot.lane.b32.xlu0 %v310, 95
        %v922 = vpop.permute.xlu0 %921
        %923 = vrot.lane.b32.xlu0 %v311, 95
        %v924 = vpop.permute.xlu0 %923
        %vm925 = vcmp.lt.s32.totalorder %v329, 95
        %v926 = vsel %vm925, %v922, %v924
        %v927 = vsel %vm925, %v920, %v922
        %v928 = vsel %vm925, %v918, %v920
        %v929 = vsel %vm925, %v916, %v918
        %v930 = vsel %vm925, %v914, %v916
        %v931 = vsel %vm925, %v912, %v914
        %v932 = vsel %vm925, %v910, %v912
        %v933 = vsel %vm925, %v924, %v910
        %s934 = scalar_lea.vmem %s5, 64
        %v935 = vld [vmem:[%s934] sm:$0xff]
        %v937 = vlaneseq
        %v938 = vshrl.u32 %v937, 7
        %v939 = vsub.s32 0, %v938
        %v940 = vrot.slane %v935, %v939
        %v941 = vlaneseq
        %v942 = vshrl.u32 %v941, 7
        %v943 = vsub.s32 1, %v942
        %v944 = vrot.slane %v935, %v943
        %v945 = vlaneseq
        %v946 = vshrl.u32 %v945, 7
        %v947 = vsub.s32 2, %v946
        %v948 = vrot.slane %v935, %v947
        %v949 = vlaneseq
        %v950 = vshrl.u32 %v949, 7
        %v951 = vsub.s32 3, %v950
        %v952 = vrot.slane %v935, %v951
        %v953 = vlaneseq
        %v954 = vshrl.u32 %v953, 7
        %v955 = vsub.s32 4, %v954
        %v956 = vrot.slane %v935, %v955
        %v957 = vlaneseq
        %v958 = vshrl.u32 %v957, 7
        %v959 = vsub.s32 5, %v958
        %v960 = vrot.slane %v935, %v959
        %v961 = vlaneseq
        %v962 = vshrl.u32 %v961, 7
        %v963 = vsub.s32 6, %v962
        %v964 = vrot.slane %v935, %v963
        %v965 = vlaneseq
        %v966 = vshrl.u32 %v965, 7
        %v967 = vsub.s32 7, %v966
        %v968 = vrot.slane %v935, %v967
        %v977 = vmul.f32 %v932, %v940
        %v978 = vmul.f32 %v931, %v944
        %v979 = vmul.f32 %v930, %v948
        %v980 = vmul.f32 %v929, %v952
        %v981 = vmul.f32 %v928, %v956
        %v982 = vmul.f32 %v927, %v960
        %v983 = vmul.f32 %v926, %v964
        %v984 = vmul.f32 %v933, %v968
        %985 = vst [vmem:[#allocation2 + $0x200] sm:$0xff] %v977
        %986 = vst [vmem:[#allocation2 + $0x208] sm:$0xff] %v978
        %987 = vst [vmem:[#allocation2 + $0x210] sm:$0xff] %v979
        %988 = vst [vmem:[#allocation2 + $0x218] sm:$0xff] %v980
        %989 = vst [vmem:[#allocation2 + $0x220] sm:$0xff] %v981
        %990 = vst [vmem:[#allocation2 + $0x228] sm:$0xff] %v982
        %991 = vst [vmem:[#allocation2 + $0x230] sm:$0xff] %v983
        %992 = vst [vmem:[#allocation2 + $0x238] sm:$0xff] %v984
        %v993 = vld [vmem:[%s1] sm:$0xff]
        %v994 = vld [vmem:[%s1 + $0x8] sm:$0xff]
        %v995 = vld [vmem:[#allocation2] sm:$0xff]
        %v996 = vld [vmem:[#allocation2 + $0x8] sm:$0xff]
        %v997 = vld [vmem:[#allocation2 + $0x10] sm:$0xff]
        %v998 = vld [vmem:[#allocation2 + $0x18] sm:$0xff]
        %v999 = vld [vmem:[#allocation2 + $0x20] sm:$0xff]
        %v1000 = vld [vmem:[#allocation2 + $0x28] sm:$0xff]
        %v1001 = vld [vmem:[#allocation2 + $0x30] sm:$0xff]
        %v1002 = vld [vmem:[#allocation2 + $0x38] sm:$0xff]
        %v1003 = vld [vmem:[#allocation2 + $0x40] sm:$0xff]
        %v1004 = vld [vmem:[#allocation2 + $0x48] sm:$0xff]
        %v1005 = vld [vmem:[#allocation2 + $0x50] sm:$0xff]
        %v1006 = vld [vmem:[#allocation2 + $0x58] sm:$0xff]
        %v1007 = vld [vmem:[#allocation2 + $0x60] sm:$0xff]
        %v1008 = vld [vmem:[#allocation2 + $0x68] sm:$0xff]
        %v1009 = vld [vmem:[#allocation2 + $0x70] sm:$0xff]
        %v1010 = vld [vmem:[#allocation2 + $0x78] sm:$0xff]
        %v1011 = vld [vmem:[#allocation2 + $0x80] sm:$0xff]
        %v1012 = vld [vmem:[#allocation2 + $0x88] sm:$0xff]
        %v1013 = vld [vmem:[#allocation2 + $0x90] sm:$0xff]
        %v1014 = vld [vmem:[#allocation2 + $0x98] sm:$0xff]
        %v1015 = vld [vmem:[#allocation2 + $0xa0] sm:$0xff]
        %v1016 = vld [vmem:[#allocation2 + $0xa8] sm:$0xff]
        %v1017 = vld [vmem:[#allocation2 + $0xb0] sm:$0xff]
        %v1018 = vld [vmem:[#allocation2 + $0xb8] sm:$0xff]
        %v1019 = vld [vmem:[#allocation2 + $0xc0] sm:$0xff]
        %v1020 = vld [vmem:[#allocation2 + $0xc8] sm:$0xff]
        %v1021 = vld [vmem:[#allocation2 + $0xd0] sm:$0xff]
        %v1022 = vld [vmem:[#allocation2 + $0xd8] sm:$0xff]
        %v1023 = vld [vmem:[#allocation2 + $0xe0] sm:$0xff]
        %v1024 = vld [vmem:[#allocation2 + $0xe8] sm:$0xff]
        %v1025 = vld [vmem:[#allocation2 + $0xf0] sm:$0xff]
        %v1026 = vld [vmem:[#allocation2 + $0xf8] sm:$0xff]
        %v1027 = vld [vmem:[#allocation2 + $0x100] sm:$0xff]
        %v1028 = vld [vmem:[#allocation2 + $0x108] sm:$0xff]
        %v1029 = vld [vmem:[#allocation2 + $0x110] sm:$0xff]
        %v1030 = vld [vmem:[#allocation2 + $0x118] sm:$0xff]
        %v1031 = vld [vmem:[#allocation2 + $0x120] sm:$0xff]
        %v1032 = vld [vmem:[#allocation2 + $0x128] sm:$0xff]
        %v1033 = vld [vmem:[#allocation2 + $0x130] sm:$0xff]
        %v1034 = vld [vmem:[#allocation2 + $0x138] sm:$0xff]
        %v1035 = vld [vmem:[#allocation2 + $0x140] sm:$0xff]
        %v1036 = vld [vmem:[#allocation2 + $0x148] sm:$0xff]
        %v1037 = vld [vmem:[#allocation2 + $0x150] sm:$0xff]
        %v1038 = vld [vmem:[#allocation2 + $0x158] sm:$0xff]
        %v1039 = vld [vmem:[#allocation2 + $0x160] sm:$0xff]
        %v1040 = vld [vmem:[#allocation2 + $0x168] sm:$0xff]
        %v1041 = vld [vmem:[#allocation2 + $0x170] sm:$0xff]
        %v1042 = vld [vmem:[#allocation2 + $0x178] sm:$0xff]
        %v1043 = vld [vmem:[#allocation2 + $0x180] sm:$0xff]
        %v1044 = vld [vmem:[#allocation2 + $0x188] sm:$0xff]
        %v1045 = vld [vmem:[#allocation2 + $0x190] sm:$0xff]
        %v1046 = vld [vmem:[#allocation2 + $0x198] sm:$0xff]
        %v1047 = vld [vmem:[#allocation2 + $0x1a0] sm:$0xff]
        %v1048 = vld [vmem:[#allocation2 + $0x1a8] sm:$0xff]
        %v1049 = vld [vmem:[#allocation2 + $0x1b0] sm:$0xff]
        %v1050 = vld [vmem:[#allocation2 + $0x1b8] sm:$0xff]
        %v1051 = vld [vmem:[#allocation2 + $0x1c0] sm:$0xff]
        %v1052 = vld [vmem:[#allocation2 + $0x1c8] sm:$0xff]
        %v1053 = vld [vmem:[#allocation2 + $0x1d0] sm:$0xff]
        %v1054 = vld [vmem:[#allocation2 + $0x1d8] sm:$0xff]
        %v1055 = vld [vmem:[#allocation2 + $0x1e0] sm:$0xff]
        %v1056 = vld [vmem:[#allocation2 + $0x1e8] sm:$0xff]
        %v1057 = vld [vmem:[#allocation2 + $0x1f0] sm:$0xff]
        %v1058 = vld [vmem:[#allocation2 + $0x1f8] sm:$0xff]
        %v1059 = vld [vmem:[#allocation2 + $0x200] sm:$0xff]
        %v1060 = vld [vmem:[#allocation2 + $0x208] sm:$0xff]
        %v1061 = vld [vmem:[#allocation2 + $0x210] sm:$0xff]
        %v1062 = vld [vmem:[#allocation2 + $0x218] sm:$0xff]
        %v1063 = vld [vmem:[#allocation2 + $0x220] sm:$0xff]
        %v1064 = vld [vmem:[#allocation2 + $0x228] sm:$0xff]
        %v1065 = vld [vmem:[#allocation2 + $0x230] sm:$0xff]
        %v1066 = vld [vmem:[#allocation2 + $0x238] sm:$0xff]
        %v1067 = vld [vmem:[%s2] sm:$0xff]
        %v1068 = vld [vmem:[%s2 + $0x8] sm:$0xff]
        %1070 = vset.pattern.permute.xlu0 0
        %1071 = vperm.xlu0 %1070, %v1067
        %v1072 = vpop.permute.xlu0 %1071
        %1075 = vset.pattern.permute.xlu0 0
        %1076 = vperm.xlu0 %1075, %v1068
        %v1077 = vpop.permute.xlu0 %1076
        %vm1079 = vcmask 588800
        %v1081 = vsel %vm1079, %v993, 0
        %v1084 = vsel %vm1079, %v994, 0
        %1086 = vmatprep.subr.mxu0 0.0
        %1087 = vmatpush1.msra.mxu0 0.0
        %1088 = vmatprep.subr.mxu0 0.0
        %1089 = vmatpush1.msra.mxu0 0.0
        %1090 = vmatprep.subr.mxu0 0.0
        %1091 = vmatpush1.msra.mxu0 0.0
        %1092 = vmatprep.subr.mxu0 0.0
        %1093 = vmatpush1.msra.mxu0 0.0
        %1094 = vmatprep.subr.mxu0 0.0
        %1095 = vmatpush1.msra.mxu0 0.0
        %1096 = vmatprep.subr.mxu0 0.0
        %1097 = vmatpush1.msra.mxu0 0.0
        %1098 = vmatprep.subr.mxu0 0.0
        %1099 = vmatpush1.msra.mxu0 0.0
        %1100 = vmatprep.subr.mxu0 %v1060
        %1101 = vmatpush1.msra.mxu0 %v1059
        %1102 = vmatprep.subr.mxu0 %v1052
        %1103 = vmatpush1.msra.mxu0 %v1051
        %1104 = vmatprep.subr.mxu0 %v1044
        %1105 = vmatpush1.msra.mxu0 %v1043
        %1106 = vmatprep.subr.mxu0 %v1036
        %1107 = vmatpush1.msra.mxu0 %v1035
        %1108 = vmatprep.subr.mxu0 %v1028
        %1109 = vmatpush1.msra.mxu0 %v1027
        %1110 = vmatprep.subr.mxu0 %v1020
        %1111 = vmatpush1.msra.mxu0 %v1019
        %1112 = vmatprep.subr.mxu0 %v1012
        %1113 = vmatpush1.msra.mxu0 %v1011
        %1114 = vmatprep.subr.mxu0 %v1004
        %1115 = vmatpush1.msra.mxu0 %v1003
        %1116 = vmatprep.subr.mxu0 %v996
        %1117 = vmatpush1.msra.mxu0 %v995
        %1118 = vmatprep.subr.mxu0 0.0
        %1119 = vmatpush2.msra.mxu0 0.0
        %1120 = vmatprep.subr.mxu0 0.0
        %1121 = vmatpush2.msra.mxu0 0.0
        %1122 = vmatprep.subr.mxu0 0.0
        %1123 = vmatpush2.msra.mxu0 0.0
        %1124 = vmatprep.subr.mxu0 0.0
        %1125 = vmatpush2.msra.mxu0 0.0
        %1126 = vmatprep.subr.mxu0 0.0
        %1127 = vmatpush2.msra.mxu0 0.0
        %1128 = vmatprep.subr.mxu0 0.0
        %1129 = vmatpush2.msra.mxu0 0.0
        %1130 = vmatprep.subr.mxu0 0.0
        %1131 = vmatpush2.msra.mxu0 0.0
        %1132 = vmatprep.subr.mxu0 0.0
        %1133 = vmatpush2.msra.mxu0 0.0
        %1134 = vmatprep.subr.mxu0 0.0
        %1135 = vmatpush2.msra.mxu0 0.0
        %1136 = vmatprep.subr.mxu0 0.0
        %1137 = vmatpush2.msra.mxu0 0.0
        %1138 = vmatprep.subr.mxu0 0.0
        %1139 = vmatpush2.msra.mxu0 0.0
        %1140 = vmatprep.subr.mxu0 0.0
        %1141 = vmatpush2.msra.mxu0 0.0
        %1142 = vmatprep.subr.mxu0 0.0
        %1143 = vmatpush2.msra.mxu0 0.0
        %1144 = vmatprep.subr.mxu0 0.0
        %1145 = vmatpush2.msra.mxu0 0.0
        %1146 = vmatprep.subr.mxu0 0.0
        %1147 = vmatpush2.msra.mxu0 0.0
        %1148 = vmatprep.subr.mxu0 0.0
        %1149 = vmatpush2.msra.mxu0 0.0
        %1150 = vmatprep.mubr.f32.mxu0 0.0
        %1151 = vmatmul.mubr.f32.gmra.mxu0 %v1081
        %v1152 = vpop.f32.mrf.mxu0
        %v1153 = vadd.f32 %v1072, %v1152
        %v1154 = vpop.f32.mrf.mxu0
        %v1155 = vadd.f32 %v1072, %v1154
        %1156 = vmatprep.mubr.f32.mxu0 0.0
        %1157 = vmatmul.mubr.f32.gmra.mxu0 %v1084
        %v1158 = vpop.f32.mrf.mxu0
        %v1159 = vadd.f32 %v1077, %v1158
        %v1160 = vpop.f32.mrf.mxu0
        %v1161 = vadd.f32 %v1077, %v1160
        %1162 = vdwg.mxu0
        %1163 = vmatprep.subr.mxu0 0.0
        %1164 = vmatpush1.msra.mxu0 0.0
        %1165 = vmatprep.subr.mxu0 0.0
        %1166 = vmatpush1.msra.mxu0 0.0
        %1167 = vmatprep.subr.mxu0 0.0
        %1168 = vmatpush1.msra.mxu0 0.0
        %1169 = vmatprep.subr.mxu0 0.0
        %1170 = vmatpush1.msra.mxu0 0.0
        %1171 = vmatprep.subr.mxu0 0.0
        %1172 = vmatpush1.msra.mxu0 0.0
        %1173 = vmatprep.subr.mxu0 0.0
        %1174 = vmatpush1.msra.mxu0 0.0
        %1175 = vmatprep.subr.mxu0 0.0
        %1176 = vmatpush1.msra.mxu0 0.0
        %1177 = vmatprep.subr.mxu0 %v1062
        %1178 = vmatpush1.msra.mxu0 %v1061
        %1179 = vmatprep.subr.mxu0 %v1054
        %1180 = vmatpush1.msra.mxu0 %v1053
        %1181 = vmatprep.subr.mxu0 %v1046
        %1182 = vmatpush1.msra.mxu0 %v1045
        %1183 = vmatprep.subr.mxu0 %v1038
        %1184 = vmatpush1.msra.mxu0 %v1037
        %1185 = vmatprep.subr.mxu0 %v1030
        %1186 = vmatpush1.msra.mxu0 %v1029
        %1187 = vmatprep.subr.mxu0 %v1022
        %1188 = vmatpush1.msra.mxu0 %v1021
        %1189 = vmatprep.subr.mxu0 %v1014
        %1190 = vmatpush1.msra.mxu0 %v1013
        %1191 = vmatprep.subr.mxu0 %v1006
        %1192 = vmatpush1.msra.mxu0 %v1005
        %1193 = vmatprep.subr.mxu0 %v998
        %1194 = vmatpush1.msra.mxu0 %v997
        %1195 = vmatprep.subr.mxu0 0.0
        %1196 = vmatpush2.msra.mxu0 0.0
        %1197 = vmatprep.subr.mxu0 0.0
        %1198 = vmatpush2.msra.mxu0 0.0
        %1199 = vmatprep.subr.mxu0 0.0
        %1200 = vmatpush2.msra.mxu0 0.0
        %1201 = vmatprep.subr.mxu0 0.0
        %1202 = vmatpush2.msra.mxu0 0.0
        %1203 = vmatprep.subr.mxu0 0.0
        %1204 = vmatpush2.msra.mxu0 0.0
        %1205 = vmatprep.subr.mxu0 0.0
        %1206 = vmatpush2.msra.mxu0 0.0
        %1207 = vmatprep.subr.mxu0 0.0
        %1208 = vmatpush2.msra.mxu0 0.0
        %1209 = vmatprep.subr.mxu0 0.0
        %1210 = vmatpush2.msra.mxu0 0.0
        %1211 = vmatprep.subr.mxu0 0.0
        %1212 = vmatpush2.msra.mxu0 0.0
        %1213 = vmatprep.subr.mxu0 0.0
        %1214 = vmatpush2.msra.mxu0 0.0
        %1215 = vmatprep.subr.mxu0 0.0
        %1216 = vmatpush2.msra.mxu0 0.0
        %1217 = vmatprep.subr.mxu0 0.0
        %1218 = vmatpush2.msra.mxu0 0.0
        %1219 = vmatprep.subr.mxu0 0.0
        %1220 = vmatpush2.msra.mxu0 0.0
        %1221 = vmatprep.subr.mxu0 0.0
        %1222 = vmatpush2.msra.mxu0 0.0
        %1223 = vmatprep.subr.mxu0 0.0
        %1224 = vmatpush2.msra.mxu0 0.0
        %1225 = vmatprep.subr.mxu0 0.0
        %1226 = vmatpush2.msra.mxu0 0.0
        %1227 = vmatprep.mubr.f32.mxu0 0.0
        %1228 = vmatmul.mubr.f32.gmra.mxu0 %v1081
        %v1229 = vpop.f32.mrf.mxu0
        %v1230 = vadd.f32 %v1072, %v1229
        %v1231 = vpop.f32.mrf.mxu0
        %v1232 = vadd.f32 %v1072, %v1231
        %1233 = vmatprep.mubr.f32.mxu0 0.0
        %1234 = vmatmul.mubr.f32.gmra.mxu0 %v1084
        %v1235 = vpop.f32.mrf.mxu0
        %v1236 = vadd.f32 %v1077, %v1235
        %v1237 = vpop.f32.mrf.mxu0
        %v1238 = vadd.f32 %v1077, %v1237
        %1239 = vdwg.mxu0
        %1240 = vmatprep.subr.mxu0 0.0
        %1241 = vmatpush1.msra.mxu0 0.0
        %1242 = vmatprep.subr.mxu0 0.0
        %1243 = vmatpush1.msra.mxu0 0.0
        %1244 = vmatprep.subr.mxu0 0.0
        %1245 = vmatpush1.msra.mxu0 0.0
        %1246 = vmatprep.subr.mxu0 0.0
        %1247 = vmatpush1.msra.mxu0 0.0
        %1248 = vmatprep.subr.mxu0 0.0
        %1249 = vmatpush1.msra.mxu0 0.0
        %1250 = vmatprep.subr.mxu0 0.0
        %1251 = vmatpush1.msra.mxu0 0.0
        %1252 = vmatprep.subr.mxu0 0.0
        %1253 = vmatpush1.msra.mxu0 0.0
        %1254 = vmatprep.subr.mxu0 %v1064
        %1255 = vmatpush1.msra.mxu0 %v1063
        %1256 = vmatprep.subr.mxu0 %v1056
        %1257 = vmatpush1.msra.mxu0 %v1055
        %1258 = vmatprep.subr.mxu0 %v1048
        %1259 = vmatpush1.msra.mxu0 %v1047
        %1260 = vmatprep.subr.mxu0 %v1040
        %1261 = vmatpush1.msra.mxu0 %v1039
        %1262 = vmatprep.subr.mxu0 %v1032
        %1263 = vmatpush1.msra.mxu0 %v1031
        %1264 = vmatprep.subr.mxu0 %v1024
        %1265 = vmatpush1.msra.mxu0 %v1023
        %1266 = vmatprep.subr.mxu0 %v1016
        %1267 = vmatpush1.msra.mxu0 %v1015
        %1268 = vmatprep.subr.mxu0 %v1008
        %1269 = vmatpush1.msra.mxu0 %v1007
        %1270 = vmatprep.subr.mxu0 %v1000
        %1271 = vmatpush1.msra.mxu0 %v999
        %1272 = vmatprep.subr.mxu0 0.0
        %1273 = vmatpush2.msra.mxu0 0.0
        %1274 = vmatprep.subr.mxu0 0.0
        %1275 = vmatpush2.msra.mxu0 0.0
        %1276 = vmatprep.subr.mxu0 0.0
        %1277 = vmatpush2.msra.mxu0 0.0
        %1278 = vmatprep.subr.mxu0 0.0
        %1279 = vmatpush2.msra.mxu0 0.0
        %1280 = vmatprep.subr.mxu0 0.0
        %1281 = vmatpush2.msra.mxu0 0.0
        %1282 = vmatprep.subr.mxu0 0.0
        %1283 = vmatpush2.msra.mxu0 0.0
        %1284 = vmatprep.subr.mxu0 0.0
        %1285 = vmatpush2.msra.mxu0 0.0
        %1286 = vmatprep.subr.mxu0 0.0
        %1287 = vmatpush2.msra.mxu0 0.0
        %1288 = vmatprep.subr.mxu0 0.0
        %1289 = vmatpush2.msra.mxu0 0.0
        %1290 = vmatprep.subr.mxu0 0.0
        %1291 = vmatpush2.msra.mxu0 0.0
        %1292 = vmatprep.subr.mxu0 0.0
        %1293 = vmatpush2.msra.mxu0 0.0
        %1294 = vmatprep.subr.mxu0 0.0
        %1295 = vmatpush2.msra.mxu0 0.0
        %1296 = vmatprep.subr.mxu0 0.0
        %1297 = vmatpush2.msra.mxu0 0.0
        %1298 = vmatprep.subr.mxu0 0.0
        %1299 = vmatpush2.msra.mxu0 0.0
        %1300 = vmatprep.subr.mxu0 0.0
        %1301 = vmatpush2.msra.mxu0 0.0
        %1302 = vmatprep.subr.mxu0 0.0
        %1303 = vmatpush2.msra.mxu0 0.0
        %1304 = vmatprep.mubr.f32.mxu0 0.0
        %1305 = vmatmul.mubr.f32.gmra.mxu0 %v1081
        %v1306 = vpop.f32.mrf.mxu0
        %v1307 = vadd.f32 %v1072, %v1306
        %v1308 = vpop.f32.mrf.mxu0
        %v1309 = vadd.f32 %v1072, %v1308
        %1310 = vmatprep.mubr.f32.mxu0 0.0
        %1311 = vmatmul.mubr.f32.gmra.mxu0 %v1084
        %v1312 = vpop.f32.mrf.mxu0
        %v1313 = vadd.f32 %v1077, %v1312
        %v1314 = vpop.f32.mrf.mxu0
        %v1315 = vadd.f32 %v1077, %v1314
        %1316 = vdwg.mxu0
        %1317 = vmatprep.subr.mxu0 0.0
        %1318 = vmatpush1.msra.mxu0 0.0
        %1319 = vmatprep.subr.mxu0 0.0
        %1320 = vmatpush1.msra.mxu0 0.0
        %1321 = vmatprep.subr.mxu0 0.0
        %1322 = vmatpush1.msra.mxu0 0.0
        %1323 = vmatprep.subr.mxu0 0.0
        %1324 = vmatpush1.msra.mxu0 0.0
        %1325 = vmatprep.subr.mxu0 0.0
        %1326 = vmatpush1.msra.mxu0 0.0
        %1327 = vmatprep.subr.mxu0 0.0
        %1328 = vmatpush1.msra.mxu0 0.0
        %1329 = vmatprep.subr.mxu0 0.0
        %1330 = vmatpush1.msra.mxu0 0.0
        %1331 = vmatprep.subr.mxu0 %v1066
        %1332 = vmatpush1.msra.mxu0 %v1065
        %1333 = vmatprep.subr.mxu0 %v1058
        %1334 = vmatpush1.msra.mxu0 %v1057
        %1335 = vmatprep.subr.mxu0 %v1050
        %1336 = vmatpush1.msra.mxu0 %v1049
        %1337 = vmatprep.subr.mxu0 %v1042
        %1338 = vmatpush1.msra.mxu0 %v1041
        %1339 = vmatprep.subr.mxu0 %v1034
        %1340 = vmatpush1.msra.mxu0 %v1033
        %1341 = vmatprep.subr.mxu0 %v1026
        %1342 = vmatpush1.msra.mxu0 %v1025
        %1343 = vmatprep.subr.mxu0 %v1018
        %1344 = vmatpush1.msra.mxu0 %v1017
        %1345 = vmatprep.subr.mxu0 %v1010
        %1346 = vmatpush1.msra.mxu0 %v1009
        %1347 = vmatprep.subr.mxu0 %v1002
        %1348 = vmatpush1.msra.mxu0 %v1001
        %1349 = vmatprep.subr.mxu0 0.0
        %1350 = vmatpush2.msra.mxu0 0.0
        %1351 = vmatprep.subr.mxu0 0.0
        %1352 = vmatpush2.msra.mxu0 0.0
        %1353 = vmatprep.subr.mxu0 0.0
        %1354 = vmatpush2.msra.mxu0 0.0
        %1355 = vmatprep.subr.mxu0 0.0
        %1356 = vmatpush2.msra.mxu0 0.0
        %1357 = vmatprep.subr.mxu0 0.0
        %1358 = vmatpush2.msra.mxu0 0.0
        %1359 = vmatprep.subr.mxu0 0.0
        %1360 = vmatpush2.msra.mxu0 0.0
        %1361 = vmatprep.subr.mxu0 0.0
        %1362 = vmatpush2.msra.mxu0 0.0
        %1363 = vmatprep.subr.mxu0 0.0
        %1364 = vmatpush2.msra.mxu0 0.0
        %1365 = vmatprep.subr.mxu0 0.0
        %1366 = vmatpush2.msra.mxu0 0.0
        %1367 = vmatprep.subr.mxu0 0.0
        %1368 = vmatpush2.msra.mxu0 0.0
        %1369 = vmatprep.subr.mxu0 0.0
        %1370 = vmatpush2.msra.mxu0 0.0
        %1371 = vmatprep.subr.mxu0 0.0
        %1372 = vmatpush2.msra.mxu0 0.0
        %1373 = vmatprep.subr.mxu0 0.0
        %1374 = vmatpush2.msra.mxu0 0.0
        %1375 = vmatprep.subr.mxu0 0.0
        %1376 = vmatpush2.msra.mxu0 0.0
        %1377 = vmatprep.subr.mxu0 0.0
        %1378 = vmatpush2.msra.mxu0 0.0
        %1379 = vmatprep.subr.mxu0 0.0
        %1380 = vmatpush2.msra.mxu0 0.0
        %1381 = vmatprep.mubr.f32.mxu0 0.0
        %1382 = vmatmul.mubr.f32.gmra.mxu0 %v1081
        %v1383 = vpop.f32.mrf.mxu0
        %v1384 = vadd.f32 %v1072, %v1383
        %v1385 = vpop.f32.mrf.mxu0
        %v1386 = vadd.f32 %v1072, %v1385
        %1387 = vmatprep.mubr.f32.mxu0 0.0
        %1388 = vmatmul.mubr.f32.gmra.mxu0 %v1084
        %v1389 = vpop.f32.mrf.mxu0
        %v1390 = vadd.f32 %v1077, %v1389
        %v1391 = vpop.f32.mrf.mxu0
        %v1392 = vadd.f32 %v1077, %v1391
        %1393 = vdwg.mxu0
        %v1394 = vmax.f32 %v1153, 0.0
        %v1395 = vmax.f32 %v1155, 0.0
        %v1396 = vmax.f32 %v1230, 0.0
        %v1397 = vmax.f32 %v1232, 0.0
        %v1398 = vmax.f32 %v1307, 0.0
        %v1399 = vmax.f32 %v1309, 0.0
        %v1400 = vmax.f32 %v1384, 0.0
        %v1401 = vmax.f32 %v1386, 0.0
        %v1402 = vmax.f32 %v1159, 0.0
        %v1403 = vmax.f32 %v1161, 0.0
        %v1404 = vmax.f32 %v1236, 0.0
        %v1405 = vmax.f32 %v1238, 0.0
        %v1406 = vmax.f32 %v1313, 0.0
        %v1407 = vmax.f32 %v1315, 0.0
        %v1408 = vmax.f32 %v1390, 0.0
        %v1409 = vmax.f32 %v1392, 0.0
        %1410 = vrot.lane.b32.xlu0 %v1394, 33
        %v1411 = vpop.permute.xlu0 %1410
        %1412 = vrot.lane.b32.xlu0 %v1402, 33
        %v1413 = vpop.permute.xlu0 %1412
        %1414 = vrot.lane.b32.xlu0 %v1395, 33
        %v1415 = vpop.permute.xlu0 %1414
        %1416 = vrot.lane.b32.xlu0 %v1403, 33
        %v1417 = vpop.permute.xlu0 %1416
        %1418 = vrot.lane.b32.xlu0 %v1396, 33
        %v1419 = vpop.permute.xlu0 %1418
        %1420 = vrot.lane.b32.xlu0 %v1404, 33
        %v1421 = vpop.permute.xlu0 %1420
        %1422 = vrot.lane.b32.xlu0 %v1397, 33
        %v1423 = vpop.permute.xlu0 %1422
        %1424 = vrot.lane.b32.xlu0 %v1405, 33
        %v1425 = vpop.permute.xlu0 %1424
        %1426 = vrot.lane.b32.xlu0 %v1398, 33
        %v1427 = vpop.permute.xlu0 %1426
        %1428 = vrot.lane.b32.xlu0 %v1406, 33
        %v1429 = vpop.permute.xlu0 %1428
        %1430 = vrot.lane.b32.xlu0 %v1399, 33
        %v1431 = vpop.permute.xlu0 %1430
        %1432 = vrot.lane.b32.xlu0 %v1407, 33
        %v1433 = vpop.permute.xlu0 %1432
        %1434 = vrot.lane.b32.xlu0 %v1400, 33
        %v1435 = vpop.permute.xlu0 %1434
        %1436 = vrot.lane.b32.xlu0 %v1408, 33
        %v1437 = vpop.permute.xlu0 %1436
        %1438 = vrot.lane.b32.xlu0 %v1401, 33
        %v1439 = vpop.permute.xlu0 %1438
        %1440 = vrot.lane.b32.xlu0 %v1409, 33
        %v1441 = vpop.permute.xlu0 %1440
        %v1442 = vsel %vm330, %v1435, %v1439
        %v1443 = vsel %vm330, %v1437, %v1441
        %v1444 = vsel %vm330, %v1431, %v1435
        %v1445 = vsel %vm330, %v1433, %v1437
        %v1446 = vsel %vm330, %v1427, %v1431
        %v1447 = vsel %vm330, %v1429, %v1433
        %v1448 = vsel %vm330, %v1423, %v1427
        %v1449 = vsel %vm330, %v1425, %v1429
        %v1450 = vsel %vm330, %v1419, %v1423
        %v1451 = vsel %vm330, %v1421, %v1425
        %v1452 = vsel %vm330, %v1415, %v1419
        %v1453 = vsel %vm330, %v1417, %v1421
        %v1454 = vsel %vm330, %v1411, %v1415
        %v1455 = vsel %vm330, %v1413, %v1417
        %v1456 = vsel %vm330, %v1439, %v1411
        %v1457 = vsel %vm330, %v1441, %v1413
        %v1458 = vld [vmem:[%s5] sm:$0xff]
        %v1460 = vlaneseq
        %v1461 = vshrl.u32 %v1460, 7
        %v1462 = vsub.s32 0, %v1461
        %v1463 = vrot.slane %v1458, %v1462
        %v1464 = vlaneseq
        %v1465 = vshrl.u32 %v1464, 7
        %v1466 = vsub.s32 1, %v1465
        %v1467 = vrot.slane %v1458, %v1466
        %v1468 = vlaneseq
        %v1469 = vshrl.u32 %v1468, 7
        %v1470 = vsub.s32 2, %v1469
        %v1471 = vrot.slane %v1458, %v1470
        %v1472 = vlaneseq
        %v1473 = vshrl.u32 %v1472, 7
        %v1474 = vsub.s32 3, %v1473
        %v1475 = vrot.slane %v1458, %v1474
        %v1476 = vlaneseq
        %v1477 = vshrl.u32 %v1476, 7
        %v1478 = vsub.s32 4, %v1477
        %v1479 = vrot.slane %v1458, %v1478
        %v1480 = vlaneseq
        %v1481 = vshrl.u32 %v1480, 7
        %v1482 = vsub.s32 5, %v1481
        %v1483 = vrot.slane %v1458, %v1482
        %v1484 = vlaneseq
        %v1485 = vshrl.u32 %v1484, 7
        %v1486 = vsub.s32 6, %v1485
        %v1487 = vrot.slane %v1458, %v1486
        %v1488 = vlaneseq
        %v1489 = vshrl.u32 %v1488, 7
        %v1490 = vsub.s32 7, %v1489
        %v1491 = vrot.slane %v1458, %v1490
        %v1500 = vmul.f32 %v1456, %v1463
        %v1501 = vmul.f32 %v1454, %v1467
        %v1502 = vmul.f32 %v1452, %v1471
        %v1503 = vmul.f32 %v1450, %v1475
        %v1504 = vmul.f32 %v1448, %v1479
        %v1505 = vmul.f32 %v1446, %v1483
        %v1506 = vmul.f32 %v1444, %v1487
        %v1507 = vmul.f32 %v1442, %v1491
        %v1508 = vmul.f32 %v1457, %v1463
        %v1509 = vmul.f32 %v1455, %v1467
        %v1510 = vmul.f32 %v1453, %v1471
        %v1511 = vmul.f32 %v1451, %v1475
        %v1512 = vmul.f32 %v1449, %v1479
        %v1513 = vmul.f32 %v1447, %v1483
        %v1514 = vmul.f32 %v1445, %v1487
        %v1515 = vmul.f32 %v1443, %v1491
        %1516 = vst [vmem:[#allocation3] sm:$0xff] %v1500
        %1517 = vst [vmem:[#allocation3 + $0x8] sm:$0xff] %v1501
        %1518 = vst [vmem:[#allocation3 + $0x10] sm:$0xff] %v1502
        %1519 = vst [vmem:[#allocation3 + $0x18] sm:$0xff] %v1503
        %1520 = vst [vmem:[#allocation3 + $0x20] sm:$0xff] %v1504
        %1521 = vst [vmem:[#allocation3 + $0x28] sm:$0xff] %v1505
        %1522 = vst [vmem:[#allocation3 + $0x30] sm:$0xff] %v1506
        %1523 = vst [vmem:[#allocation3 + $0x38] sm:$0xff] %v1507
        %1524 = vst [vmem:[#allocation3 + $0x40] sm:$0xff] %v1508
        %1525 = vst [vmem:[#allocation3 + $0x48] sm:$0xff] %v1509
        %1526 = vst [vmem:[#allocation3 + $0x50] sm:$0xff] %v1510
        %1527 = vst [vmem:[#allocation3 + $0x58] sm:$0xff] %v1511
        %1528 = vst [vmem:[#allocation3 + $0x60] sm:$0xff] %v1512
        %1529 = vst [vmem:[#allocation3 + $0x68] sm:$0xff] %v1513
        %1530 = vst [vmem:[#allocation3 + $0x70] sm:$0xff] %v1514
        %1531 = vst [vmem:[#allocation3 + $0x78] sm:$0xff] %v1515
        %1532 = vrot.lane.b32.xlu0 %v1394, 32
        %v1533 = vpop.permute.xlu0 %1532
        %1534 = vrot.lane.b32.xlu0 %v1402, 32
        %v1535 = vpop.permute.xlu0 %1534
        %1536 = vrot.lane.b32.xlu0 %v1395, 32
        %v1537 = vpop.permute.xlu0 %1536
        %1538 = vrot.lane.b32.xlu0 %v1403, 32
        %v1539 = vpop.permute.xlu0 %1538
        %1540 = vrot.lane.b32.xlu0 %v1396, 32
        %v1541 = vpop.permute.xlu0 %1540
        %1542 = vrot.lane.b32.xlu0 %v1404, 32
        %v1543 = vpop.permute.xlu0 %1542
        %1544 = vrot.lane.b32.xlu0 %v1397, 32
        %v1545 = vpop.permute.xlu0 %1544
        %1546 = vrot.lane.b32.xlu0 %v1405, 32
        %v1547 = vpop.permute.xlu0 %1546
        %1548 = vrot.lane.b32.xlu0 %v1398, 32
        %v1549 = vpop.permute.xlu0 %1548
        %1550 = vrot.lane.b32.xlu0 %v1406, 32
        %v1551 = vpop.permute.xlu0 %1550
        %1552 = vrot.lane.b32.xlu0 %v1399, 32
        %v1553 = vpop.permute.xlu0 %1552
        %1554 = vrot.lane.b32.xlu0 %v1407, 32
        %v1555 = vpop.permute.xlu0 %1554
        %1556 = vrot.lane.b32.xlu0 %v1400, 32
        %v1557 = vpop.permute.xlu0 %1556
        %1558 = vrot.lane.b32.xlu0 %v1408, 32
        %v1559 = vpop.permute.xlu0 %1558
        %1560 = vrot.lane.b32.xlu0 %v1401, 32
        %v1561 = vpop.permute.xlu0 %1560
        %1562 = vrot.lane.b32.xlu0 %v1409, 32
        %v1563 = vpop.permute.xlu0 %1562
        %v1564 = vsel %vm413, %v1557, %v1561
        %v1565 = vsel %vm413, %v1559, %v1563
        %v1566 = vsel %vm413, %v1553, %v1557
        %v1567 = vsel %vm413, %v1555, %v1559
        %v1568 = vsel %vm413, %v1549, %v1553
        %v1569 = vsel %vm413, %v1551, %v1555
        %v1570 = vsel %vm413, %v1545, %v1549
        %v1571 = vsel %vm413, %v1547, %v1551
        %v1572 = vsel %vm413, %v1541, %v1545
        %v1573 = vsel %vm413, %v1543, %v1547
        %v1574 = vsel %vm413, %v1537, %v1541
        %v1575 = vsel %vm413, %v1539, %v1543
        %v1576 = vsel %vm413, %v1533, %v1537
        %v1577 = vsel %vm413, %v1535, %v1539
        %v1578 = vsel %vm413, %v1561, %v1533
        %v1579 = vsel %vm413, %v1563, %v1535
        %v1580 = vld [vmem:[%s422] sm:$0xff]
        %v1582 = vlaneseq
        %v1583 = vshrl.u32 %v1582, 7
        %v1584 = vsub.s32 0, %v1583
        %v1585 = vrot.slane %v1580, %v1584
        %v1586 = vlaneseq
        %v1587 = vshrl.u32 %v1586, 7
        %v1588 = vsub.s32 1, %v1587
        %v1589 = vrot.slane %v1580, %v1588
        %v1590 = vlaneseq
        %v1591 = vshrl.u32 %v1590, 7
        %v1592 = vsub.s32 2, %v1591
        %v1593 = vrot.slane %v1580, %v1592
        %v1594 = vlaneseq
        %v1595 = vshrl.u32 %v1594, 7
        %v1596 = vsub.s32 3, %v1595
        %v1597 = vrot.slane %v1580, %v1596
        %v1598 = vlaneseq
        %v1599 = vshrl.u32 %v1598, 7
        %v1600 = vsub.s32 4, %v1599
        %v1601 = vrot.slane %v1580, %v1600
        %v1602 = vlaneseq
        %v1603 = vshrl.u32 %v1602, 7
        %v1604 = vsub.s32 5, %v1603
        %v1605 = vrot.slane %v1580, %v1604
        %v1606 = vlaneseq
        %v1607 = vshrl.u32 %v1606, 7
        %v1608 = vsub.s32 6, %v1607
        %v1609 = vrot.slane %v1580, %v1608
        %v1610 = vlaneseq
        %v1611 = vshrl.u32 %v1610, 7
        %v1612 = vsub.s32 7, %v1611
        %v1613 = vrot.slane %v1580, %v1612
        %v1622 = vmul.f32 %v1578, %v1585
        %v1623 = vmul.f32 %v1576, %v1589
        %v1624 = vmul.f32 %v1574, %v1593
        %v1625 = vmul.f32 %v1572, %v1597
        %v1626 = vmul.f32 %v1570, %v1601
        %v1627 = vmul.f32 %v1568, %v1605
        %v1628 = vmul.f32 %v1566, %v1609
        %v1629 = vmul.f32 %v1564, %v1613
        %v1630 = vmul.f32 %v1579, %v1585
        %v1631 = vmul.f32 %v1577, %v1589
        %v1632 = vmul.f32 %v1575, %v1593
        %v1633 = vmul.f32 %v1573, %v1597
        %v1634 = vmul.f32 %v1571, %v1601
        %v1635 = vmul.f32 %v1569, %v1605
        %v1636 = vmul.f32 %v1567, %v1609
        %v1637 = vmul.f32 %v1565, %v1613
        %1638 = vst [vmem:[#allocation3 + $0x80] sm:$0xff] %v1622
        %1639 = vst [vmem:[#allocation3 + $0x88] sm:$0xff] %v1623
        %1640 = vst [vmem:[#allocation3 + $0x90] sm:$0xff] %v1624
        %1641 = vst [vmem:[#allocation3 + $0x98] sm:$0xff] %v1625
        %1642 = vst [vmem:[#allocation3 + $0xa0] sm:$0xff] %v1626
        %1643 = vst [vmem:[#allocation3 + $0xa8] sm:$0xff] %v1627
        %1644 = vst [vmem:[#allocation3 + $0xb0] sm:$0xff] %v1628
        %1645 = vst [vmem:[#allocation3 + $0xb8] sm:$0xff] %v1629
        %1646 = vst [vmem:[#allocation3 + $0xc0] sm:$0xff] %v1630
        %1647 = vst [vmem:[#allocation3 + $0xc8] sm:$0xff] %v1631
        %1648 = vst [vmem:[#allocation3 + $0xd0] sm:$0xff] %v1632
        %1649 = vst [vmem:[#allocation3 + $0xd8] sm:$0xff] %v1633
        %1650 = vst [vmem:[#allocation3 + $0xe0] sm:$0xff] %v1634
        %1651 = vst [vmem:[#allocation3 + $0xe8] sm:$0xff] %v1635
        %1652 = vst [vmem:[#allocation3 + $0xf0] sm:$0xff] %v1636
        %1653 = vst [vmem:[#allocation3 + $0xf8] sm:$0xff] %v1637
        %1654 = vrot.lane.b32.xlu0 %v1394, 31
        %v1655 = vpop.permute.xlu0 %1654
        %1656 = vrot.lane.b32.xlu0 %v1402, 31
        %v1657 = vpop.permute.xlu0 %1656
        %1658 = vrot.lane.b32.xlu0 %v1395, 31
        %v1659 = vpop.permute.xlu0 %1658
        %1660 = vrot.lane.b32.xlu0 %v1403, 31
        %v1661 = vpop.permute.xlu0 %1660
        %1662 = vrot.lane.b32.xlu0 %v1396, 31
        %v1663 = vpop.permute.xlu0 %1662
        %1664 = vrot.lane.b32.xlu0 %v1404, 31
        %v1665 = vpop.permute.xlu0 %1664
        %1666 = vrot.lane.b32.xlu0 %v1397, 31
        %v1667 = vpop.permute.xlu0 %1666
        %1668 = vrot.lane.b32.xlu0 %v1405, 31
        %v1669 = vpop.permute.xlu0 %1668
        %1670 = vrot.lane.b32.xlu0 %v1398, 31
        %v1671 = vpop.permute.xlu0 %1670
        %1672 = vrot.lane.b32.xlu0 %v1406, 31
        %v1673 = vpop.permute.xlu0 %1672
        %1674 = vrot.lane.b32.xlu0 %v1399, 31
        %v1675 = vpop.permute.xlu0 %1674
        %1676 = vrot.lane.b32.xlu0 %v1407, 31
        %v1677 = vpop.permute.xlu0 %1676
        %1678 = vrot.lane.b32.xlu0 %v1400, 31
        %v1679 = vpop.permute.xlu0 %1678
        %1680 = vrot.lane.b32.xlu0 %v1408, 31
        %v1681 = vpop.permute.xlu0 %1680
        %1682 = vrot.lane.b32.xlu0 %v1401, 31
        %v1683 = vpop.permute.xlu0 %1682
        %1684 = vrot.lane.b32.xlu0 %v1409, 31
        %v1685 = vpop.permute.xlu0 %1684
        %v1686 = vsel %vm497, %v1679, %v1683
        %v1687 = vsel %vm497, %v1681, %v1685
        %v1688 = vsel %vm497, %v1675, %v1679
        %v1689 = vsel %vm497, %v1677, %v1681
        %v1690 = vsel %vm497, %v1671, %v1675
        %v1691 = vsel %vm497, %v1673, %v1677
        %v1692 = vsel %vm497, %v1667, %v1671
        %v1693 = vsel %vm497, %v1669, %v1673
        %v1694 = vsel %vm497, %v1663, %v1667
        %v1695 = vsel %vm497, %v1665, %v1669
        %v1696 = vsel %vm497, %v1659, %v1663
        %v1697 = vsel %vm497, %v1661, %v1665
        %v1698 = vsel %vm497, %v1655, %v1659
        %v1699 = vsel %vm497, %v1657, %v1661
        %v1700 = vsel %vm497, %v1683, %v1655
        %v1701 = vsel %vm497, %v1685, %v1657
        %v1702 = vld [vmem:[%s506] sm:$0xff]
        %v1704 = vlaneseq
        %v1705 = vshrl.u32 %v1704, 7
        %v1706 = vsub.s32 0, %v1705
        %v1707 = vrot.slane %v1702, %v1706
        %v1708 = vlaneseq
        %v1709 = vshrl.u32 %v1708, 7
        %v1710 = vsub.s32 1, %v1709
        %v1711 = vrot.slane %v1702, %v1710
        %v1712 = vlaneseq
        %v1713 = vshrl.u32 %v1712, 7
        %v1714 = vsub.s32 2, %v1713
        %v1715 = vrot.slane %v1702, %v1714
        %v1716 = vlaneseq
        %v1717 = vshrl.u32 %v1716, 7
        %v1718 = vsub.s32 3, %v1717
        %v1719 = vrot.slane %v1702, %v1718
        %v1720 = vlaneseq
        %v1721 = vshrl.u32 %v1720, 7
        %v1722 = vsub.s32 4, %v1721
        %v1723 = vrot.slane %v1702, %v1722
        %v1724 = vlaneseq
        %v1725 = vshrl.u32 %v1724, 7
        %v1726 = vsub.s32 5, %v1725
        %v1727 = vrot.slane %v1702, %v1726
        %v1728 = vlaneseq
        %v1729 = vshrl.u32 %v1728, 7
        %v1730 = vsub.s32 6, %v1729
        %v1731 = vrot.slane %v1702, %v1730
        %v1732 = vlaneseq
        %v1733 = vshrl.u32 %v1732, 7
        %v1734 = vsub.s32 7, %v1733
        %v1735 = vrot.slane %v1702, %v1734
        %v1744 = vmul.f32 %v1700, %v1707
        %v1745 = vmul.f32 %v1698, %v1711
        %v1746 = vmul.f32 %v1696, %v1715
        %v1747 = vmul.f32 %v1694, %v1719
        %v1748 = vmul.f32 %v1692, %v1723
        %v1749 = vmul.f32 %v1690, %v1727
        %v1750 = vmul.f32 %v1688, %v1731
        %v1751 = vmul.f32 %v1686, %v1735
        %v1752 = vmul.f32 %v1701, %v1707
        %v1753 = vmul.f32 %v1699, %v1711
        %v1754 = vmul.f32 %v1697, %v1715
        %v1755 = vmul.f32 %v1695, %v1719
        %v1756 = vmul.f32 %v1693, %v1723
        %v1757 = vmul.f32 %v1691, %v1727
        %v1758 = vmul.f32 %v1689, %v1731
        %v1759 = vmul.f32 %v1687, %v1735
        %1760 = vst [vmem:[#allocation3 + $0x100] sm:$0xff] %v1744
        %1761 = vst [vmem:[#allocation3 + $0x108] sm:$0xff] %v1745
        %1762 = vst [vmem:[#allocation3 + $0x110] sm:$0xff] %v1746
        %1763 = vst [vmem:[#allocation3 + $0x118] sm:$0xff] %v1747
        %1764 = vst [vmem:[#allocation3 + $0x120] sm:$0xff] %v1748
        %1765 = vst [vmem:[#allocation3 + $0x128] sm:$0xff] %v1749
        %1766 = vst [vmem:[#allocation3 + $0x130] sm:$0xff] %v1750
        %1767 = vst [vmem:[#allocation3 + $0x138] sm:$0xff] %v1751
        %1768 = vst [vmem:[#allocation3 + $0x140] sm:$0xff] %v1752
        %1769 = vst [vmem:[#allocation3 + $0x148] sm:$0xff] %v1753
        %1770 = vst [vmem:[#allocation3 + $0x150] sm:$0xff] %v1754
        %1771 = vst [vmem:[#allocation3 + $0x158] sm:$0xff] %v1755
        %1772 = vst [vmem:[#allocation3 + $0x160] sm:$0xff] %v1756
        %1773 = vst [vmem:[#allocation3 + $0x168] sm:$0xff] %v1757
        %1774 = vst [vmem:[#allocation3 + $0x170] sm:$0xff] %v1758
        %1775 = vst [vmem:[#allocation3 + $0x178] sm:$0xff] %v1759
        %1776 = vrot.lane.b32.xlu0 %v1394, 1
        %v1777 = vpop.permute.xlu0 %1776
        %1778 = vrot.lane.b32.xlu0 %v1402, 1
        %v1779 = vpop.permute.xlu0 %1778
        %1780 = vrot.lane.b32.xlu0 %v1395, 1
        %v1781 = vpop.permute.xlu0 %1780
        %1782 = vrot.lane.b32.xlu0 %v1403, 1
        %v1783 = vpop.permute.xlu0 %1782
        %1784 = vrot.lane.b32.xlu0 %v1396, 1
        %v1785 = vpop.permute.xlu0 %1784
        %1786 = vrot.lane.b32.xlu0 %v1404, 1
        %v1787 = vpop.permute.xlu0 %1786
        %1788 = vrot.lane.b32.xlu0 %v1397, 1
        %v1789 = vpop.permute.xlu0 %1788
        %1790 = vrot.lane.b32.xlu0 %v1405, 1
        %v1791 = vpop.permute.xlu0 %1790
        %1792 = vrot.lane.b32.xlu0 %v1398, 1
        %v1793 = vpop.permute.xlu0 %1792
        %1794 = vrot.lane.b32.xlu0 %v1406, 1
        %v1795 = vpop.permute.xlu0 %1794
        %1796 = vrot.lane.b32.xlu0 %v1399, 1
        %v1797 = vpop.permute.xlu0 %1796
        %1798 = vrot.lane.b32.xlu0 %v1407, 1
        %v1799 = vpop.permute.xlu0 %1798
        %1800 = vrot.lane.b32.xlu0 %v1400, 1
        %v1801 = vpop.permute.xlu0 %1800
        %1802 = vrot.lane.b32.xlu0 %v1408, 1
        %v1803 = vpop.permute.xlu0 %1802
        %1804 = vrot.lane.b32.xlu0 %v1401, 1
        %v1805 = vpop.permute.xlu0 %1804
        %1806 = vrot.lane.b32.xlu0 %v1409, 1
        %v1807 = vpop.permute.xlu0 %1806
        %v1808 = vsel %vm581, %v1801, %v1805
        %v1809 = vsel %vm581, %v1803, %v1807
        %v1810 = vsel %vm581, %v1797, %v1801
        %v1811 = vsel %vm581, %v1799, %v1803
        %v1812 = vsel %vm581, %v1793, %v1797
        %v1813 = vsel %vm581, %v1795, %v1799
        %v1814 = vsel %vm581, %v1789, %v1793
        %v1815 = vsel %vm581, %v1791, %v1795
        %v1816 = vsel %vm581, %v1785, %v1789
        %v1817 = vsel %vm581, %v1787, %v1791
        %v1818 = vsel %vm581, %v1781, %v1785
        %v1819 = vsel %vm581, %v1783, %v1787
        %v1820 = vsel %vm581, %v1777, %v1781
        %v1821 = vsel %vm581, %v1779, %v1783
        %v1822 = vsel %vm581, %v1805, %v1777
        %v1823 = vsel %vm581, %v1807, %v1779
        %v1824 = vld [vmem:[%s590] sm:$0xff]
        %v1826 = vlaneseq
        %v1827 = vshrl.u32 %v1826, 7
        %v1828 = vsub.s32 0, %v1827
        %v1829 = vrot.slane %v1824, %v1828
        %v1830 = vlaneseq
        %v1831 = vshrl.u32 %v1830, 7
        %v1832 = vsub.s32 1, %v1831
        %v1833 = vrot.slane %v1824, %v1832
        %v1834 = vlaneseq
        %v1835 = vshrl.u32 %v1834, 7
        %v1836 = vsub.s32 2, %v1835
        %v1837 = vrot.slane %v1824, %v1836
        %v1838 = vlaneseq
        %v1839 = vshrl.u32 %v1838, 7
        %v1840 = vsub.s32 3, %v1839
        %v1841 = vrot.slane %v1824, %v1840
        %v1842 = vlaneseq
        %v1843 = vshrl.u32 %v1842, 7
        %v1844 = vsub.s32 4, %v1843
        %v1845 = vrot.slane %v1824, %v1844
        %v1846 = vlaneseq
        %v1847 = vshrl.u32 %v1846, 7
        %v1848 = vsub.s32 5, %v1847
        %v1849 = vrot.slane %v1824, %v1848
        %v1850 = vlaneseq
        %v1851 = vshrl.u32 %v1850, 7
        %v1852 = vsub.s32 6, %v1851
        %v1853 = vrot.slane %v1824, %v1852
        %v1854 = vlaneseq
        %v1855 = vshrl.u32 %v1854, 7
        %v1856 = vsub.s32 7, %v1855
        %v1857 = vrot.slane %v1824, %v1856
        %v1866 = vmul.f32 %v1822, %v1829
        %v1867 = vmul.f32 %v1820, %v1833
        %v1868 = vmul.f32 %v1818, %v1837
        %v1869 = vmul.f32 %v1816, %v1841
        %v1870 = vmul.f32 %v1814, %v1845
        %v1871 = vmul.f32 %v1812, %v1849
        %v1872 = vmul.f32 %v1810, %v1853
        %v1873 = vmul.f32 %v1808, %v1857
        %v1874 = vmul.f32 %v1823, %v1829
        %v1875 = vmul.f32 %v1821, %v1833
        %v1876 = vmul.f32 %v1819, %v1837
        %v1877 = vmul.f32 %v1817, %v1841
        %v1878 = vmul.f32 %v1815, %v1845
        %v1879 = vmul.f32 %v1813, %v1849
        %v1880 = vmul.f32 %v1811, %v1853
        %v1881 = vmul.f32 %v1809, %v1857
        %1882 = vst [vmem:[#allocation3 + $0x180] sm:$0xff] %v1866
        %1883 = vst [vmem:[#allocation3 + $0x188] sm:$0xff] %v1867
        %1884 = vst [vmem:[#allocation3 + $0x190] sm:$0xff] %v1868
        %1885 = vst [vmem:[#allocation3 + $0x198] sm:$0xff] %v1869
        %1886 = vst [vmem:[#allocation3 + $0x1a0] sm:$0xff] %v1870
        %1887 = vst [vmem:[#allocation3 + $0x1a8] sm:$0xff] %v1871
        %1888 = vst [vmem:[#allocation3 + $0x1b0] sm:$0xff] %v1872
        %1889 = vst [vmem:[#allocation3 + $0x1b8] sm:$0xff] %v1873
        %1890 = vst [vmem:[#allocation3 + $0x1c0] sm:$0xff] %v1874
        %1891 = vst [vmem:[#allocation3 + $0x1c8] sm:$0xff] %v1875
        %1892 = vst [vmem:[#allocation3 + $0x1d0] sm:$0xff] %v1876
        %1893 = vst [vmem:[#allocation3 + $0x1d8] sm:$0xff] %v1877
        %1894 = vst [vmem:[#allocation3 + $0x1e0] sm:$0xff] %v1878
        %1895 = vst [vmem:[#allocation3 + $0x1e8] sm:$0xff] %v1879
        %1896 = vst [vmem:[#allocation3 + $0x1f0] sm:$0xff] %v1880
        %1897 = vst [vmem:[#allocation3 + $0x1f8] sm:$0xff] %v1881
        %1898 = vst [vmem:[#allocation3 + $0x200] sm:$0xff] %v1394
        %1899 = vst [vmem:[#allocation3 + $0x208] sm:$0xff] %v1395
        %1900 = vst [vmem:[#allocation3 + $0x210] sm:$0xff] %v1396
        %1901 = vst [vmem:[#allocation3 + $0x218] sm:$0xff] %v1397
        %1902 = vst [vmem:[#allocation3 + $0x220] sm:$0xff] %v1398
        %1903 = vst [vmem:[#allocation3 + $0x228] sm:$0xff] %v1399
        %1904 = vst [vmem:[#allocation3 + $0x230] sm:$0xff] %v1400
        %1905 = vst [vmem:[#allocation3 + $0x238] sm:$0xff] %v1401
        %1906 = vst [vmem:[#allocation3 + $0x240] sm:$0xff] %v1402
        %1907 = vst [vmem:[#allocation3 + $0x248] sm:$0xff] %v1403
        %1908 = vst [vmem:[#allocation3 + $0x250] sm:$0xff] %v1404
        %1909 = vst [vmem:[#allocation3 + $0x258] sm:$0xff] %v1405
        %1910 = vst [vmem:[#allocation3 + $0x260] sm:$0xff] %v1406
        %1911 = vst [vmem:[#allocation3 + $0x268] sm:$0xff] %v1407
        %1912 = vst [vmem:[#allocation3 + $0x270] sm:$0xff] %v1408
        %1913 = vst [vmem:[#allocation3 + $0x278] sm:$0xff] %v1409
        %1914 = vrot.lane.b32.xlu0 %v1394, 127
        %v1915 = vpop.permute.xlu0 %1914
        %1916 = vrot.lane.b32.xlu0 %v1402, 127
        %v1917 = vpop.permute.xlu0 %1916
        %1918 = vrot.lane.b32.xlu0 %v1395, 127
        %v1919 = vpop.permute.xlu0 %1918
        %1920 = vrot.lane.b32.xlu0 %v1403, 127
        %v1921 = vpop.permute.xlu0 %1920
        %1922 = vrot.lane.b32.xlu0 %v1396, 127
        %v1923 = vpop.permute.xlu0 %1922
        %1924 = vrot.lane.b32.xlu0 %v1404, 127
        %v1925 = vpop.permute.xlu0 %1924
        %1926 = vrot.lane.b32.xlu0 %v1397, 127
        %v1927 = vpop.permute.xlu0 %1926
        %1928 = vrot.lane.b32.xlu0 %v1405, 127
        %v1929 = vpop.permute.xlu0 %1928
        %1930 = vrot.lane.b32.xlu0 %v1398, 127
        %v1931 = vpop.permute.xlu0 %1930
        %1932 = vrot.lane.b32.xlu0 %v1406, 127
        %v1933 = vpop.permute.xlu0 %1932
        %1934 = vrot.lane.b32.xlu0 %v1399, 127
        %v1935 = vpop.permute.xlu0 %1934
        %1936 = vrot.lane.b32.xlu0 %v1407, 127
        %v1937 = vpop.permute.xlu0 %1936
        %1938 = vrot.lane.b32.xlu0 %v1400, 127
        %v1939 = vpop.permute.xlu0 %1938
        %1940 = vrot.lane.b32.xlu0 %v1408, 127
        %v1941 = vpop.permute.xlu0 %1940
        %1942 = vrot.lane.b32.xlu0 %v1401, 127
        %v1943 = vpop.permute.xlu0 %1942
        %1944 = vrot.lane.b32.xlu0 %v1409, 127
        %v1945 = vpop.permute.xlu0 %1944
        %v1946 = vsel %vm673, %v1939, %v1943
        %v1947 = vsel %vm673, %v1941, %v1945
        %v1948 = vsel %vm673, %v1935, %v1939
        %v1949 = vsel %vm673, %v1937, %v1941
        %v1950 = vsel %vm673, %v1931, %v1935
        %v1951 = vsel %vm673, %v1933, %v1937
        %v1952 = vsel %vm673, %v1927, %v1931
        %v1953 = vsel %vm673, %v1929, %v1933
        %v1954 = vsel %vm673, %v1923, %v1927
        %v1955 = vsel %vm673, %v1925, %v1929
        %v1956 = vsel %vm673, %v1919, %v1923
        %v1957 = vsel %vm673, %v1921, %v1925
        %v1958 = vsel %vm673, %v1915, %v1919
        %v1959 = vsel %vm673, %v1917, %v1921
        %v1960 = vsel %vm673, %v1943, %v1915
        %v1961 = vsel %vm673, %v1945, %v1917
        %v1962 = vld [vmem:[%s682] sm:$0xff]
        %v1964 = vlaneseq
        %v1965 = vshrl.u32 %v1964, 7
        %v1966 = vsub.s32 0, %v1965
        %v1967 = vrot.slane %v1962, %v1966
        %v1968 = vlaneseq
        %v1969 = vshrl.u32 %v1968, 7
        %v1970 = vsub.s32 1, %v1969
        %v1971 = vrot.slane %v1962, %v1970
        %v1972 = vlaneseq
        %v1973 = vshrl.u32 %v1972, 7
        %v1974 = vsub.s32 2, %v1973
        %v1975 = vrot.slane %v1962, %v1974
        %v1976 = vlaneseq
        %v1977 = vshrl.u32 %v1976, 7
        %v1978 = vsub.s32 3, %v1977
        %v1979 = vrot.slane %v1962, %v1978
        %v1980 = vlaneseq
        %v1981 = vshrl.u32 %v1980, 7
        %v1982 = vsub.s32 4, %v1981
        %v1983 = vrot.slane %v1962, %v1982
        %v1984 = vlaneseq
        %v1985 = vshrl.u32 %v1984, 7
        %v1986 = vsub.s32 5, %v1985
        %v1987 = vrot.slane %v1962, %v1986
        %v1988 = vlaneseq
        %v1989 = vshrl.u32 %v1988, 7
        %v1990 = vsub.s32 6, %v1989
        %v1991 = vrot.slane %v1962, %v1990
        %v1992 = vlaneseq
        %v1993 = vshrl.u32 %v1992, 7
        %v1994 = vsub.s32 7, %v1993
        %v1995 = vrot.slane %v1962, %v1994
        %v2004 = vmul.f32 %v1958, %v1967
        %v2005 = vmul.f32 %v1956, %v1971
        %v2006 = vmul.f32 %v1954, %v1975
        %v2007 = vmul.f32 %v1952, %v1979
        %v2008 = vmul.f32 %v1950, %v1983
        %v2009 = vmul.f32 %v1948, %v1987
        %v2010 = vmul.f32 %v1946, %v1991
        %v2011 = vmul.f32 %v1960, %v1995
        %v2012 = vmul.f32 %v1959, %v1967
        %v2013 = vmul.f32 %v1957, %v1971
        %v2014 = vmul.f32 %v1955, %v1975
        %v2015 = vmul.f32 %v1953, %v1979
        %v2016 = vmul.f32 %v1951, %v1983
        %v2017 = vmul.f32 %v1949, %v1987
        %v2018 = vmul.f32 %v1947, %v1991
        %v2019 = vmul.f32 %v1961, %v1995
        %2020 = vst [vmem:[#allocation3 + $0x280] sm:$0xff] %v2004
        %2021 = vst [vmem:[#allocation3 + $0x288] sm:$0xff] %v2005
        %2022 = vst [vmem:[#allocation3 + $0x290] sm:$0xff] %v2006
        %2023 = vst [vmem:[#allocation3 + $0x298] sm:$0xff] %v2007
        %2024 = vst [vmem:[#allocation3 + $0x2a0] sm:$0xff] %v2008
        %2025 = vst [vmem:[#allocation3 + $0x2a8] sm:$0xff] %v2009
        %2026 = vst [vmem:[#allocation3 + $0x2b0] sm:$0xff] %v2010
        %2027 = vst [vmem:[#allocation3 + $0x2b8] sm:$0xff] %v2011
        %2028 = vst [vmem:[#allocation3 + $0x2c0] sm:$0xff] %v2012
        %2029 = vst [vmem:[#allocation3 + $0x2c8] sm:$0xff] %v2013
        %2030 = vst [vmem:[#allocation3 + $0x2d0] sm:$0xff] %v2014
        %2031 = vst [vmem:[#allocation3 + $0x2d8] sm:$0xff] %v2015
        %2032 = vst [vmem:[#allocation3 + $0x2e0] sm:$0xff] %v2016
        %2033 = vst [vmem:[#allocation3 + $0x2e8] sm:$0xff] %v2017
        %2034 = vst [vmem:[#allocation3 + $0x2f0] sm:$0xff] %v2018
        %2035 = vst [vmem:[#allocation3 + $0x2f8] sm:$0xff] %v2019
        %2036 = vrot.lane.b32.xlu0 %v1394, 97
        %v2037 = vpop.permute.xlu0 %2036
        %2038 = vrot.lane.b32.xlu0 %v1402, 97
        %v2039 = vpop.permute.xlu0 %2038
        %2040 = vrot.lane.b32.xlu0 %v1395, 97
        %v2041 = vpop.permute.xlu0 %2040
        %2042 = vrot.lane.b32.xlu0 %v1403, 97
        %v2043 = vpop.permute.xlu0 %2042
        %2044 = vrot.lane.b32.xlu0 %v1396, 97
        %v2045 = vpop.permute.xlu0 %2044
        %2046 = vrot.lane.b32.xlu0 %v1404, 97
        %v2047 = vpop.permute.xlu0 %2046
        %2048 = vrot.lane.b32.xlu0 %v1397, 97
        %v2049 = vpop.permute.xlu0 %2048
        %2050 = vrot.lane.b32.xlu0 %v1405, 97
        %v2051 = vpop.permute.xlu0 %2050
        %2052 = vrot.lane.b32.xlu0 %v1398, 97
        %v2053 = vpop.permute.xlu0 %2052
        %2054 = vrot.lane.b32.xlu0 %v1406, 97
        %v2055 = vpop.permute.xlu0 %2054
        %2056 = vrot.lane.b32.xlu0 %v1399, 97
        %v2057 = vpop.permute.xlu0 %2056
        %2058 = vrot.lane.b32.xlu0 %v1407, 97
        %v2059 = vpop.permute.xlu0 %2058
        %2060 = vrot.lane.b32.xlu0 %v1400, 97
        %v2061 = vpop.permute.xlu0 %2060
        %2062 = vrot.lane.b32.xlu0 %v1408, 97
        %v2063 = vpop.permute.xlu0 %2062
        %2064 = vrot.lane.b32.xlu0 %v1401, 97
        %v2065 = vpop.permute.xlu0 %2064
        %2066 = vrot.lane.b32.xlu0 %v1409, 97
        %v2067 = vpop.permute.xlu0 %2066
        %v2068 = vsel %vm757, %v2061, %v2065
        %v2069 = vsel %vm757, %v2063, %v2067
        %v2070 = vsel %vm757, %v2057, %v2061
        %v2071 = vsel %vm757, %v2059, %v2063
        %v2072 = vsel %vm757, %v2053, %v2057
        %v2073 = vsel %vm757, %v2055, %v2059
        %v2074 = vsel %vm757, %v2049, %v2053
        %v2075 = vsel %vm757, %v2051, %v2055
        %v2076 = vsel %vm757, %v2045, %v2049
        %v2077 = vsel %vm757, %v2047, %v2051
        %v2078 = vsel %vm757, %v2041, %v2045
        %v2079 = vsel %vm757, %v2043, %v2047
        %v2080 = vsel %vm757, %v2037, %v2041
        %v2081 = vsel %vm757, %v2039, %v2043
        %v2082 = vsel %vm757, %v2065, %v2037
        %v2083 = vsel %vm757, %v2067, %v2039
        %v2084 = vld [vmem:[%s766] sm:$0xff]
        %v2086 = vlaneseq
        %v2087 = vshrl.u32 %v2086, 7
        %v2088 = vsub.s32 0, %v2087
        %v2089 = vrot.slane %v2084, %v2088
        %v2090 = vlaneseq
        %v2091 = vshrl.u32 %v2090, 7
        %v2092 = vsub.s32 1, %v2091
        %v2093 = vrot.slane %v2084, %v2092
        %v2094 = vlaneseq
        %v2095 = vshrl.u32 %v2094, 7
        %v2096 = vsub.s32 2, %v2095
        %v2097 = vrot.slane %v2084, %v2096
        %v2098 = vlaneseq
        %v2099 = vshrl.u32 %v2098, 7
        %v2100 = vsub.s32 3, %v2099
        %v2101 = vrot.slane %v2084, %v2100
        %v2102 = vlaneseq
        %v2103 = vshrl.u32 %v2102, 7
        %v2104 = vsub.s32 4, %v2103
        %v2105 = vrot.slane %v2084, %v2104
        %v2106 = vlaneseq
        %v2107 = vshrl.u32 %v2106, 7
        %v2108 = vsub.s32 5, %v2107
        %v2109 = vrot.slane %v2084, %v2108
        %v2110 = vlaneseq
        %v2111 = vshrl.u32 %v2110, 7
        %v2112 = vsub.s32 6, %v2111
        %v2113 = vrot.slane %v2084, %v2112
        %v2114 = vlaneseq
        %v2115 = vshrl.u32 %v2114, 7
        %v2116 = vsub.s32 7, %v2115
        %v2117 = vrot.slane %v2084, %v2116
        %v2126 = vmul.f32 %v2080, %v2089
        %v2127 = vmul.f32 %v2078, %v2093
        %v2128 = vmul.f32 %v2076, %v2097
        %v2129 = vmul.f32 %v2074, %v2101
        %v2130 = vmul.f32 %v2072, %v2105
        %v2131 = vmul.f32 %v2070, %v2109
        %v2132 = vmul.f32 %v2068, %v2113
        %v2133 = vmul.f32 %v2082, %v2117
        %v2134 = vmul.f32 %v2081, %v2089
        %v2135 = vmul.f32 %v2079, %v2093
        %v2136 = vmul.f32 %v2077, %v2097
        %v2137 = vmul.f32 %v2075, %v2101
        %v2138 = vmul.f32 %v2073, %v2105
        %v2139 = vmul.f32 %v2071, %v2109
        %v2140 = vmul.f32 %v2069, %v2113
        %v2141 = vmul.f32 %v2083, %v2117
        %2142 = vst [vmem:[#allocation3 + $0x300] sm:$0xff] %v2126
        %2143 = vst [vmem:[#allocation3 + $0x308] sm:$0xff] %v2127
        %2144 = vst [vmem:[#allocation3 + $0x310] sm:$0xff] %v2128
        %2145 = vst [vmem:[#allocation3 + $0x318] sm:$0xff] %v2129
        %2146 = vst [vmem:[#allocation3 + $0x320] sm:$0xff] %v2130
        %2147 = vst [vmem:[#allocation3 + $0x328] sm:$0xff] %v2131
        %2148 = vst [vmem:[#allocation3 + $0x330] sm:$0xff] %v2132
        %2149 = vst [vmem:[#allocation3 + $0x338] sm:$0xff] %v2133
        %2150 = vst [vmem:[#allocation3 + $0x340] sm:$0xff] %v2134
        %2151 = vst [vmem:[#allocation3 + $0x348] sm:$0xff] %v2135
        %2152 = vst [vmem:[#allocation3 + $0x350] sm:$0xff] %v2136
        %2153 = vst [vmem:[#allocation3 + $0x358] sm:$0xff] %v2137
        %2154 = vst [vmem:[#allocation3 + $0x360] sm:$0xff] %v2138
        %2155 = vst [vmem:[#allocation3 + $0x368] sm:$0xff] %v2139
        %2156 = vst [vmem:[#allocation3 + $0x370] sm:$0xff] %v2140
        %2157 = vst [vmem:[#allocation3 + $0x378] sm:$0xff] %v2141
        %2158 = vrot.lane.b32.xlu0 %v1394, 96
        %v2159 = vpop.permute.xlu0 %2158
        %2160 = vrot.lane.b32.xlu0 %v1402, 96
        %v2161 = vpop.permute.xlu0 %2160
        %2162 = vrot.lane.b32.xlu0 %v1395, 96
        %v2163 = vpop.permute.xlu0 %2162
        %2164 = vrot.lane.b32.xlu0 %v1403, 96
        %v2165 = vpop.permute.xlu0 %2164
        %2166 = vrot.lane.b32.xlu0 %v1396, 96
        %v2167 = vpop.permute.xlu0 %2166
        %2168 = vrot.lane.b32.xlu0 %v1404, 96
        %v2169 = vpop.permute.xlu0 %2168
        %2170 = vrot.lane.b32.xlu0 %v1397, 96
        %v2171 = vpop.permute.xlu0 %2170
        %2172 = vrot.lane.b32.xlu0 %v1405, 96
        %v2173 = vpop.permute.xlu0 %2172
        %2174 = vrot.lane.b32.xlu0 %v1398, 96
        %v2175 = vpop.permute.xlu0 %2174
        %2176 = vrot.lane.b32.xlu0 %v1406, 96
        %v2177 = vpop.permute.xlu0 %2176
        %2178 = vrot.lane.b32.xlu0 %v1399, 96
        %v2179 = vpop.permute.xlu0 %2178
        %2180 = vrot.lane.b32.xlu0 %v1407, 96
        %v2181 = vpop.permute.xlu0 %2180
        %2182 = vrot.lane.b32.xlu0 %v1400, 96
        %v2183 = vpop.permute.xlu0 %2182
        %2184 = vrot.lane.b32.xlu0 %v1408, 96
        %v2185 = vpop.permute.xlu0 %2184
        %2186 = vrot.lane.b32.xlu0 %v1401, 96
        %v2187 = vpop.permute.xlu0 %2186
        %2188 = vrot.lane.b32.xlu0 %v1409, 96
        %v2189 = vpop.permute.xlu0 %2188
        %v2190 = vsel %vm841, %v2183, %v2187
        %v2191 = vsel %vm841, %v2185, %v2189
        %v2192 = vsel %vm841, %v2179, %v2183
        %v2193 = vsel %vm841, %v2181, %v2185
        %v2194 = vsel %vm841, %v2175, %v2179
        %v2195 = vsel %vm841, %v2177, %v2181
        %v2196 = vsel %vm841, %v2171, %v2175
        %v2197 = vsel %vm841, %v2173, %v2177
        %v2198 = vsel %vm841, %v2167, %v2171
        %v2199 = vsel %vm841, %v2169, %v2173
        %v2200 = vsel %vm841, %v2163, %v2167
        %v2201 = vsel %vm841, %v2165, %v2169
        %v2202 = vsel %vm841, %v2159, %v2163
        %v2203 = vsel %vm841, %v2161, %v2165
        %v2204 = vsel %vm841, %v2187, %v2159
        %v2205 = vsel %vm841, %v2189, %v2161
        %v2206 = vld [vmem:[%s850] sm:$0xff]
        %v2208 = vlaneseq
        %v2209 = vshrl.u32 %v2208, 7
        %v2210 = vsub.s32 0, %v2209
        %v2211 = vrot.slane %v2206, %v2210
        %v2212 = vlaneseq
        %v2213 = vshrl.u32 %v2212, 7
        %v2214 = vsub.s32 1, %v2213
        %v2215 = vrot.slane %v2206, %v2214
        %v2216 = vlaneseq
        %v2217 = vshrl.u32 %v2216, 7
        %v2218 = vsub.s32 2, %v2217
        %v2219 = vrot.slane %v2206, %v2218
        %v2220 = vlaneseq
        %v2221 = vshrl.u32 %v2220, 7
        %v2222 = vsub.s32 3, %v2221
        %v2223 = vrot.slane %v2206, %v2222
        %v2224 = vlaneseq
        %v2225 = vshrl.u32 %v2224, 7
        %v2226 = vsub.s32 4, %v2225
        %v2227 = vrot.slane %v2206, %v2226
        %v2228 = vlaneseq
        %v2229 = vshrl.u32 %v2228, 7
        %v2230 = vsub.s32 5, %v2229
        %v2231 = vrot.slane %v2206, %v2230
        %v2232 = vlaneseq
        %v2233 = vshrl.u32 %v2232, 7
        %v2234 = vsub.s32 6, %v2233
        %v2235 = vrot.slane %v2206, %v2234
        %v2236 = vlaneseq
        %v2237 = vshrl.u32 %v2236, 7
        %v2238 = vsub.s32 7, %v2237
        %v2239 = vrot.slane %v2206, %v2238
        %v2248 = vmul.f32 %v2202, %v2211
        %v2249 = vmul.f32 %v2200, %v2215
        %v2250 = vmul.f32 %v2198, %v2219
        %v2251 = vmul.f32 %v2196, %v2223
        %v2252 = vmul.f32 %v2194, %v2227
        %v2253 = vmul.f32 %v2192, %v2231
        %v2254 = vmul.f32 %v2190, %v2235
        %v2255 = vmul.f32 %v2204, %v2239
        %v2256 = vmul.f32 %v2203, %v2211
        %v2257 = vmul.f32 %v2201, %v2215
        %v2258 = vmul.f32 %v2199, %v2219
        %v2259 = vmul.f32 %v2197, %v2223
        %v2260 = vmul.f32 %v2195, %v2227
        %v2261 = vmul.f32 %v2193, %v2231
        %v2262 = vmul.f32 %v2191, %v2235
        %v2263 = vmul.f32 %v2205, %v2239
        %2264 = vst [vmem:[#allocation3 + $0x380] sm:$0xff] %v2248
        %2265 = vst [vmem:[#allocation3 + $0x388] sm:$0xff] %v2249
        %2266 = vst [vmem:[#allocation3 + $0x390] sm:$0xff] %v2250
        %2267 = vst [vmem:[#allocation3 + $0x398] sm:$0xff] %v2251
        %2268 = vst [vmem:[#allocation3 + $0x3a0] sm:$0xff] %v2252
        %2269 = vst [vmem:[#allocation3 + $0x3a8] sm:$0xff] %v2253
        %2270 = vst [vmem:[#allocation3 + $0x3b0] sm:$0xff] %v2254
        %2271 = vst [vmem:[#allocation3 + $0x3b8] sm:$0xff] %v2255
        %2272 = vst [vmem:[#allocation3 + $0x3c0] sm:$0xff] %v2256
        %2273 = vst [vmem:[#allocation3 + $0x3c8] sm:$0xff] %v2257
        %2274 = vst [vmem:[#allocation3 + $0x3d0] sm:$0xff] %v2258
        %2275 = vst [vmem:[#allocation3 + $0x3d8] sm:$0xff] %v2259
        %2276 = vst [vmem:[#allocation3 + $0x3e0] sm:$0xff] %v2260
        %2277 = vst [vmem:[#allocation3 + $0x3e8] sm:$0xff] %v2261
        %2278 = vst [vmem:[#allocation3 + $0x3f0] sm:$0xff] %v2262
        %2279 = vst [vmem:[#allocation3 + $0x3f8] sm:$0xff] %v2263
        %2280 = vrot.lane.b32.xlu0 %v1394, 95
        %v2281 = vpop.permute.xlu0 %2280
        %2282 = vrot.lane.b32.xlu0 %v1402, 95
        %v2283 = vpop.permute.xlu0 %2282
        %2284 = vrot.lane.b32.xlu0 %v1395, 95
        %v2285 = vpop.permute.xlu0 %2284
        %2286 = vrot.lane.b32.xlu0 %v1403, 95
        %v2287 = vpop.permute.xlu0 %2286
        %2288 = vrot.lane.b32.xlu0 %v1396, 95
        %v2289 = vpop.permute.xlu0 %2288
        %2290 = vrot.lane.b32.xlu0 %v1404, 95
        %v2291 = vpop.permute.xlu0 %2290
        %2292 = vrot.lane.b32.xlu0 %v1397, 95
        %v2293 = vpop.permute.xlu0 %2292
        %2294 = vrot.lane.b32.xlu0 %v1405, 95
        %v2295 = vpop.permute.xlu0 %2294
        %2296 = vrot.lane.b32.xlu0 %v1398, 95
        %v2297 = vpop.permute.xlu0 %2296
        %2298 = vrot.lane.b32.xlu0 %v1406, 95
        %v2299 = vpop.permute.xlu0 %2298
        %2300 = vrot.lane.b32.xlu0 %v1399, 95
        %v2301 = vpop.permute.xlu0 %2300
        %2302 = vrot.lane.b32.xlu0 %v1407, 95
        %v2303 = vpop.permute.xlu0 %2302
        %2304 = vrot.lane.b32.xlu0 %v1400, 95
        %v2305 = vpop.permute.xlu0 %2304
        %2306 = vrot.lane.b32.xlu0 %v1408, 95
        %v2307 = vpop.permute.xlu0 %2306
        %2308 = vrot.lane.b32.xlu0 %v1401, 95
        %v2309 = vpop.permute.xlu0 %2308
        %2310 = vrot.lane.b32.xlu0 %v1409, 95
        %v2311 = vpop.permute.xlu0 %2310
        %v2312 = vsel %vm925, %v2305, %v2309
        %v2313 = vsel %vm925, %v2307, %v2311
        %v2314 = vsel %vm925, %v2301, %v2305
        %v2315 = vsel %vm925, %v2303, %v2307
        %v2316 = vsel %vm925, %v2297, %v2301
        %v2317 = vsel %vm925, %v2299, %v2303
        %v2318 = vsel %vm925, %v2293, %v2297
        %v2319 = vsel %vm925, %v2295, %v2299
        %v2320 = vsel %vm925, %v2289, %v2293
        %v2321 = vsel %vm925, %v2291, %v2295
        %v2322 = vsel %vm925, %v2285, %v2289
        %v2323 = vsel %vm925, %v2287, %v2291
        %v2324 = vsel %vm925, %v2281, %v2285
        %v2325 = vsel %vm925, %v2283, %v2287
        %v2326 = vsel %vm925, %v2309, %v2281
        %v2327 = vsel %vm925, %v2311, %v2283
        %v2328 = vld [vmem:[%s934] sm:$0xff]
        %v2330 = vlaneseq
        %v2331 = vshrl.u32 %v2330, 7
        %v2332 = vsub.s32 0, %v2331
        %v2333 = vrot.slane %v2328, %v2332
        %v2334 = vlaneseq
        %v2335 = vshrl.u32 %v2334, 7
        %v2336 = vsub.s32 1, %v2335
        %v2337 = vrot.slane %v2328, %v2336
        %v2338 = vlaneseq
        %v2339 = vshrl.u32 %v2338, 7
        %v2340 = vsub.s32 2, %v2339
        %v2341 = vrot.slane %v2328, %v2340
        %v2342 = vlaneseq
        %v2343 = vshrl.u32 %v2342, 7
        %v2344 = vsub.s32 3, %v2343
        %v2345 = vrot.slane %v2328, %v2344
        %v2346 = vlaneseq
        %v2347 = vshrl.u32 %v2346, 7
        %v2348 = vsub.s32 4, %v2347
        %v2349 = vrot.slane %v2328, %v2348
        %v2350 = vlaneseq
        %v2351 = vshrl.u32 %v2350, 7
        %v2352 = vsub.s32 5, %v2351
        %v2353 = vrot.slane %v2328, %v2352
        %v2354 = vlaneseq
        %v2355 = vshrl.u32 %v2354, 7
        %v2356 = vsub.s32 6, %v2355
        %v2357 = vrot.slane %v2328, %v2356
        %v2358 = vlaneseq
        %v2359 = vshrl.u32 %v2358, 7
        %v2360 = vsub.s32 7, %v2359
        %v2361 = vrot.slane %v2328, %v2360
        %v2370 = vmul.f32 %v2324, %v2333
        %v2371 = vmul.f32 %v2322, %v2337
        %v2372 = vmul.f32 %v2320, %v2341
        %v2373 = vmul.f32 %v2318, %v2345
        %v2374 = vmul.f32 %v2316, %v2349
        %v2375 = vmul.f32 %v2314, %v2353
        %v2376 = vmul.f32 %v2312, %v2357
        %v2377 = vmul.f32 %v2326, %v2361
        %v2378 = vmul.f32 %v2325, %v2333
        %v2379 = vmul.f32 %v2323, %v2337
        %v2380 = vmul.f32 %v2321, %v2341
        %v2381 = vmul.f32 %v2319, %v2345
        %v2382 = vmul.f32 %v2317, %v2349
        %v2383 = vmul.f32 %v2315, %v2353
        %v2384 = vmul.f32 %v2313, %v2357
        %v2385 = vmul.f32 %v2327, %v2361
        %2386 = vst [vmem:[#allocation3 + $0x400] sm:$0xff] %v2370
        %2387 = vst [vmem:[#allocation3 + $0x408] sm:$0xff] %v2371
        %2388 = vst [vmem:[#allocation3 + $0x410] sm:$0xff] %v2372
        %2389 = vst [vmem:[#allocation3 + $0x418] sm:$0xff] %v2373
        %2390 = vst [vmem:[#allocation3 + $0x420] sm:$0xff] %v2374
        %2391 = vst [vmem:[#allocation3 + $0x428] sm:$0xff] %v2375
        %2392 = vst [vmem:[#allocation3 + $0x430] sm:$0xff] %v2376
        %2393 = vst [vmem:[#allocation3 + $0x438] sm:$0xff] %v2377
        %2394 = vst [vmem:[#allocation3 + $0x440] sm:$0xff] %v2378
        %2395 = vst [vmem:[#allocation3 + $0x448] sm:$0xff] %v2379
        %2396 = vst [vmem:[#allocation3 + $0x450] sm:$0xff] %v2380
        %2397 = vst [vmem:[#allocation3 + $0x458] sm:$0xff] %v2381
        %2398 = vst [vmem:[#allocation3 + $0x460] sm:$0xff] %v2382
        %2399 = vst [vmem:[#allocation3 + $0x468] sm:$0xff] %v2383
        %2400 = vst [vmem:[#allocation3 + $0x470] sm:$0xff] %v2384
        %2401 = vst [vmem:[#allocation3 + $0x478] sm:$0xff] %v2385
        %v2402 = vld [vmem:[%s3] sm:$0xff]
        %v2403 = vld [vmem:[%s3 + $0x8] sm:$0xff]
        %v2404 = vld [vmem:[%s3 + $0x10] sm:$0xff]
        %v2405 = vld [vmem:[%s3 + $0x18] sm:$0xff]
        %v2406 = vld [vmem:[%s3 + $0x20] sm:$0xff]
        %v2407 = vld [vmem:[%s3 + $0x28] sm:$0xff]
        %v2408 = vld [vmem:[%s3 + $0x30] sm:$0xff]
        %v2409 = vld [vmem:[%s3 + $0x38] sm:$0xff]
        %v2410 = vld [vmem:[#allocation3] sm:$0xff]
        %v2411 = vld [vmem:[#allocation3 + $0x8] sm:$0xff]
        %v2412 = vld [vmem:[#allocation3 + $0x10] sm:$0xff]
        %v2413 = vld [vmem:[#allocation3 + $0x18] sm:$0xff]
        %v2414 = vld [vmem:[#allocation3 + $0x20] sm:$0xff]
        %v2415 = vld [vmem:[#allocation3 + $0x28] sm:$0xff]
        %v2416 = vld [vmem:[#allocation3 + $0x30] sm:$0xff]
        %v2417 = vld [vmem:[#allocation3 + $0x38] sm:$0xff]
        %v2418 = vld [vmem:[#allocation3 + $0x40] sm:$0xff]
        %v2419 = vld [vmem:[#allocation3 + $0x48] sm:$0xff]
        %v2420 = vld [vmem:[#allocation3 + $0x50] sm:$0xff]
        %v2421 = vld [vmem:[#allocation3 + $0x58] sm:$0xff]
        %v2422 = vld [vmem:[#allocation3 + $0x60] sm:$0xff]
        %v2423 = vld [vmem:[#allocation3 + $0x68] sm:$0xff]
        %v2424 = vld [vmem:[#allocation3 + $0x70] sm:$0xff]
        %v2425 = vld [vmem:[#allocation3 + $0x78] sm:$0xff]
        %v2426 = vld [vmem:[#allocation3 + $0x80] sm:$0xff]
        %v2427 = vld [vmem:[#allocation3 + $0x88] sm:$0xff]
        %v2428 = vld [vmem:[#allocation3 + $0x90] sm:$0xff]
        %v2429 = vld [vmem:[#allocation3 + $0x98] sm:$0xff]
        %v2430 = vld [vmem:[#allocation3 + $0xa0] sm:$0xff]
        %v2431 = vld [vmem:[#allocation3 + $0xa8] sm:$0xff]
        %v2432 = vld [vmem:[#allocation3 + $0xb0] sm:$0xff]
        %v2433 = vld [vmem:[#allocation3 + $0xb8] sm:$0xff]
        %v2434 = vld [vmem:[#allocation3 + $0xc0] sm:$0xff]
        %v2435 = vld [vmem:[#allocation3 + $0xc8] sm:$0xff]
        %v2436 = vld [vmem:[#allocation3 + $0xd0] sm:$0xff]
        %v2437 = vld [vmem:[#allocation3 + $0xd8] sm:$0xff]
        %v2438 = vld [vmem:[#allocation3 + $0xe0] sm:$0xff]
        %v2439 = vld [vmem:[#allocation3 + $0xe8] sm:$0xff]
        %v2440 = vld [vmem:[#allocation3 + $0xf0] sm:$0xff]
        %v2441 = vld [vmem:[#allocation3 + $0xf8] sm:$0xff]
        %v2442 = vld [vmem:[#allocation3 + $0x100] sm:$0xff]
        %v2443 = vld [vmem:[#allocation3 + $0x108] sm:$0xff]
        %v2444 = vld [vmem:[#allocation3 + $0x110] sm:$0xff]
        %v2445 = vld [vmem:[#allocation3 + $0x118] sm:$0xff]
        %v2446 = vld [vmem:[#allocation3 + $0x120] sm:$0xff]
        %v2447 = vld [vmem:[#allocation3 + $0x128] sm:$0xff]
        %v2448 = vld [vmem:[#allocation3 + $0x130] sm:$0xff]
        %v2449 = vld [vmem:[#allocation3 + $0x138] sm:$0xff]
        %v2450 = vld [vmem:[#allocation3 + $0x140] sm:$0xff]
        %v2451 = vld [vmem:[#allocation3 + $0x148] sm:$0xff]
        %v2452 = vld [vmem:[#allocation3 + $0x150] sm:$0xff]
        %v2453 = vld [vmem:[#allocation3 + $0x158] sm:$0xff]
        %v2454 = vld [vmem:[#allocation3 + $0x160] sm:$0xff]
        %v2455 = vld [vmem:[#allocation3 + $0x168] sm:$0xff]
        %v2456 = vld [vmem:[#allocation3 + $0x170] sm:$0xff]
        %v2457 = vld [vmem:[#allocation3 + $0x178] sm:$0xff]
        %v2458 = vld [vmem:[#allocation3 + $0x180] sm:$0xff]
        %v2459 = vld [vmem:[#allocation3 + $0x188] sm:$0xff]
        %v2460 = vld [vmem:[#allocation3 + $0x190] sm:$0xff]
        %v2461 = vld [vmem:[#allocation3 + $0x198] sm:$0xff]
        %v2462 = vld [vmem:[#allocation3 + $0x1a0] sm:$0xff]
        %v2463 = vld [vmem:[#allocation3 + $0x1a8] sm:$0xff]
        %v2464 = vld [vmem:[#allocation3 + $0x1b0] sm:$0xff]
        %v2465 = vld [vmem:[#allocation3 + $0x1b8] sm:$0xff]
        %v2466 = vld [vmem:[#allocation3 + $0x1c0] sm:$0xff]
        %v2467 = vld [vmem:[#allocation3 + $0x1c8] sm:$0xff]
        %v2468 = vld [vmem:[#allocation3 + $0x1d0] sm:$0xff]
        %v2469 = vld [vmem:[#allocation3 + $0x1d8] sm:$0xff]
        %v2470 = vld [vmem:[#allocation3 + $0x1e0] sm:$0xff]
        %v2471 = vld [vmem:[#allocation3 + $0x1e8] sm:$0xff]
        %v2472 = vld [vmem:[#allocation3 + $0x1f0] sm:$0xff]
        %v2473 = vld [vmem:[#allocation3 + $0x1f8] sm:$0xff]
        %v2474 = vld [vmem:[#allocation3 + $0x200] sm:$0xff]
        %v2475 = vld [vmem:[#allocation3 + $0x208] sm:$0xff]
        %v2476 = vld [vmem:[#allocation3 + $0x210] sm:$0xff]
        %v2477 = vld [vmem:[#allocation3 + $0x218] sm:$0xff]
        %v2478 = vld [vmem:[#allocation3 + $0x220] sm:$0xff]
        %v2479 = vld [vmem:[#allocation3 + $0x228] sm:$0xff]
        %v2480 = vld [vmem:[#allocation3 + $0x230] sm:$0xff]
        %v2481 = vld [vmem:[#allocation3 + $0x238] sm:$0xff]
        %v2482 = vld [vmem:[#allocation3 + $0x240] sm:$0xff]
        %v2483 = vld [vmem:[#allocation3 + $0x248] sm:$0xff]
        %v2484 = vld [vmem:[#allocation3 + $0x250] sm:$0xff]
        %v2485 = vld [vmem:[#allocation3 + $0x258] sm:$0xff]
        %v2486 = vld [vmem:[#allocation3 + $0x260] sm:$0xff]
        %v2487 = vld [vmem:[#allocation3 + $0x268] sm:$0xff]
        %v2488 = vld [vmem:[#allocation3 + $0x270] sm:$0xff]
        %v2489 = vld [vmem:[#allocation3 + $0x278] sm:$0xff]
        %v2490 = vld [vmem:[#allocation3 + $0x280] sm:$0xff]
        %v2491 = vld [vmem:[#allocation3 + $0x288] sm:$0xff]
        %v2492 = vld [vmem:[#allocation3 + $0x290] sm:$0xff]
        %v2493 = vld [vmem:[#allocation3 + $0x298] sm:$0xff]
        %v2494 = vld [vmem:[#allocation3 + $0x2a0] sm:$0xff]
        %v2495 = vld [vmem:[#allocation3 + $0x2a8] sm:$0xff]
        %v2496 = vld [vmem:[#allocation3 + $0x2b0] sm:$0xff]
        %v2497 = vld [vmem:[#allocation3 + $0x2b8] sm:$0xff]
        %v2498 = vld [vmem:[#allocation3 + $0x2c0] sm:$0xff]
        %v2499 = vld [vmem:[#allocation3 + $0x2c8] sm:$0xff]
        %v2500 = vld [vmem:[#allocation3 + $0x2d0] sm:$0xff]
        %v2501 = vld [vmem:[#allocation3 + $0x2d8] sm:$0xff]
        %v2502 = vld [vmem:[#allocation3 + $0x2e0] sm:$0xff]
        %v2503 = vld [vmem:[#allocation3 + $0x2e8] sm:$0xff]
        %v2504 = vld [vmem:[#allocation3 + $0x2f0] sm:$0xff]
        %v2505 = vld [vmem:[#allocation3 + $0x2f8] sm:$0xff]
        %v2506 = vld [vmem:[#allocation3 + $0x300] sm:$0xff]
        %v2507 = vld [vmem:[#allocation3 + $0x308] sm:$0xff]
        %v2508 = vld [vmem:[#allocation3 + $0x310] sm:$0xff]
        %v2509 = vld [vmem:[#allocation3 + $0x318] sm:$0xff]
        %v2510 = vld [vmem:[#allocation3 + $0x320] sm:$0xff]
        %v2511 = vld [vmem:[#allocation3 + $0x328] sm:$0xff]
        %v2512 = vld [vmem:[#allocation3 + $0x330] sm:$0xff]
        %v2513 = vld [vmem:[#allocation3 + $0x338] sm:$0xff]
        %v2514 = vld [vmem:[#allocation3 + $0x340] sm:$0xff]
        %v2515 = vld [vmem:[#allocation3 + $0x348] sm:$0xff]
        %v2516 = vld [vmem:[#allocation3 + $0x350] sm:$0xff]
        %v2517 = vld [vmem:[#allocation3 + $0x358] sm:$0xff]
        %v2518 = vld [vmem:[#allocation3 + $0x360] sm:$0xff]
        %v2519 = vld [vmem:[#allocation3 + $0x368] sm:$0xff]
        %v2520 = vld [vmem:[#allocation3 + $0x370] sm:$0xff]
        %v2521 = vld [vmem:[#allocation3 + $0x378] sm:$0xff]
        %v2522 = vld [vmem:[#allocation3 + $0x380] sm:$0xff]
        %v2523 = vld [vmem:[#allocation3 + $0x388] sm:$0xff]
        %v2524 = vld [vmem:[#allocation3 + $0x390] sm:$0xff]
        %v2525 = vld [vmem:[#allocation3 + $0x398] sm:$0xff]
        %v2526 = vld [vmem:[#allocation3 + $0x3a0] sm:$0xff]
        %v2527 = vld [vmem:[#allocation3 + $0x3a8] sm:$0xff]
        %v2528 = vld [vmem:[#allocation3 + $0x3b0] sm:$0xff]
        %v2529 = vld [vmem:[#allocation3 + $0x3b8] sm:$0xff]
        %v2530 = vld [vmem:[#allocation3 + $0x3c0] sm:$0xff]
        %v2531 = vld [vmem:[#allocation3 + $0x3c8] sm:$0xff]
        %v2532 = vld [vmem:[#allocation3 + $0x3d0] sm:$0xff]
        %v2533 = vld [vmem:[#allocation3 + $0x3d8] sm:$0xff]
        %v2534 = vld [vmem:[#allocation3 + $0x3e0] sm:$0xff]
        %v2535 = vld [vmem:[#allocation3 + $0x3e8] sm:$0xff]
        %v2536 = vld [vmem:[#allocation3 + $0x3f0] sm:$0xff]
        %v2537 = vld [vmem:[#allocation3 + $0x3f8] sm:$0xff]
        %v2538 = vld [vmem:[#allocation3 + $0x400] sm:$0xff]
        %v2539 = vld [vmem:[#allocation3 + $0x408] sm:$0xff]
        %v2540 = vld [vmem:[#allocation3 + $0x410] sm:$0xff]
        %v2541 = vld [vmem:[#allocation3 + $0x418] sm:$0xff]
        %v2542 = vld [vmem:[#allocation3 + $0x420] sm:$0xff]
        %v2543 = vld [vmem:[#allocation3 + $0x428] sm:$0xff]
        %v2544 = vld [vmem:[#allocation3 + $0x430] sm:$0xff]
        %v2545 = vld [vmem:[#allocation3 + $0x438] sm:$0xff]
        %v2546 = vld [vmem:[#allocation3 + $0x440] sm:$0xff]
        %v2547 = vld [vmem:[#allocation3 + $0x448] sm:$0xff]
        %v2548 = vld [vmem:[#allocation3 + $0x450] sm:$0xff]
        %v2549 = vld [vmem:[#allocation3 + $0x458] sm:$0xff]
        %v2550 = vld [vmem:[#allocation3 + $0x460] sm:$0xff]
        %v2551 = vld [vmem:[#allocation3 + $0x468] sm:$0xff]
        %v2552 = vld [vmem:[#allocation3 + $0x470] sm:$0xff]
        %v2553 = vld [vmem:[#allocation3 + $0x478] sm:$0xff]
        %v2554 = vld [vmem:[%s4] sm:$0xff]
        %v2555 = vld [vmem:[%s4 + $0x8] sm:$0xff]
        %v2556 = vld [vmem:[%s4 + $0x10] sm:$0xff]
        %v2557 = vld [vmem:[%s4 + $0x18] sm:$0xff]
        %2559 = vset.pattern.permute.xlu0 0
        %2560 = vperm.xlu0 %2559, %v2554
        %v2561 = vpop.permute.xlu0 %2560
        %2564 = vset.pattern.permute.xlu0 0
        %2565 = vperm.xlu0 %2564, %v2555
        %v2566 = vpop.permute.xlu0 %2565
        %2569 = vset.pattern.permute.xlu0 0
        %2570 = vperm.xlu0 %2569, %v2556
        %v2571 = vpop.permute.xlu0 %2570
        %2574 = vset.pattern.permute.xlu0 0
        %2575 = vperm.xlu0 %2574, %v2557
        %v2576 = vpop.permute.xlu0 %2575
        %vm2578 = vcmask 130048
        %v2580 = vsel %vm2578, %v2403, 0
        %v2583 = vsel %vm2578, %v2405, 0
        %v2586 = vsel %vm2578, %v2407, 0
        %v2589 = vsel %vm2578, %v2409, 0
        %2591 = vmatprep.subr.mxu0 %v2531
        %2592 = vmatpush1.msra.mxu0 %v2530
        %2593 = vmatprep.subr.mxu0 %v2523
        %2594 = vmatpush1.msra.mxu0 %v2522
        %2595 = vmatprep.subr.mxu0 %v2515
        %2596 = vmatpush1.msra.mxu0 %v2514
        %2597 = vmatprep.subr.mxu0 %v2507
        %2598 = vmatpush1.msra.mxu0 %v2506
        %2599 = vmatprep.subr.mxu0 %v2499
        %2600 = vmatpush1.msra.mxu0 %v2498
        %2601 = vmatprep.subr.mxu0 %v2491
        %2602 = vmatpush1.msra.mxu0 %v2490
        %2603 = vmatprep.subr.mxu0 %v2483
        %2604 = vmatpush1.msra.mxu0 %v2482
        %2605 = vmatprep.subr.mxu0 %v2475
        %2606 = vmatpush1.msra.mxu0 %v2474
        %2607 = vmatprep.subr.mxu0 %v2467
        %2608 = vmatpush1.msra.mxu0 %v2466
        %2609 = vmatprep.subr.mxu0 %v2459
        %2610 = vmatpush1.msra.mxu0 %v2458
        %2611 = vmatprep.subr.mxu0 %v2451
        %2612 = vmatpush1.msra.mxu0 %v2450
        %2613 = vmatprep.subr.mxu0 %v2443
        %2614 = vmatpush1.msra.mxu0 %v2442
        %2615 = vmatprep.subr.mxu0 %v2435
        %2616 = vmatpush1.msra.mxu0 %v2434
        %2617 = vmatprep.subr.mxu0 %v2427
        %2618 = vmatpush1.msra.mxu0 %v2426
        %2619 = vmatprep.subr.mxu0 %v2419
        %2620 = vmatpush1.msra.mxu0 %v2418
        %2621 = vmatprep.subr.mxu0 %v2411
        %2622 = vmatpush1.msra.mxu0 %v2410
        %2623 = vmatprep.subr.mxu0 0.0
        %2624 = vmatpush2.msra.mxu0 0.0
        %2625 = vmatprep.subr.mxu0 0.0
        %2626 = vmatpush2.msra.mxu0 0.0
        %2627 = vmatprep.subr.mxu0 0.0
        %2628 = vmatpush2.msra.mxu0 0.0
        %2629 = vmatprep.subr.mxu0 0.0
        %2630 = vmatpush2.msra.mxu0 0.0
        %2631 = vmatprep.subr.mxu0 0.0
        %2632 = vmatpush2.msra.mxu0 0.0
        %2633 = vmatprep.subr.mxu0 0.0
        %2634 = vmatpush2.msra.mxu0 0.0
        %2635 = vmatprep.subr.mxu0 0.0
        %2636 = vmatpush2.msra.mxu0 0.0
        %2637 = vmatprep.subr.mxu0 0.0
        %2638 = vmatpush2.msra.mxu0 0.0
        %2639 = vmatprep.subr.mxu0 0.0
        %2640 = vmatpush2.msra.mxu0 0.0
        %2641 = vmatprep.subr.mxu0 0.0
        %2642 = vmatpush2.msra.mxu0 0.0
        %2643 = vmatprep.subr.mxu0 0.0
        %2644 = vmatpush2.msra.mxu0 0.0
        %2645 = vmatprep.subr.mxu0 0.0
        %2646 = vmatpush2.msra.mxu0 0.0
        %2647 = vmatprep.subr.mxu0 0.0
        %2648 = vmatpush2.msra.mxu0 0.0
        %2649 = vmatprep.subr.mxu0 0.0
        %2650 = vmatpush2.msra.mxu0 0.0
        %2651 = vmatprep.subr.mxu0 %v2547
        %2652 = vmatpush2.msra.mxu0 %v2546
        %2653 = vmatprep.subr.mxu0 %v2539
        %2654 = vmatpush2.msra.mxu0 %v2538
        %2655 = vmatprep.mubr.f32.mxu0 %v2580
        %2656 = vmatmul.mubr.f32.gmra.mxu0 %v2402
        %v2657 = vpop.f32.mrf.mxu0
        %v2658 = vadd.f32 %v2561, %v2657
        %v2659 = vpop.f32.mrf.mxu0
        %v2660 = vadd.f32 %v2561, %v2659
        %2661 = vmatprep.mubr.f32.mxu0 %v2583
        %2662 = vmatmul.mubr.f32.gmra.mxu0 %v2404
        %v2663 = vpop.f32.mrf.mxu0
        %v2664 = vadd.f32 %v2566, %v2663
        %v2665 = vpop.f32.mrf.mxu0
        %v2666 = vadd.f32 %v2566, %v2665
        %2667 = vmatprep.mubr.f32.mxu0 %v2586
        %2668 = vmatmul.mubr.f32.gmra.mxu0 %v2406
        %v2669 = vpop.f32.mrf.mxu0
        %v2670 = vadd.f32 %v2571, %v2669
        %v2671 = vpop.f32.mrf.mxu0
        %v2672 = vadd.f32 %v2571, %v2671
        %2673 = vmatprep.mubr.f32.mxu0 %v2589
        %2674 = vmatmul.mubr.f32.gmra.mxu0 %v2408
        %v2675 = vpop.f32.mrf.mxu0
        %v2676 = vadd.f32 %v2576, %v2675
        %v2677 = vpop.f32.mrf.mxu0
        %v2678 = vadd.f32 %v2576, %v2677
        %2679 = vdwg.mxu0
        %2680 = vmatprep.subr.mxu0 %v2533
        %2681 = vmatpush1.msra.mxu0 %v2532
        %2682 = vmatprep.subr.mxu0 %v2525
        %2683 = vmatpush1.msra.mxu0 %v2524
        %2684 = vmatprep.subr.mxu0 %v2517
        %2685 = vmatpush1.msra.mxu0 %v2516
        %2686 = vmatprep.subr.mxu0 %v2509
        %2687 = vmatpush1.msra.mxu0 %v2508
        %2688 = vmatprep.subr.mxu0 %v2501
        %2689 = vmatpush1.msra.mxu0 %v2500
        %2690 = vmatprep.subr.mxu0 %v2493
        %2691 = vmatpush1.msra.mxu0 %v2492
        %2692 = vmatprep.subr.mxu0 %v2485
        %2693 = vmatpush1.msra.mxu0 %v2484
        %2694 = vmatprep.subr.mxu0 %v2477
        %2695 = vmatpush1.msra.mxu0 %v2476
        %2696 = vmatprep.subr.mxu0 %v2469
        %2697 = vmatpush1.msra.mxu0 %v2468
        %2698 = vmatprep.subr.mxu0 %v2461
        %2699 = vmatpush1.msra.mxu0 %v2460
        %2700 = vmatprep.subr.mxu0 %v2453
        %2701 = vmatpush1.msra.mxu0 %v2452
        %2702 = vmatprep.subr.mxu0 %v2445
        %2703 = vmatpush1.msra.mxu0 %v2444
        %2704 = vmatprep.subr.mxu0 %v2437
        %2705 = vmatpush1.msra.mxu0 %v2436
        %2706 = vmatprep.subr.mxu0 %v2429
        %2707 = vmatpush1.msra.mxu0 %v2428
        %2708 = vmatprep.subr.mxu0 %v2421
        %2709 = vmatpush1.msra.mxu0 %v2420
        %2710 = vmatprep.subr.mxu0 %v2413
        %2711 = vmatpush1.msra.mxu0 %v2412
        %2712 = vmatprep.subr.mxu0 0.0
        %2713 = vmatpush2.msra.mxu0 0.0
        %2714 = vmatprep.subr.mxu0 0.0
        %2715 = vmatpush2.msra.mxu0 0.0
        %2716 = vmatprep.subr.mxu0 0.0
        %2717 = vmatpush2.msra.mxu0 0.0
        %2718 = vmatprep.subr.mxu0 0.0
        %2719 = vmatpush2.msra.mxu0 0.0
        %2720 = vmatprep.subr.mxu0 0.0
        %2721 = vmatpush2.msra.mxu0 0.0
        %2722 = vmatprep.subr.mxu0 0.0
        %2723 = vmatpush2.msra.mxu0 0.0
        %2724 = vmatprep.subr.mxu0 0.0
        %2725 = vmatpush2.msra.mxu0 0.0
        %2726 = vmatprep.subr.mxu0 0.0
        %2727 = vmatpush2.msra.mxu0 0.0
        %2728 = vmatprep.subr.mxu0 0.0
        %2729 = vmatpush2.msra.mxu0 0.0
        %2730 = vmatprep.subr.mxu0 0.0
        %2731 = vmatpush2.msra.mxu0 0.0
        %2732 = vmatprep.subr.mxu0 0.0
        %2733 = vmatpush2.msra.mxu0 0.0
        %2734 = vmatprep.subr.mxu0 0.0
        %2735 = vmatpush2.msra.mxu0 0.0
        %2736 = vmatprep.subr.mxu0 0.0
        %2737 = vmatpush2.msra.mxu0 0.0
        %2738 = vmatprep.subr.mxu0 0.0
        %2739 = vmatpush2.msra.mxu0 0.0
        %2740 = vmatprep.subr.mxu0 %v2549
        %2741 = vmatpush2.msra.mxu0 %v2548
        %2742 = vmatprep.subr.mxu0 %v2541
        %2743 = vmatpush2.msra.mxu0 %v2540
        %2744 = vmatprep.mubr.f32.mxu0 %v2580
        %2745 = vmatmul.mubr.f32.gmra.mxu0 %v2402
        %v2746 = vpop.f32.mrf.mxu0
        %v2747 = vadd.f32 %v2561, %v2746
        %v2748 = vpop.f32.mrf.mxu0
        %v2749 = vadd.f32 %v2561, %v2748
        %2750 = vmatprep.mubr.f32.mxu0 %v2583
        %2751 = vmatmul.mubr.f32.gmra.mxu0 %v2404
        %v2752 = vpop.f32.mrf.mxu0
        %v2753 = vadd.f32 %v2566, %v2752
        %v2754 = vpop.f32.mrf.mxu0
        %v2755 = vadd.f32 %v2566, %v2754
        %2756 = vmatprep.mubr.f32.mxu0 %v2586
        %2757 = vmatmul.mubr.f32.gmra.mxu0 %v2406
        %v2758 = vpop.f32.mrf.mxu0
        %v2759 = vadd.f32 %v2571, %v2758
        %v2760 = vpop.f32.mrf.mxu0
        %v2761 = vadd.f32 %v2571, %v2760
        %2762 = vmatprep.mubr.f32.mxu0 %v2589
        %2763 = vmatmul.mubr.f32.gmra.mxu0 %v2408
        %v2764 = vpop.f32.mrf.mxu0
        %v2765 = vadd.f32 %v2576, %v2764
        %v2766 = vpop.f32.mrf.mxu0
        %v2767 = vadd.f32 %v2576, %v2766
        %2768 = vdwg.mxu0
        %2769 = vmatprep.subr.mxu0 %v2535
        %2770 = vmatpush1.msra.mxu0 %v2534
        %2771 = vmatprep.subr.mxu0 %v2527
        %2772 = vmatpush1.msra.mxu0 %v2526
        %2773 = vmatprep.subr.mxu0 %v2519
        %2774 = vmatpush1.msra.mxu0 %v2518
        %2775 = vmatprep.subr.mxu0 %v2511
        %2776 = vmatpush1.msra.mxu0 %v2510
        %2777 = vmatprep.subr.mxu0 %v2503
        %2778 = vmatpush1.msra.mxu0 %v2502
        %2779 = vmatprep.subr.mxu0 %v2495
        %2780 = vmatpush1.msra.mxu0 %v2494
        %2781 = vmatprep.subr.mxu0 %v2487
        %2782 = vmatpush1.msra.mxu0 %v2486
        %2783 = vmatprep.subr.mxu0 %v2479
        %2784 = vmatpush1.msra.mxu0 %v2478
        %2785 = vmatprep.subr.mxu0 %v2471
        %2786 = vmatpush1.msra.mxu0 %v2470
        %2787 = vmatprep.subr.mxu0 %v2463
        %2788 = vmatpush1.msra.mxu0 %v2462
        %2789 = vmatprep.subr.mxu0 %v2455
        %2790 = vmatpush1.msra.mxu0 %v2454
        %2791 = vmatprep.subr.mxu0 %v2447
        %2792 = vmatpush1.msra.mxu0 %v2446
        %2793 = vmatprep.subr.mxu0 %v2439
        %2794 = vmatpush1.msra.mxu0 %v2438
        %2795 = vmatprep.subr.mxu0 %v2431
        %2796 = vmatpush1.msra.mxu0 %v2430
        %2797 = vmatprep.subr.mxu0 %v2423
        %2798 = vmatpush1.msra.mxu0 %v2422
        %2799 = vmatprep.subr.mxu0 %v2415
        %2800 = vmatpush1.msra.mxu0 %v2414
        %2801 = vmatprep.subr.mxu0 0.0
        %2802 = vmatpush2.msra.mxu0 0.0
        %2803 = vmatprep.subr.mxu0 0.0
        %2804 = vmatpush2.msra.mxu0 0.0
        %2805 = vmatprep.subr.mxu0 0.0
        %2806 = vmatpush2.msra.mxu0 0.0
        %2807 = vmatprep.subr.mxu0 0.0
        %2808 = vmatpush2.msra.mxu0 0.0
        %2809 = vmatprep.subr.mxu0 0.0
        %2810 = vmatpush2.msra.mxu0 0.0
        %2811 = vmatprep.subr.mxu0 0.0
        %2812 = vmatpush2.msra.mxu0 0.0
        %2813 = vmatprep.subr.mxu0 0.0
        %2814 = vmatpush2.msra.mxu0 0.0
        %2815 = vmatprep.subr.mxu0 0.0
        %2816 = vmatpush2.msra.mxu0 0.0
        %2817 = vmatprep.subr.mxu0 0.0
        %2818 = vmatpush2.msra.mxu0 0.0
        %2819 = vmatprep.subr.mxu0 0.0
        %2820 = vmatpush2.msra.mxu0 0.0
        %2821 = vmatprep.subr.mxu0 0.0
        %2822 = vmatpush2.msra.mxu0 0.0
        %2823 = vmatprep.subr.mxu0 0.0
        %2824 = vmatpush2.msra.mxu0 0.0
        %2825 = vmatprep.subr.mxu0 0.0
        %2826 = vmatpush2.msra.mxu0 0.0
        %2827 = vmatprep.subr.mxu0 0.0
        %2828 = vmatpush2.msra.mxu0 0.0
        %2829 = vmatprep.subr.mxu0 %v2551
        %2830 = vmatpush2.msra.mxu0 %v2550
        %2831 = vmatprep.subr.mxu0 %v2543
        %2832 = vmatpush2.msra.mxu0 %v2542
        %2833 = vmatprep.mubr.f32.mxu0 %v2580
        %2834 = vmatmul.mubr.f32.gmra.mxu0 %v2402
        %v2835 = vpop.f32.mrf.mxu0
        %v2836 = vadd.f32 %v2561, %v2835
        %v2837 = vpop.f32.mrf.mxu0
        %v2838 = vadd.f32 %v2561, %v2837
        %2839 = vmatprep.mubr.f32.mxu0 %v2583
        %2840 = vmatmul.mubr.f32.gmra.mxu0 %v2404
        %v2841 = vpop.f32.mrf.mxu0
        %v2842 = vadd.f32 %v2566, %v2841
        %v2843 = vpop.f32.mrf.mxu0
        %v2844 = vadd.f32 %v2566, %v2843
        %2845 = vmatprep.mubr.f32.mxu0 %v2586
        %2846 = vmatmul.mubr.f32.gmra.mxu0 %v2406
        %v2847 = vpop.f32.mrf.mxu0
        %v2848 = vadd.f32 %v2571, %v2847
        %v2849 = vpop.f32.mrf.mxu0
        %v2850 = vadd.f32 %v2571, %v2849
        %2851 = vmatprep.mubr.f32.mxu0 %v2589
        %2852 = vmatmul.mubr.f32.gmra.mxu0 %v2408
        %v2853 = vpop.f32.mrf.mxu0
        %v2854 = vadd.f32 %v2576, %v2853
        %v2855 = vpop.f32.mrf.mxu0
        %v2856 = vadd.f32 %v2576, %v2855
        %2857 = vdwg.mxu0
        %2858 = vmatprep.subr.mxu0 %v2537
        %2859 = vmatpush1.msra.mxu0 %v2536
        %2860 = vmatprep.subr.mxu0 %v2529
        %2861 = vmatpush1.msra.mxu0 %v2528
        %2862 = vmatprep.subr.mxu0 %v2521
        %2863 = vmatpush1.msra.mxu0 %v2520
        %2864 = vmatprep.subr.mxu0 %v2513
        %2865 = vmatpush1.msra.mxu0 %v2512
        %2866 = vmatprep.subr.mxu0 %v2505
        %2867 = vmatpush1.msra.mxu0 %v2504
        %2868 = vmatprep.subr.mxu0 %v2497
        %2869 = vmatpush1.msra.mxu0 %v2496
        %2870 = vmatprep.subr.mxu0 %v2489
        %2871 = vmatpush1.msra.mxu0 %v2488
        %2872 = vmatprep.subr.mxu0 %v2481
        %2873 = vmatpush1.msra.mxu0 %v2480
        %2874 = vmatprep.subr.mxu0 %v2473
        %2875 = vmatpush1.msra.mxu0 %v2472
        %2876 = vmatprep.subr.mxu0 %v2465
        %2877 = vmatpush1.msra.mxu0 %v2464
        %2878 = vmatprep.subr.mxu0 %v2457
        %2879 = vmatpush1.msra.mxu0 %v2456
        %2880 = vmatprep.subr.mxu0 %v2449
        %2881 = vmatpush1.msra.mxu0 %v2448
        %2882 = vmatprep.subr.mxu0 %v2441
        %2883 = vmatpush1.msra.mxu0 %v2440
        %2884 = vmatprep.subr.mxu0 %v2433
        %2885 = vmatpush1.msra.mxu0 %v2432
        %2886 = vmatprep.subr.mxu0 %v2425
        %2887 = vmatpush1.msra.mxu0 %v2424
        %2888 = vmatprep.subr.mxu0 %v2417
        %2889 = vmatpush1.msra.mxu0 %v2416
        %2890 = vmatprep.subr.mxu0 0.0
        %2891 = vmatpush2.msra.mxu0 0.0
        %2892 = vmatprep.subr.mxu0 0.0
        %2893 = vmatpush2.msra.mxu0 0.0
        %2894 = vmatprep.subr.mxu0 0.0
        %2895 = vmatpush2.msra.mxu0 0.0
        %2896 = vmatprep.subr.mxu0 0.0
        %2897 = vmatpush2.msra.mxu0 0.0
        %2898 = vmatprep.subr.mxu0 0.0
        %2899 = vmatpush2.msra.mxu0 0.0
        %2900 = vmatprep.subr.mxu0 0.0
        %2901 = vmatpush2.msra.mxu0 0.0
        %2902 = vmatprep.subr.mxu0 0.0
        %2903 = vmatpush2.msra.mxu0 0.0
        %2904 = vmatprep.subr.mxu0 0.0
        %2905 = vmatpush2.msra.mxu0 0.0
        %2906 = vmatprep.subr.mxu0 0.0
        %2907 = vmatpush2.msra.mxu0 0.0
        %2908 = vmatprep.subr.mxu0 0.0
        %2909 = vmatpush2.msra.mxu0 0.0
        %2910 = vmatprep.subr.mxu0 0.0
        %2911 = vmatpush2.msra.mxu0 0.0
        %2912 = vmatprep.subr.mxu0 0.0
        %2913 = vmatpush2.msra.mxu0 0.0
        %2914 = vmatprep.subr.mxu0 0.0
        %2915 = vmatpush2.msra.mxu0 0.0
        %2916 = vmatprep.subr.mxu0 0.0
        %2917 = vmatpush2.msra.mxu0 0.0
        %2918 = vmatprep.subr.mxu0 %v2553
        %2919 = vmatpush2.msra.mxu0 %v2552
        %2920 = vmatprep.subr.mxu0 %v2545
        %2921 = vmatpush2.msra.mxu0 %v2544
        %2922 = vmatprep.mubr.f32.mxu0 %v2580
        %2923 = vmatmul.mubr.f32.gmra.mxu0 %v2402
        %v2924 = vpop.f32.mrf.mxu0
        %v2925 = vadd.f32 %v2561, %v2924
        %v2926 = vpop.f32.mrf.mxu0
        %v2927 = vadd.f32 %v2561, %v2926
        %2928 = vmatprep.mubr.f32.mxu0 %v2583
        %2929 = vmatmul.mubr.f32.gmra.mxu0 %v2404
        %v2930 = vpop.f32.mrf.mxu0
        %v2931 = vadd.f32 %v2566, %v2930
        %v2932 = vpop.f32.mrf.mxu0
        %v2933 = vadd.f32 %v2566, %v2932
        %2934 = vmatprep.mubr.f32.mxu0 %v2586
        %2935 = vmatmul.mubr.f32.gmra.mxu0 %v2406
        %v2936 = vpop.f32.mrf.mxu0
        %v2937 = vadd.f32 %v2571, %v2936
        %v2938 = vpop.f32.mrf.mxu0
        %v2939 = vadd.f32 %v2571, %v2938
        %2940 = vmatprep.mubr.f32.mxu0 %v2589
        %2941 = vmatmul.mubr.f32.gmra.mxu0 %v2408
        %v2942 = vpop.f32.mrf.mxu0
        %v2943 = vadd.f32 %v2576, %v2942
        %v2944 = vpop.f32.mrf.mxu0
        %v2945 = vadd.f32 %v2576, %v2944
        %2946 = vdwg.mxu0
        %v2947 = vmax.f32 %v2658, 0.0
        %v2948 = vmax.f32 %v2660, 0.0
        %v2949 = vmax.f32 %v2747, 0.0
        %v2950 = vmax.f32 %v2749, 0.0
        %v2951 = vmax.f32 %v2836, 0.0
        %v2952 = vmax.f32 %v2838, 0.0
        %v2953 = vmax.f32 %v2925, 0.0
        %v2954 = vmax.f32 %v2927, 0.0
        %v2955 = vmax.f32 %v2664, 0.0
        %v2956 = vmax.f32 %v2666, 0.0
        %v2957 = vmax.f32 %v2753, 0.0
        %v2958 = vmax.f32 %v2755, 0.0
        %v2959 = vmax.f32 %v2842, 0.0
        %v2960 = vmax.f32 %v2844, 0.0
        %v2961 = vmax.f32 %v2931, 0.0
        %v2962 = vmax.f32 %v2933, 0.0
        %v2963 = vmax.f32 %v2670, 0.0
        %v2964 = vmax.f32 %v2672, 0.0
        %v2965 = vmax.f32 %v2759, 0.0
        %v2966 = vmax.f32 %v2761, 0.0
        %v2967 = vmax.f32 %v2848, 0.0
        %v2968 = vmax.f32 %v2850, 0.0
        %v2969 = vmax.f32 %v2937, 0.0
        %v2970 = vmax.f32 %v2939, 0.0
        %v2971 = vmax.f32 %v2676, 0.0
        %v2972 = vmax.f32 %v2678, 0.0
        %v2973 = vmax.f32 %v2765, 0.0
        %v2974 = vmax.f32 %v2767, 0.0
        %v2975 = vmax.f32 %v2854, 0.0
        %v2976 = vmax.f32 %v2856, 0.0
        %v2977 = vmax.f32 %v2943, 0.0
        %v2978 = vmax.f32 %v2945, 0.0
        %v2979 = vld [vmem:[%s7] sm:$0xff]
        %v2980 = vld [vmem:[%s7 + $0x8] sm:$0xff]
        %v2981 = vld [vmem:[%s7 + $0x10] sm:$0xff]
        %v2982 = vld [vmem:[%s7 + $0x18] sm:$0xff]
        %v2983 = vld [vmem:[%s7 + $0x20] sm:$0xff]
        %v2984 = vld [vmem:[%s7 + $0x28] sm:$0xff]
        %v2985 = vld [vmem:[%s7 + $0x30] sm:$0xff]
        %v2986 = vld [vmem:[%s7 + $0x38] sm:$0xff]
        %v2987 = vld [vmem:[%s7 + $0x40] sm:$0xff]
        %v2988 = vld [vmem:[%s7 + $0x48] sm:$0xff]
        %v2989 = vld [vmem:[%s7 + $0x50] sm:$0xff]
        %v2990 = vld [vmem:[%s7 + $0x58] sm:$0xff]
        %v2991 = vld [vmem:[%s7 + $0x60] sm:$0xff]
        %v2992 = vld [vmem:[%s7 + $0x68] sm:$0xff]
        %v2993 = vld [vmem:[%s7 + $0x70] sm:$0xff]
        %v2994 = vld [vmem:[%s7 + $0x78] sm:$0xff]
        %v2995 = vld [vmem:[%s7 + $0x80] sm:$0xff]
        %v2996 = vld [vmem:[%s7 + $0x88] sm:$0xff]
        %v2997 = vld [vmem:[%s7 + $0x90] sm:$0xff]
        %v2998 = vld [vmem:[%s7 + $0x98] sm:$0xff]
        %v2999 = vld [vmem:[%s7 + $0xa0] sm:$0xff]
        %v3000 = vld [vmem:[%s7 + $0xa8] sm:$0xff]
        %v3001 = vld [vmem:[%s7 + $0xb0] sm:$0xff]
        %v3002 = vld [vmem:[%s7 + $0xb8] sm:$0xff]
        %v3003 = vld [vmem:[%s7 + $0xc0] sm:$0xff]
        %v3004 = vld [vmem:[%s7 + $0xc8] sm:$0xff]
        %v3005 = vld [vmem:[%s7 + $0xd0] sm:$0xff]
        %v3006 = vld [vmem:[%s7 + $0xd8] sm:$0xff]
        %v3007 = vld [vmem:[%s7 + $0xe0] sm:$0xff]
        %v3008 = vld [vmem:[%s7 + $0xe8] sm:$0xff]
        %v3009 = vld [vmem:[%s7 + $0xf0] sm:$0xff]
        %v3010 = vld [vmem:[%s7 + $0xf8] sm:$0xff]
        %v3011 = vld [vmem:[%s7 + $0x100] sm:$0xff]
        %v3012 = vld [vmem:[%s7 + $0x108] sm:$0xff]
        %v3013 = vld [vmem:[%s7 + $0x110] sm:$0xff]
        %v3014 = vld [vmem:[%s7 + $0x118] sm:$0xff]
        %v3015 = vld [vmem:[%s7 + $0x120] sm:$0xff]
        %v3016 = vld [vmem:[%s7 + $0x128] sm:$0xff]
        %v3017 = vld [vmem:[%s7 + $0x130] sm:$0xff]
        %v3018 = vld [vmem:[%s7 + $0x138] sm:$0xff]
        %v3019 = vld [vmem:[%s7 + $0x140] sm:$0xff]
        %v3020 = vld [vmem:[%s7 + $0x148] sm:$0xff]
        %v3021 = vld [vmem:[%s7 + $0x150] sm:$0xff]
        %v3022 = vld [vmem:[%s7 + $0x158] sm:$0xff]
        %v3023 = vld [vmem:[%s7 + $0x160] sm:$0xff]
        %v3024 = vld [vmem:[%s7 + $0x168] sm:$0xff]
        %v3025 = vld [vmem:[%s7 + $0x170] sm:$0xff]
        %v3026 = vld [vmem:[%s7 + $0x178] sm:$0xff]
        %v3027 = vld [vmem:[%s7 + $0x180] sm:$0xff]
        %v3028 = vld [vmem:[%s7 + $0x188] sm:$0xff]
        %v3029 = vld [vmem:[%s7 + $0x190] sm:$0xff]
        %v3030 = vld [vmem:[%s7 + $0x198] sm:$0xff]
        %v3031 = vld [vmem:[%s7 + $0x1a0] sm:$0xff]
        %v3032 = vld [vmem:[%s7 + $0x1a8] sm:$0xff]
        %v3033 = vld [vmem:[%s7 + $0x1b0] sm:$0xff]
        %v3034 = vld [vmem:[%s7 + $0x1b8] sm:$0xff]
        %v3035 = vld [vmem:[%s7 + $0x1c0] sm:$0xff]
        %v3036 = vld [vmem:[%s7 + $0x1c8] sm:$0xff]
        %v3037 = vld [vmem:[%s7 + $0x1d0] sm:$0xff]
        %v3038 = vld [vmem:[%s7 + $0x1d8] sm:$0xff]
        %v3039 = vld [vmem:[%s7 + $0x1e0] sm:$0xff]
        %v3040 = vld [vmem:[%s7 + $0x1e8] sm:$0xff]
        %v3041 = vld [vmem:[%s7 + $0x1f0] sm:$0xff]
        %v3042 = vld [vmem:[%s7 + $0x1f8] sm:$0xff]
        %v3043 = vld [vmem:[%s7 + $0x200] sm:$0xff]
        %v3044 = vld [vmem:[%s7 + $0x208] sm:$0xff]
        %v3045 = vld [vmem:[%s7 + $0x210] sm:$0xff]
        %v3046 = vld [vmem:[%s7 + $0x218] sm:$0xff]
        %v3047 = vld [vmem:[%s7 + $0x220] sm:$0xff]
        %v3048 = vld [vmem:[%s7 + $0x228] sm:$0xff]
        %v3049 = vld [vmem:[%s7 + $0x230] sm:$0xff]
        %v3050 = vld [vmem:[%s7 + $0x238] sm:$0xff]
        %v3051 = vld [vmem:[%s7 + $0x240] sm:$0xff]
        %v3052 = vld [vmem:[%s7 + $0x248] sm:$0xff]
        %v3053 = vld [vmem:[%s7 + $0x250] sm:$0xff]
        %v3054 = vld [vmem:[%s7 + $0x258] sm:$0xff]
        %v3055 = vld [vmem:[%s7 + $0x260] sm:$0xff]
        %v3056 = vld [vmem:[%s7 + $0x268] sm:$0xff]
        %v3057 = vld [vmem:[%s7 + $0x270] sm:$0xff]
        %v3058 = vld [vmem:[%s7 + $0x278] sm:$0xff]
        %v3059 = vld [vmem:[%s7 + $0x280] sm:$0xff]
        %v3060 = vld [vmem:[%s7 + $0x288] sm:$0xff]
        %v3061 = vld [vmem:[%s7 + $0x290] sm:$0xff]
        %v3062 = vld [vmem:[%s7 + $0x298] sm:$0xff]
        %v3063 = vld [vmem:[%s7 + $0x2a0] sm:$0xff]
        %v3064 = vld [vmem:[%s7 + $0x2a8] sm:$0xff]
        %v3065 = vld [vmem:[%s7 + $0x2b0] sm:$0xff]
        %v3066 = vld [vmem:[%s7 + $0x2b8] sm:$0xff]
        %v3067 = vld [vmem:[%s7 + $0x2c0] sm:$0xff]
        %v3068 = vld [vmem:[%s7 + $0x2c8] sm:$0xff]
        %v3069 = vld [vmem:[%s7 + $0x2d0] sm:$0xff]
        %v3070 = vld [vmem:[%s7 + $0x2d8] sm:$0xff]
        %v3071 = vld [vmem:[%s7 + $0x2e0] sm:$0xff]
        %v3072 = vld [vmem:[%s7 + $0x2e8] sm:$0xff]
        %v3073 = vld [vmem:[%s7 + $0x2f0] sm:$0xff]
        %v3074 = vld [vmem:[%s7 + $0x2f8] sm:$0xff]
        %v3075 = vld [vmem:[%s7 + $0x300] sm:$0xff]
        %v3076 = vld [vmem:[%s7 + $0x308] sm:$0xff]
        %v3077 = vld [vmem:[%s7 + $0x310] sm:$0xff]
        %v3078 = vld [vmem:[%s7 + $0x318] sm:$0xff]
        %v3079 = vld [vmem:[%s7 + $0x320] sm:$0xff]
        %v3080 = vld [vmem:[%s7 + $0x328] sm:$0xff]
        %v3081 = vld [vmem:[%s7 + $0x330] sm:$0xff]
        %v3082 = vld [vmem:[%s7 + $0x338] sm:$0xff]
        %v3083 = vld [vmem:[%s7 + $0x340] sm:$0xff]
        %v3084 = vld [vmem:[%s7 + $0x348] sm:$0xff]
        %v3085 = vld [vmem:[%s7 + $0x350] sm:$0xff]
        %v3086 = vld [vmem:[%s7 + $0x358] sm:$0xff]
        %v3087 = vld [vmem:[%s7 + $0x360] sm:$0xff]
        %v3088 = vld [vmem:[%s7 + $0x368] sm:$0xff]
        %v3089 = vld [vmem:[%s7 + $0x370] sm:$0xff]
        %v3090 = vld [vmem:[%s7 + $0x378] sm:$0xff]
        %v3091 = vld [vmem:[%s7 + $0x380] sm:$0xff]
        %v3092 = vld [vmem:[%s7 + $0x388] sm:$0xff]
        %v3093 = vld [vmem:[%s7 + $0x390] sm:$0xff]
        %v3094 = vld [vmem:[%s7 + $0x398] sm:$0xff]
        %v3095 = vld [vmem:[%s7 + $0x3a0] sm:$0xff]
        %v3096 = vld [vmem:[%s7 + $0x3a8] sm:$0xff]
        %v3097 = vld [vmem:[%s7 + $0x3b0] sm:$0xff]
        %v3098 = vld [vmem:[%s7 + $0x3b8] sm:$0xff]
        %v3099 = vld [vmem:[%s7 + $0x3c0] sm:$0xff]
        %v3100 = vld [vmem:[%s7 + $0x3c8] sm:$0xff]
        %v3101 = vld [vmem:[%s7 + $0x3d0] sm:$0xff]
        %v3102 = vld [vmem:[%s7 + $0x3d8] sm:$0xff]
        %v3103 = vld [vmem:[%s7 + $0x3e0] sm:$0xff]
        %v3104 = vld [vmem:[%s7 + $0x3e8] sm:$0xff]
        %v3105 = vld [vmem:[%s7 + $0x3f0] sm:$0xff]
        %v3106 = vld [vmem:[%s7 + $0x3f8] sm:$0xff]
        %3107 = vmatprep.subr.mxu0 0.0
        %3108 = vmatpush1.msra.mxu0 %v2994
        %3109 = vmatprep.subr.mxu0 0.0
        %3110 = vmatpush1.msra.mxu0 %v2993
        %3111 = vmatprep.subr.mxu0 0.0
        %3112 = vmatpush1.msra.mxu0 %v2992
        %3113 = vmatprep.subr.mxu0 0.0
        %3114 = vmatpush1.msra.mxu0 %v2991
        %3115 = vmatprep.subr.mxu0 0.0
        %3116 = vmatpush1.msra.mxu0 %v2990
        %3117 = vmatprep.subr.mxu0 0.0
        %3118 = vmatpush1.msra.mxu0 %v2989
        %3119 = vmatprep.subr.mxu0 0.0
        %3120 = vmatpush1.msra.mxu0 %v2988
        %3121 = vmatprep.subr.mxu0 0.0
        %3122 = vmatpush1.msra.mxu0 %v2987
        %3123 = vmatprep.subr.mxu0 0.0
        %3124 = vmatpush1.msra.mxu0 %v2986
        %3125 = vmatprep.subr.mxu0 0.0
        %3126 = vmatpush1.msra.mxu0 %v2985
        %3127 = vmatprep.subr.mxu0 0.0
        %3128 = vmatpush1.msra.mxu0 %v2984
        %3129 = vmatprep.subr.mxu0 0.0
        %3130 = vmatpush1.msra.mxu0 %v2983
        %3131 = vmatprep.subr.mxu0 0.0
        %3132 = vmatpush1.msra.mxu0 %v2982
        %3133 = vmatprep.subr.mxu0 0.0
        %3134 = vmatpush1.msra.mxu0 %v2981
        %3135 = vmatprep.subr.mxu0 0.0
        %3136 = vmatpush1.msra.mxu0 %v2980
        %3137 = vmatprep.subr.mxu0 0.0
        %3138 = vmatpush1.msra.mxu0 %v2979
        %3139 = vmatprep.subr.mxu0 0.0
        %3140 = vmatpush2.msra.mxu0 %v3010
        %3141 = vmatprep.subr.mxu0 0.0
        %3142 = vmatpush2.msra.mxu0 %v3009
        %3143 = vmatprep.subr.mxu0 0.0
        %3144 = vmatpush2.msra.mxu0 %v3008
        %3145 = vmatprep.subr.mxu0 0.0
        %3146 = vmatpush2.msra.mxu0 %v3007
        %3147 = vmatprep.subr.mxu0 0.0
        %3148 = vmatpush2.msra.mxu0 %v3006
        %3149 = vmatprep.subr.mxu0 0.0
        %3150 = vmatpush2.msra.mxu0 %v3005
        %3151 = vmatprep.subr.mxu0 0.0
        %3152 = vmatpush2.msra.mxu0 %v3004
        %3153 = vmatprep.subr.mxu0 0.0
        %3154 = vmatpush2.msra.mxu0 %v3003
        %3155 = vmatprep.subr.mxu0 0.0
        %3156 = vmatpush2.msra.mxu0 %v3002
        %3157 = vmatprep.subr.mxu0 0.0
        %3158 = vmatpush2.msra.mxu0 %v3001
        %3159 = vmatprep.subr.mxu0 0.0
        %3160 = vmatpush2.msra.mxu0 %v3000
        %3161 = vmatprep.subr.mxu0 0.0
        %3162 = vmatpush2.msra.mxu0 %v2999
        %3163 = vmatprep.subr.mxu0 0.0
        %3164 = vmatpush2.msra.mxu0 %v2998
        %3165 = vmatprep.subr.mxu0 0.0
        %3166 = vmatpush2.msra.mxu0 %v2997
        %3167 = vmatprep.subr.mxu0 0.0
        %3168 = vmatpush2.msra.mxu0 %v2996
        %3169 = vmatprep.subr.mxu0 0.0
        %3170 = vmatpush2.msra.mxu0 %v2995
        %3171 = vmatprep.mubr.f32.mxu0 %v2948
        %3172 = vmatmul.mubr.f32.gmra.mxu0 %v2947
        %v3173 = vpop.f32.mrf.mxu0
        %v3174 = vadd.f32 0.0, %v3173
        %v3175 = vpop.f32.mrf.mxu0
        %3176 = vmatprep.mubr.f32.mxu0 %v2956
        %3177 = vmatmul.mubr.f32.gmra.mxu0 %v2955
        %v3178 = vpop.f32.mrf.mxu0
        %v3179 = vadd.f32 0.0, %v3178
        %v3180 = vpop.f32.mrf.mxu0
        %3181 = vmatprep.mubr.f32.mxu0 %v2964
        %3182 = vmatmul.mubr.f32.gmra.mxu0 %v2963
        %v3183 = vpop.f32.mrf.mxu0
        %v3184 = vadd.f32 0.0, %v3183
        %v3185 = vpop.f32.mrf.mxu0
        %3186 = vmatprep.mubr.f32.mxu0 %v2972
        %3187 = vmatmul.mubr.f32.gmra.mxu0 %v2971
        %v3188 = vpop.f32.mrf.mxu0
        %v3189 = vadd.f32 0.0, %v3188
        %v3190 = vpop.f32.mrf.mxu0
        %3191 = vdwg.mxu0
        %3192 = vmatprep.subr.mxu0 0.0
        %3193 = vmatpush1.msra.mxu0 %v3026
        %3194 = vmatprep.subr.mxu0 0.0
        %3195 = vmatpush1.msra.mxu0 %v3025
        %3196 = vmatprep.subr.mxu0 0.0
        %3197 = vmatpush1.msra.mxu0 %v3024
        %3198 = vmatprep.subr.mxu0 0.0
        %3199 = vmatpush1.msra.mxu0 %v3023
        %3200 = vmatprep.subr.mxu0 0.0
        %3201 = vmatpush1.msra.mxu0 %v3022
        %3202 = vmatprep.subr.mxu0 0.0
        %3203 = vmatpush1.msra.mxu0 %v3021
        %3204 = vmatprep.subr.mxu0 0.0
        %3205 = vmatpush1.msra.mxu0 %v3020
        %3206 = vmatprep.subr.mxu0 0.0
        %3207 = vmatpush1.msra.mxu0 %v3019
        %3208 = vmatprep.subr.mxu0 0.0
        %3209 = vmatpush1.msra.mxu0 %v3018
        %3210 = vmatprep.subr.mxu0 0.0
        %3211 = vmatpush1.msra.mxu0 %v3017
        %3212 = vmatprep.subr.mxu0 0.0
        %3213 = vmatpush1.msra.mxu0 %v3016
        %3214 = vmatprep.subr.mxu0 0.0
        %3215 = vmatpush1.msra.mxu0 %v3015
        %3216 = vmatprep.subr.mxu0 0.0
        %3217 = vmatpush1.msra.mxu0 %v3014
        %3218 = vmatprep.subr.mxu0 0.0
        %3219 = vmatpush1.msra.mxu0 %v3013
        %3220 = vmatprep.subr.mxu0 0.0
        %3221 = vmatpush1.msra.mxu0 %v3012
        %3222 = vmatprep.subr.mxu0 0.0
        %3223 = vmatpush1.msra.mxu0 %v3011
        %3224 = vmatprep.subr.mxu0 0.0
        %3225 = vmatpush2.msra.mxu0 %v3042
        %3226 = vmatprep.subr.mxu0 0.0
        %3227 = vmatpush2.msra.mxu0 %v3041
        %3228 = vmatprep.subr.mxu0 0.0
        %3229 = vmatpush2.msra.mxu0 %v3040
        %3230 = vmatprep.subr.mxu0 0.0
        %3231 = vmatpush2.msra.mxu0 %v3039
        %3232 = vmatprep.subr.mxu0 0.0
        %3233 = vmatpush2.msra.mxu0 %v3038
        %3234 = vmatprep.subr.mxu0 0.0
        %3235 = vmatpush2.msra.mxu0 %v3037
        %3236 = vmatprep.subr.mxu0 0.0
        %3237 = vmatpush2.msra.mxu0 %v3036
        %3238 = vmatprep.subr.mxu0 0.0
        %3239 = vmatpush2.msra.mxu0 %v3035
        %3240 = vmatprep.subr.mxu0 0.0
        %3241 = vmatpush2.msra.mxu0 %v3034
        %3242 = vmatprep.subr.mxu0 0.0
        %3243 = vmatpush2.msra.mxu0 %v3033
        %3244 = vmatprep.subr.mxu0 0.0
        %3245 = vmatpush2.msra.mxu0 %v3032
        %3246 = vmatprep.subr.mxu0 0.0
        %3247 = vmatpush2.msra.mxu0 %v3031
        %3248 = vmatprep.subr.mxu0 0.0
        %3249 = vmatpush2.msra.mxu0 %v3030
        %3250 = vmatprep.subr.mxu0 0.0
        %3251 = vmatpush2.msra.mxu0 %v3029
        %3252 = vmatprep.subr.mxu0 0.0
        %3253 = vmatpush2.msra.mxu0 %v3028
        %3254 = vmatprep.subr.mxu0 0.0
        %3255 = vmatpush2.msra.mxu0 %v3027
        %3256 = vmatprep.mubr.f32.mxu0 %v2950
        %3257 = vmatmul.mubr.f32.gmra.mxu0 %v2949
        %v3258 = vpop.f32.mrf.mxu0
        %v3259 = vadd.f32 %v3174, %v3258
        %v3260 = vpop.f32.mrf.mxu0
        %3261 = vmatprep.mubr.f32.mxu0 %v2958
        %3262 = vmatmul.mubr.f32.gmra.mxu0 %v2957
        %v3263 = vpop.f32.mrf.mxu0
        %v3264 = vadd.f32 %v3179, %v3263
        %v3265 = vpop.f32.mrf.mxu0
        %3266 = vmatprep.mubr.f32.mxu0 %v2966
        %3267 = vmatmul.mubr.f32.gmra.mxu0 %v2965
        %v3268 = vpop.f32.mrf.mxu0
        %v3269 = vadd.f32 %v3184, %v3268
        %v3270 = vpop.f32.mrf.mxu0
        %3271 = vmatprep.mubr.f32.mxu0 %v2974
        %3272 = vmatmul.mubr.f32.gmra.mxu0 %v2973
        %v3273 = vpop.f32.mrf.mxu0
        %v3274 = vadd.f32 %v3189, %v3273
        %v3275 = vpop.f32.mrf.mxu0
        %3276 = vdwg.mxu0
        %3277 = vmatprep.subr.mxu0 0.0
        %3278 = vmatpush1.msra.mxu0 %v3058
        %3279 = vmatprep.subr.mxu0 0.0
        %3280 = vmatpush1.msra.mxu0 %v3057
        %3281 = vmatprep.subr.mxu0 0.0
        %3282 = vmatpush1.msra.mxu0 %v3056
        %3283 = vmatprep.subr.mxu0 0.0
        %3284 = vmatpush1.msra.mxu0 %v3055
        %3285 = vmatprep.subr.mxu0 0.0
        %3286 = vmatpush1.msra.mxu0 %v3054
        %3287 = vmatprep.subr.mxu0 0.0
        %3288 = vmatpush1.msra.mxu0 %v3053
        %3289 = vmatprep.subr.mxu0 0.0
        %3290 = vmatpush1.msra.mxu0 %v3052
        %3291 = vmatprep.subr.mxu0 0.0
        %3292 = vmatpush1.msra.mxu0 %v3051
        %3293 = vmatprep.subr.mxu0 0.0
        %3294 = vmatpush1.msra.mxu0 %v3050
        %3295 = vmatprep.subr.mxu0 0.0
        %3296 = vmatpush1.msra.mxu0 %v3049
        %3297 = vmatprep.subr.mxu0 0.0
        %3298 = vmatpush1.msra.mxu0 %v3048
        %3299 = vmatprep.subr.mxu0 0.0
        %3300 = vmatpush1.msra.mxu0 %v3047
        %3301 = vmatprep.subr.mxu0 0.0
        %3302 = vmatpush1.msra.mxu0 %v3046
        %3303 = vmatprep.subr.mxu0 0.0
        %3304 = vmatpush1.msra.mxu0 %v3045
        %3305 = vmatprep.subr.mxu0 0.0
        %3306 = vmatpush1.msra.mxu0 %v3044
        %3307 = vmatprep.subr.mxu0 0.0
        %3308 = vmatpush1.msra.mxu0 %v3043
        %3309 = vmatprep.subr.mxu0 0.0
        %3310 = vmatpush2.msra.mxu0 %v3074
        %3311 = vmatprep.subr.mxu0 0.0
        %3312 = vmatpush2.msra.mxu0 %v3073
        %3313 = vmatprep.subr.mxu0 0.0
        %3314 = vmatpush2.msra.mxu0 %v3072
        %3315 = vmatprep.subr.mxu0 0.0
        %3316 = vmatpush2.msra.mxu0 %v3071
        %3317 = vmatprep.subr.mxu0 0.0
        %3318 = vmatpush2.msra.mxu0 %v3070
        %3319 = vmatprep.subr.mxu0 0.0
        %3320 = vmatpush2.msra.mxu0 %v3069
        %3321 = vmatprep.subr.mxu0 0.0
        %3322 = vmatpush2.msra.mxu0 %v3068
        %3323 = vmatprep.subr.mxu0 0.0
        %3324 = vmatpush2.msra.mxu0 %v3067
        %3325 = vmatprep.subr.mxu0 0.0
        %3326 = vmatpush2.msra.mxu0 %v3066
        %3327 = vmatprep.subr.mxu0 0.0
        %3328 = vmatpush2.msra.mxu0 %v3065
        %3329 = vmatprep.subr.mxu0 0.0
        %3330 = vmatpush2.msra.mxu0 %v3064
        %3331 = vmatprep.subr.mxu0 0.0
        %3332 = vmatpush2.msra.mxu0 %v3063
        %3333 = vmatprep.subr.mxu0 0.0
        %3334 = vmatpush2.msra.mxu0 %v3062
        %3335 = vmatprep.subr.mxu0 0.0
        %3336 = vmatpush2.msra.mxu0 %v3061
        %3337 = vmatprep.subr.mxu0 0.0
        %3338 = vmatpush2.msra.mxu0 %v3060
        %3339 = vmatprep.subr.mxu0 0.0
        %3340 = vmatpush2.msra.mxu0 %v3059
        %3341 = vmatprep.mubr.f32.mxu0 %v2952
        %3342 = vmatmul.mubr.f32.gmra.mxu0 %v2951
        %v3343 = vpop.f32.mrf.mxu0
        %v3344 = vadd.f32 %v3259, %v3343
        %v3345 = vpop.f32.mrf.mxu0
        %3346 = vmatprep.mubr.f32.mxu0 %v2960
        %3347 = vmatmul.mubr.f32.gmra.mxu0 %v2959
        %v3348 = vpop.f32.mrf.mxu0
        %v3349 = vadd.f32 %v3264, %v3348
        %v3350 = vpop.f32.mrf.mxu0
        %3351 = vmatprep.mubr.f32.mxu0 %v2968
        %3352 = vmatmul.mubr.f32.gmra.mxu0 %v2967
        %v3353 = vpop.f32.mrf.mxu0
        %v3354 = vadd.f32 %v3269, %v3353
        %v3355 = vpop.f32.mrf.mxu0
        %3356 = vmatprep.mubr.f32.mxu0 %v2976
        %3357 = vmatmul.mubr.f32.gmra.mxu0 %v2975
        %v3358 = vpop.f32.mrf.mxu0
        %v3359 = vadd.f32 %v3274, %v3358
        %v3360 = vpop.f32.mrf.mxu0
        %3361 = vdwg.mxu0
        %3362 = vmatprep.subr.mxu0 0.0
        %3363 = vmatpush1.msra.mxu0 %v3090
        %3364 = vmatprep.subr.mxu0 0.0
        %3365 = vmatpush1.msra.mxu0 %v3089
        %3366 = vmatprep.subr.mxu0 0.0
        %3367 = vmatpush1.msra.mxu0 %v3088
        %3368 = vmatprep.subr.mxu0 0.0
        %3369 = vmatpush1.msra.mxu0 %v3087
        %3370 = vmatprep.subr.mxu0 0.0
        %3371 = vmatpush1.msra.mxu0 %v3086
        %3372 = vmatprep.subr.mxu0 0.0
        %3373 = vmatpush1.msra.mxu0 %v3085
        %3374 = vmatprep.subr.mxu0 0.0
        %3375 = vmatpush1.msra.mxu0 %v3084
        %3376 = vmatprep.subr.mxu0 0.0
        %3377 = vmatpush1.msra.mxu0 %v3083
        %3378 = vmatprep.subr.mxu0 0.0
        %3379 = vmatpush1.msra.mxu0 %v3082
        %3380 = vmatprep.subr.mxu0 0.0
        %3381 = vmatpush1.msra.mxu0 %v3081
        %3382 = vmatprep.subr.mxu0 0.0
        %3383 = vmatpush1.msra.mxu0 %v3080
        %3384 = vmatprep.subr.mxu0 0.0
        %3385 = vmatpush1.msra.mxu0 %v3079
        %3386 = vmatprep.subr.mxu0 0.0
        %3387 = vmatpush1.msra.mxu0 %v3078
        %3388 = vmatprep.subr.mxu0 0.0
        %3389 = vmatpush1.msra.mxu0 %v3077
        %3390 = vmatprep.subr.mxu0 0.0
        %3391 = vmatpush1.msra.mxu0 %v3076
        %3392 = vmatprep.subr.mxu0 0.0
        %3393 = vmatpush1.msra.mxu0 %v3075
        %3394 = vmatprep.subr.mxu0 0.0
        %3395 = vmatpush2.msra.mxu0 %v3106
        %3396 = vmatprep.subr.mxu0 0.0
        %3397 = vmatpush2.msra.mxu0 %v3105
        %3398 = vmatprep.subr.mxu0 0.0
        %3399 = vmatpush2.msra.mxu0 %v3104
        %3400 = vmatprep.subr.mxu0 0.0
        %3401 = vmatpush2.msra.mxu0 %v3103
        %3402 = vmatprep.subr.mxu0 0.0
        %3403 = vmatpush2.msra.mxu0 %v3102
        %3404 = vmatprep.subr.mxu0 0.0
        %3405 = vmatpush2.msra.mxu0 %v3101
        %3406 = vmatprep.subr.mxu0 0.0
        %3407 = vmatpush2.msra.mxu0 %v3100
        %3408 = vmatprep.subr.mxu0 0.0
        %3409 = vmatpush2.msra.mxu0 %v3099
        %3410 = vmatprep.subr.mxu0 0.0
        %3411 = vmatpush2.msra.mxu0 %v3098
        %3412 = vmatprep.subr.mxu0 0.0
        %3413 = vmatpush2.msra.mxu0 %v3097
        %3414 = vmatprep.subr.mxu0 0.0
        %3415 = vmatpush2.msra.mxu0 %v3096
        %3416 = vmatprep.subr.mxu0 0.0
        %3417 = vmatpush2.msra.mxu0 %v3095
        %3418 = vmatprep.subr.mxu0 0.0
        %3419 = vmatpush2.msra.mxu0 %v3094
        %3420 = vmatprep.subr.mxu0 0.0
        %3421 = vmatpush2.msra.mxu0 %v3093
        %3422 = vmatprep.subr.mxu0 0.0
        %3423 = vmatpush2.msra.mxu0 %v3092
        %3424 = vmatprep.subr.mxu0 0.0
        %3425 = vmatpush2.msra.mxu0 %v3091
        %3426 = vmatprep.mubr.f32.mxu0 %v2954
        %3427 = vmatmul.mubr.f32.gmra.mxu0 %v2953
        %v3428 = vpop.f32.mrf.mxu0
        %v3429 = vadd.f32 %v3344, %v3428
        %v3430 = vpop.f32.mrf.mxu0
        %3431 = vmatprep.mubr.f32.mxu0 %v2962
        %3432 = vmatmul.mubr.f32.gmra.mxu0 %v2961
        %v3433 = vpop.f32.mrf.mxu0
        %v3434 = vadd.f32 %v3349, %v3433
        %v3435 = vpop.f32.mrf.mxu0
        %3436 = vmatprep.mubr.f32.mxu0 %v2970
        %3437 = vmatmul.mubr.f32.gmra.mxu0 %v2969
        %v3438 = vpop.f32.mrf.mxu0
        %v3439 = vadd.f32 %v3354, %v3438
        %v3440 = vpop.f32.mrf.mxu0
        %3441 = vmatprep.mubr.f32.mxu0 %v2978
        %3442 = vmatmul.mubr.f32.gmra.mxu0 %v2977
        %v3443 = vpop.f32.mrf.mxu0
        %v3444 = vadd.f32 %v3359, %v3443
        %v3445 = vpop.f32.mrf.mxu0
        %3446 = vdwg.mxu0
        %v3447 = vld [vmem:[%s6] sm:$0xff]
        %vm3448 = vcmask 261120
        %v3450 = vsel %vm3448, %v3447, 0
        %3452 = vmatprep.subr.mxu0 0.0
        %3453 = vmatpush1.msra.mxu0 0.0
        %3454 = vmatprep.subr.mxu0 0.0
        %3455 = vmatpush1.msra.mxu0 0.0
        %3456 = vmatprep.subr.mxu0 0.0
        %3457 = vmatpush1.msra.mxu0 0.0
        %3458 = vmatprep.subr.mxu0 0.0
        %3459 = vmatpush1.msra.mxu0 0.0
        %3460 = vmatprep.subr.mxu0 0.0
        %3461 = vmatpush1.msra.mxu0 0.0
        %3462 = vmatprep.subr.mxu0 0.0
        %3463 = vmatpush1.msra.mxu0 0.0
        %3464 = vmatprep.subr.mxu0 0.0
        %3465 = vmatpush1.msra.mxu0 0.0
        %3466 = vmatprep.subr.mxu0 0.0
        %3467 = vmatpush1.msra.mxu0 0.0
        %3468 = vmatprep.subr.mxu0 0.0
        %3469 = vmatpush1.msra.mxu0 0.0
        %3470 = vmatprep.subr.mxu0 0.0
        %3471 = vmatpush1.msra.mxu0 0.0
        %3472 = vmatprep.subr.mxu0 0.0
        %3473 = vmatpush1.msra.mxu0 0.0
        %3474 = vmatprep.subr.mxu0 0.0
        %3475 = vmatpush1.msra.mxu0 0.0
        %3476 = vmatprep.subr.mxu0 0.0
        %3477 = vmatpush1.msra.mxu0 %v3444
        %3478 = vmatprep.subr.mxu0 0.0
        %3479 = vmatpush1.msra.mxu0 %v3439
        %3480 = vmatprep.subr.mxu0 0.0
        %3481 = vmatpush1.msra.mxu0 %v3434
        %3482 = vmatprep.subr.mxu0 0.0
        %3483 = vmatpush1.msra.mxu0 %v3429
        %3484 = vmatprep.subr.mxu0 0.0
        %3485 = vmatpush2.msra.mxu0 0.0
        %3486 = vmatprep.subr.mxu0 0.0
        %3487 = vmatpush2.msra.mxu0 0.0
        %3488 = vmatprep.subr.mxu0 0.0
        %3489 = vmatpush2.msra.mxu0 0.0
        %3490 = vmatprep.subr.mxu0 0.0
        %3491 = vmatpush2.msra.mxu0 0.0
        %3492 = vmatprep.subr.mxu0 0.0
        %3493 = vmatpush2.msra.mxu0 0.0
        %3494 = vmatprep.subr.mxu0 0.0
        %3495 = vmatpush2.msra.mxu0 0.0
        %3496 = vmatprep.subr.mxu0 0.0
        %3497 = vmatpush2.msra.mxu0 0.0
        %3498 = vmatprep.subr.mxu0 0.0
        %3499 = vmatpush2.msra.mxu0 0.0
        %3500 = vmatprep.subr.mxu0 0.0
        %3501 = vmatpush2.msra.mxu0 0.0
        %3502 = vmatprep.subr.mxu0 0.0
        %3503 = vmatpush2.msra.mxu0 0.0
        %3504 = vmatprep.subr.mxu0 0.0
        %3505 = vmatpush2.msra.mxu0 0.0
        %3506 = vmatprep.subr.mxu0 0.0
        %3507 = vmatpush2.msra.mxu0 0.0
        %3508 = vmatprep.subr.mxu0 0.0
        %3509 = vmatpush2.msra.mxu0 0.0
        %3510 = vmatprep.subr.mxu0 0.0
        %3511 = vmatpush2.msra.mxu0 0.0
        %3512 = vmatprep.subr.mxu0 0.0
        %3513 = vmatpush2.msra.mxu0 0.0
        %3514 = vmatprep.subr.mxu0 0.0
        %3515 = vmatpush2.msra.mxu0 0.0
        %3516 = vmatprep.mubr.f32.mxu0 0.0
        %3517 = vmatmul.mubr.f32.gmra.mxu0 %v3450
        %v3518 = vpop.f32.mrf.mxu0
        %v3519 = vadd.f32 0.0, %v3518
        %v3520 = vpop.f32.mrf.mxu0
        %3521 = vdwg.mxu0
        %3522 = vst.msk [vmem:[%s298] sm:$0xff] %vm3448, %v3519
        %s3523 = sand.u32 %s203, 1
        %s3524 = scalar_lea.sflag [#allocation5], %s3523
        %s3525 = sand.u32 %s203, 1
        %s3526 = smul.addr %s3525, 8
        %s3527 = scalar_lea.vmem [#allocation4], %s3526
        // Predicated region
        $region53: #{tpu_custom_call.1} parent=51 // pred_check
          %p3528 = pneg %p213
        $region54: #{tpu_custom_call.1} parent=51 // pred_check_branch
          %3530 = sbr.rel (%p3528) target = $region56
        $region55: #{tpu_custom_call.1} parent=51 // pred_region
          %s3532 = ssub.s32 128, 128
          %3533 = vsyncadd %s3524, %s3532
          %s3534 = smul.addr %s22, 128
          %s3535 = scalar_lea.hbm %s8, %s3534
          %s3537 = sshll.u32 %s3527, 4
          %s3538 = int_to_ptr.vmem [resolvable:$true] %s3537
          %3540 = dma.vmem_to_hbm [thread:$0]  %s3538, 128, %s3535, %s3524
        $region56: #{tpu_custom_call.1} parent=51 // pred_fallthru
          _
      $region52: #{tpu_custom_call.1} parent=5 // pred_fallthru
        _
      %p3541 = scmp.le.s32.totalorder 2, %s17
      // Predicated region
      $region57: #{tpu_custom_call.1} parent=5 // pred_check
        %p3542 = pneg %p3541
      $region58: #{tpu_custom_call.1} parent=5 // pred_check_branch
        %3544 = sbr.rel (%p3542) target = $region60
      $region59: #{tpu_custom_call.1} parent=5 // pred_region
        %s3545 = ssub.s32 %s17, 2
        // Predicated region
        $region61: #{tpu_custom_call.1} parent=59 // pred_check
          %p3546 = pneg %p219
        $region62: #{tpu_custom_call.1} parent=59 // pred_check_branch
          %3548 = sbr.rel (%p3546) target = $region64
        $region63: #{tpu_custom_call.1} parent=59 // pred_region
          %s3549 = sand.u32 %s204, 1
          %s3550 = scalar_lea.sflag [#allocation5], %s3549
          %s3551 = sand.u32 %s204, 1
          %s3552 = smul.addr %s3551, 8
          %s3553 = scalar_lea.vmem [#allocation4], %s3552
          %3554 = dma.done %s3550, 128
        $region64: #{tpu_custom_call.1} parent=59 // pred_fallthru
          _
      $region60: #{tpu_custom_call.1} parent=5 // pred_fallthru
        _
    $region6: #{tpu_custom_call.1} parent=1 // loop_footer
      %s21 = sadd.s32 1, %s17
    $region7: #{tpu_custom_call.1} parent=1 // loop_footer_branch
      %16 = sbr.rel target = $region3
    $region8: #{tpu_custom_call.1} parent=1 // loop_exit
      _
    %3555 = vsyncpa [#allocation5], 1
    %s3556 = scalar_lea.sflag [#allocation5], 1
    %3557 = vsyncpa %s3556, 1

</llo_original>
